<compile_context>
chip_gen: v5e
topology: v5e:2x2
jax: 0.10.0
libtpu: 0.0.40
codegen_flags: <defaults>
</compile_context>

<pallas_src>
import numpy as np
import jax
import jax.numpy as jnp
from jax.experimental import pallas as pl
from jax.experimental.pallas import tpu as pltpu

# ---- config (matches NBeatsNet defaults: TREND + SEASONALITY stacks) -------
BACKCAST = 10
FORECAST = 5
UNITS = 256
STACK_TYPES = ("trend", "seasonality")
THETAS_DIMS = (4, 8)
NB_BLOCKS_PER_STACK = 3
NUM_BLOCKS = len(STACK_TYPES) * NB_BLOCKS_PER_STACK


# ---------------------------------------------------------------------------
# basis construction (host-side, tiny constant matrices) — exactly as the spec
# ---------------------------------------------------------------------------
def _linspace(backcast_length, forecast_length):
    lin = np.linspace(-backcast_length, forecast_length,
                      backcast_length + forecast_length)
    return lin[:backcast_length], lin[backcast_length:]


def trend_basis(p, t):
    # T[i] = t**i  -> shape (p, len(t))
    return np.stack([t ** i for i in range(p)]).astype(np.float32)


def seasonality_basis(p, t):
    p1, p2 = (p // 2, p // 2) if p % 2 == 0 else (p // 2, p // 2 + 1)
    s1 = np.stack([np.cos(2 * np.pi * i * t) for i in range(p1)])
    s2 = np.stack([np.sin(2 * np.pi * i * t) for i in range(p2)])
    return np.concatenate([s1, s2], axis=0).astype(np.float32)  # (p, len(t))


# ---------------------------------------------------------------------------
# fused Pallas kernel: one grid step == all 6 N-BEATS blocks applied to one
# row tile.  Weights are VMEM-resident (constant index_map); the residual
# backcast / forecast state stays in registers and is stored once at the end.
# ---------------------------------------------------------------------------
def nbeats_fused_kernel(x_ref, w1_ref, w2_ref, w3_ref, w4_ref, b_ref,
                        wbf_ref, cbf_ref, back_ref, fore_ref):
    back = x_ref[...]                                       # (tile, 10) f32
    fore = jnp.zeros((back.shape[0], FORECAST), jnp.float32)

    for i in range(NUM_BLOCKS):                             # static unroll (6)
        b = b_ref[i]                                        # (4, UNITS) f32

        # 4 ReLU FC layers.  First layer kept f32 (K=10, tiny); the 256x256
        # layers use bf16 inputs/weights with f32 MXU accumulation.
        h = jnp.maximum(
            jnp.dot(back, w1_ref[i], preferred_element_type=jnp.float32)
            + b[0:1, :], 0.0)
        h = jnp.maximum(
            jnp.dot(h.astype(jnp.bfloat16), w2_ref[i],
                    preferred_element_type=jnp.float32) + b[1:2, :], 0.0)
        h = jnp.maximum(
            jnp.dot(h.astype(jnp.bfloat16), w3_ref[i],
                    preferred_element_type=jnp.float32) + b[2:3, :], 0.0)
        h = jnp.maximum(
            jnp.dot(h.astype(jnp.bfloat16), w4_ref[i],
                    preferred_element_type=jnp.float32) + b[3:4, :], 0.0)

        # theta projection + basis expansion folded host-side; backcast and
        # forecast bases concatenated -> a single K=256, N=15 matmul.
        bf = jnp.dot(h.astype(jnp.bfloat16), wbf_ref[i],
                     preferred_element_type=jnp.float32) + cbf_ref[i]

        back = back - bf[:, :BACKCAST]
        fore = fore + bf[:, BACKCAST:]

    back_ref[...] = back
    fore_ref[...] = fore


def _choose_row_tile(n):
    """Row tile (multiple of 8).  Cap 1024; split into >=2 tiles when possible
    so v7x's two TensorCores both get work on the 'parallel' row axis."""
    n8 = ((n + 7) // 8) * 8
    if n8 <= 8:
        return 8
    half = ((n8 // 2 + 7) // 8) * 8
    return min(1024, half)


def _nbeats_forward_impl(x_bcl, P):
    """x_bcl: (batch, channels, BACKCAST) float32."""
    bsz, ch, _ = x_bcl.shape
    n = bsz * ch
    x = x_bcl.reshape(n, BACKCAST).astype(jnp.float32)

    tile = _choose_row_tile(n)
    num_tiles = (n + tile - 1) // tile
    n_pad = num_tiles * tile
    if n_pad != n:
        x = jnp.pad(x, ((0, n_pad - n), (0, 0)))

    flops = 2 * NUM_BLOCKS * n_pad * (
        BACKCAST * UNITS + 3 * UNITS * UNITS + UNITS * (BACKCAST + FORECAST))
    # params are streamed exactly once (constant index_map), activations once.
    param_bytes = int(sum(a.size * a.dtype.itemsize
                          for a in jax.tree_util.tree_leaves(P)))
    bytes_accessed = param_bytes + int(
        x.size * 4 + n_pad * (2 * BACKCAST + FORECAST) * 4)

    grid_spec = pltpu.PrefetchScalarGridSpec(
        num_scalar_prefetch=0,
        grid=(num_tiles,),
        in_specs=[
            # activations: tiled along rows
            pl.BlockSpec((tile, BACKCAST), lambda r: (r, 0)),
            # whole 6-block weight slab, VMEM-resident (constant index_map)
            pl.BlockSpec((NUM_BLOCKS, BACKCAST, UNITS), lambda r: (0, 0, 0)),   # w1
            pl.BlockSpec((NUM_BLOCKS, UNITS, UNITS), lambda r: (0, 0, 0)),      # w2
            pl.BlockSpec((NUM_BLOCKS, UNITS, UNITS), lambda r: (0, 0, 0)),      # w3
            pl.BlockSpec((NUM_BLOCKS, UNITS, UNITS), lambda r: (0, 0, 0)),      # w4
            pl.BlockSpec((NUM_BLOCKS, 4, UNITS), lambda r: (0, 0, 0)),          # biases
            pl.BlockSpec((NUM_BLOCKS, UNITS, BACKCAST + FORECAST),
                         lambda r: (0, 0, 0)),                                  # Wbf'
            pl.BlockSpec((NUM_BLOCKS, 1, BACKCAST + FORECAST),
                         lambda r: (0, 0, 0)),                                  # cbf
        ],
        out_specs=(
            pl.BlockSpec((tile, BACKCAST), lambda r: (r, 0)),
            pl.BlockSpec((tile, FORECAST), lambda r: (r, 0)),
        ),
    )

    back, fore = pl.pallas_call(
        nbeats_fused_kernel,
        grid_spec=grid_spec,
        out_shape=(jax.ShapeDtypeStruct((n_pad, BACKCAST), jnp.float32),
                   jax.ShapeDtypeStruct((n_pad, FORECAST), jnp.float32)),
        compiler_params=pltpu.CompilerParams(
            dimension_semantics=("parallel",),
            vmem_limit_bytes=32 * 1024 * 1024),
        cost_estimate=pl.CostEstimate(flops=flops, transcendentals=0,
                                      bytes_accessed=bytes_accessed),
    )(x, P["w1"], P["w2"], P["w3"], P["w4"], P["b"], P["wbf"], P["cbf"])

    return (back[:n].reshape(bsz, ch, BACKCAST),
            fore[:n].reshape(bsz, ch, FORECAST))


nbeats_forward = jax.jit(_nbeats_forward_impl)


# ---------------------------------------------------------------------------
# parameter setup (deterministic, synthetic) + host-side fold / stack
# ---------------------------------------------------------------------------
def init_block_params(key):
    """Weights stored as (in_features, out_features) for row-major matmuls."""
    blocks = []
    scale = 0.05
    for stack_id, p in enumerate(THETAS_DIMS):
        for _ in range(NB_BLOCKS_PER_STACK):
            key, *ks = jax.random.split(key, 11)
            blk = {
                "w1": scale * jax.random.normal(ks[0], (BACKCAST, UNITS), jnp.float32),
                "b1": scale * jax.random.normal(ks[1], (1, UNITS), jnp.float32),
                "w2": scale * jax.random.normal(ks[2], (UNITS, UNITS), jnp.float32),
                "b2": scale * jax.random.normal(ks[3], (1, UNITS), jnp.float32),
                "w3": scale * jax.random.normal(ks[4], (UNITS, UNITS), jnp.float32),
                "b3": scale * jax.random.normal(ks[5], (1, UNITS), jnp.float32),
                "w4": scale * jax.random.normal(ks[6], (UNITS, UNITS), jnp.float32),
                "b4": scale * jax.random.normal(ks[7], (1, UNITS), jnp.float32),
                # share_thetas=True for Trend/Seasonality -> one shared theta FC
                "wt": scale * jax.random.normal(ks[8], (UNITS, p), jnp.float32),
                "bt": scale * jax.random.normal(ks[9], (1, p), jnp.float32),
            }
            blocks.append((stack_id, blk))
    return blocks


def stack_and_fold(blocks, bases):
    """Stack per-block params along a leading block axis; fold wt@basis and
    concatenate the backcast/forecast projections into one (U, 15) matrix."""
    w1s, w2s, w3s, w4s, bs, wbfs, cbfs = ([] for _ in range(7))
    for stack_id, blk in blocks:
        sb, sf = bases[stack_id]                          # (p, Lb), (p, Lf)
        w1s.append(blk["w1"])
        w2s.append(blk["w2"]); w3s.append(blk["w3"]); w4s.append(blk["w4"])
        bs.append(jnp.concatenate([blk["b1"], blk["b2"],
                                   blk["b3"], blk["b4"]], axis=0))   # (4, U)
        wbfs.append(jnp.concatenate([blk["wt"] @ sb, blk["wt"] @ sf], axis=1))  # (U, 15)
        cbfs.append(jnp.concatenate([blk["bt"] @ sb, blk["bt"] @ sf], axis=1))  # (1, 15)
    return {
        "w1":  jnp.stack(w1s),                             # (6, Lb, U)  f32
        "w2":  jnp.stack(w2s).astype(jnp.bfloat16),        # (6, U, U)   bf16
        "w3":  jnp.stack(w3s).astype(jnp.bfloat16),
        "w4":  jnp.stack(w4s).astype(jnp.bfloat16),
        "b":   jnp.stack(bs),                              # (6, 4, U)   f32
        "wbf": jnp.stack(wbfs).astype(jnp.bfloat16),       # (6, U, 15)  bf16
        "cbf": jnp.stack(cbfs),                            # (6, 1, 15)  f32
    }


# pure-JAX reference (same folded params, same precision scheme)
def nbeats_forward_ref(x_bcl, P):
    bsz, ch, _ = x_bcl.shape
    back = x_bcl.reshape(bsz * ch, BACKCAST).astype(jnp.float32)
    fore = jnp.zeros((bsz * ch, FORECAST), jnp.float32)
    for i in range(NUM_BLOCKS):
        h = jax.nn.relu(jnp.dot(back, P["w1"][i],
                                preferred_element_type=jnp.float32) + P["b"][i, 0:1])
        h = jax.nn.relu(jnp.dot(h.astype(jnp.bfloat16), P["w2"][i],
                                preferred_element_type=jnp.float32) + P["b"][i, 1:2])
        h = jax.nn.relu(jnp.dot(h.astype(jnp.bfloat16), P["w3"][i],
                                preferred_element_type=jnp.float32) + P["b"][i, 2:3])
        h = jax.nn.relu(jnp.dot(h.astype(jnp.bfloat16), P["w4"][i],
                                preferred_element_type=jnp.float32) + P["b"][i, 3:4])
        bf = jnp.dot(h.astype(jnp.bfloat16), P["wbf"][i],
                     preferred_element_type=jnp.float32) + P["cbf"][i]
        back = back - bf[:, :BACKCAST]
        fore = fore + bf[:, BACKCAST:]
    return (back.reshape(bsz, ch, BACKCAST),
            fore.reshape(bsz, ch, FORECAST))


if __name__ == "__main__":
    # basis matrices (depend only on config)
    b_ls, f_ls = _linspace(BACKCAST, FORECAST)
    bases = {}
    for sid, (stype, p) in enumerate(zip(STACK_TYPES, THETAS_DIMS)):
        if stype == "trend":
            bases[sid] = (jnp.asarray(trend_basis(p, b_ls)),
                          jnp.asarray(trend_basis(p, f_ls)))
        else:
            bases[sid] = (jnp.asarray(seasonality_basis(p, b_ls)),
                          jnp.asarray(seasonality_basis(p, f_ls)))

    key = jax.random.PRNGKey(0)
    key, pkey, xkey = jax.random.split(key, 3)
    blocks = init_block_params(pkey)
    P = stack_and_fold(blocks, bases)

    batch, channels = 2, 4
    x = jax.random.normal(xkey, (batch, channels, BACKCAST), jnp.float32)

    back_out, fore_out = nbeats_forward(x, P)
    back_out = jax.block_until_ready(back_out)
    fore_out = jax.block_until_ready(fore_out)

    back_ref, fore_ref = nbeats_forward_ref(x, P)
    np.testing.assert_allclose(np.asarray(back_out), np.asarray(back_ref),
                               rtol=5e-3, atol=5e-3)
    np.testing.assert_allclose(np.asarray(fore_out), np.asarray(fore_ref),
                               rtol=5e-3, atol=5e-3)

    assert back_out.shape == (batch, channels, BACKCAST)
    assert fore_out.shape == (batch, channels, FORECAST)
    print("KERNEL_OK")
</pallas_src>

<mosaic_0001>
module attributes {stable_mosaic.version = 11 : i64} {
  func.func @nbeats_fused_kernel(%arg0: i32, %arg1: memref<8x10xf32, #tpu.memory_space<vmem>>, %arg2: memref<6x10x256xf32, #tpu.memory_space<vmem>>, %arg3: memref<6x256x256xbf16, #tpu.memory_space<vmem>>, %arg4: memref<6x256x256xbf16, #tpu.memory_space<vmem>>, %arg5: memref<6x256x256xbf16, #tpu.memory_space<vmem>>, %arg6: memref<6x4x256xf32, #tpu.memory_space<vmem>>, %arg7: memref<6x256x15xbf16, #tpu.memory_space<vmem>>, %arg8: memref<6x1x15xf32, #tpu.memory_space<vmem>>, %arg9: memref<8x10xf32, #tpu.memory_space<vmem>>, %arg10: memref<8x5xf32, #tpu.memory_space<vmem>>) attributes {dimension_semantics = [#tpu.dimension_semantics<parallel>], iteration_bounds = array<i64: 1>, scalar_prefetch = 0 : i64, scratch_operands = 0 : i64, tpu.core_type = #tpu.core_type<tc>, window_params = [{transform_indices = @transform_0, window_bounds = array<i64: 8, 10>}, {pipeline_mode = #tpu.pipeline_mode<synchronous>, transform_indices = @transform_1, window_bounds = array<i64: 6, 10, 256>}, {pipeline_mode = #tpu.pipeline_mode<synchronous>, transform_indices = @transform_2, window_bounds = array<i64: 6, 256, 256>}, {pipeline_mode = #tpu.pipeline_mode<synchronous>, transform_indices = @transform_3, window_bounds = array<i64: 6, 256, 256>}, {pipeline_mode = #tpu.pipeline_mode<synchronous>, transform_indices = @transform_4, window_bounds = array<i64: 6, 256, 256>}, {pipeline_mode = #tpu.pipeline_mode<synchronous>, transform_indices = @transform_5, window_bounds = array<i64: 6, 4, 256>}, {pipeline_mode = #tpu.pipeline_mode<synchronous>, transform_indices = @transform_6, window_bounds = array<i64: 6, 256, 15>}, {pipeline_mode = #tpu.pipeline_mode<synchronous>, transform_indices = @transform_7, window_bounds = array<i64: 6, 1, 15>}, {transform_indices = @transform_8, window_bounds = array<i64: 8, 10>}, {transform_indices = @transform_9, window_bounds = array<i64: 8, 5>}]} {
    %c0 = arith.constant 0 : index
    %c0_0 = arith.constant 0 : index
    %0 = vector.load %arg1[%c0, %c0_0] : memref<8x10xf32, #tpu.memory_space<vmem>>, vector<8x10xf32>
    %cst = arith.constant 0.000000e+00 : f32
    %1 = vector.broadcast %cst : f32 to vector<8x5xf32>
    %c0_1 = arith.constant 0 : index
    %c0_2 = arith.constant 0 : index
    %c0_3 = arith.constant 0 : index
    %2 = vector.load %arg6[%c0_1, %c0_2, %c0_3] : memref<6x4x256xf32, #tpu.memory_space<vmem>>, vector<1x4x256xf32>
    %3 = vector.shape_cast %2 : vector<1x4x256xf32> to vector<4x256xf32>
    %c0_4 = arith.constant 0 : index
    %c0_5 = arith.constant 0 : index
    %c0_6 = arith.constant 0 : index
    %4 = vector.load %arg2[%c0_4, %c0_5, %c0_6] : memref<6x10x256xf32, #tpu.memory_space<vmem>>, vector<1x10x256xf32>
    %5 = vector.shape_cast %4 : vector<1x10x256xf32> to vector<10x256xf32>
    %cst_7 = arith.constant dense<0.000000e+00> : vector<8x256xf32>
    %6 = tpu.matmul %0, %5, %cst_7 {dimension_numbers = #tpu.dot_dimension_numbers<[1], [0], [0], [1], [0, 0, 1, 1], [], []>} : vector<8x10xf32>, vector<10x256xf32>, vector<8x256xf32> -> vector<8x256xf32>
    %7 = vector.extract_strided_slice %3 {offsets = [0, 0], sizes = [1, 256], strides = [1, 1]} : vector<4x256xf32> to vector<1x256xf32>
    %8 = vector.broadcast %7 : vector<1x256xf32> to vector<8x256xf32>
    %9 = arith.addf %6, %8 : vector<8x256xf32>
    %cst_8 = arith.constant 0.000000e+00 : f32
    %10 = vector.broadcast %cst_8 : f32 to vector<8x256xf32>
    %11 = arith.maximumf %9, %10 : vector<8x256xf32>
    %12 = arith.truncf %11 : vector<8x256xf32> to vector<8x256xbf16>
    %c0_9 = arith.constant 0 : index
    %c0_10 = arith.constant 0 : index
    %c0_11 = arith.constant 0 : index
    %13 = vector.load %arg3[%c0_9, %c0_10, %c0_11] : memref<6x256x256xbf16, #tpu.memory_space<vmem>>, vector<1x256x256xbf16>
    %14 = vector.shape_cast %13 : vector<1x256x256xbf16> to vector<256x256xbf16>
    %cst_12 = arith.constant dense<0.000000e+00> : vector<8x256xf32>
    %15 = tpu.matmul %12, %14, %cst_12 {dimension_numbers = #tpu.dot_dimension_numbers<[1], [0], [0], [1], [0, 0, 1, 1], [], []>} : vector<8x256xbf16>, vector<256x256xbf16>, vector<8x256xf32> -> vector<8x256xf32>
    %16 = vector.extract_strided_slice %3 {offsets = [1, 0], sizes = [1, 256], strides = [1, 1]} : vector<4x256xf32> to vector<1x256xf32>
    %17 = vector.broadcast %16 : vector<1x256xf32> to vector<8x256xf32>
    %18 = arith.addf %15, %17 : vector<8x256xf32>
    %cst_13 = arith.constant 0.000000e+00 : f32
    %19 = vector.broadcast %cst_13 : f32 to vector<8x256xf32>
    %20 = arith.maximumf %18, %19 : vector<8x256xf32>
    %21 = arith.truncf %20 : vector<8x256xf32> to vector<8x256xbf16>
    %c0_14 = arith.constant 0 : index
    %c0_15 = arith.constant 0 : index
    %c0_16 = arith.constant 0 : index
    %22 = vector.load %arg4[%c0_14, %c0_15, %c0_16] : memref<6x256x256xbf16, #tpu.memory_space<vmem>>, vector<1x256x256xbf16>
    %23 = vector.shape_cast %22 : vector<1x256x256xbf16> to vector<256x256xbf16>
    %cst_17 = arith.constant dense<0.000000e+00> : vector<8x256xf32>
    %24 = tpu.matmul %21, %23, %cst_17 {dimension_numbers = #tpu.dot_dimension_numbers<[1], [0], [0], [1], [0, 0, 1, 1], [], []>} : vector<8x256xbf16>, vector<256x256xbf16>, vector<8x256xf32> -> vector<8x256xf32>
    %25 = vector.extract_strided_slice %3 {offsets = [2, 0], sizes = [1, 256], strides = [1, 1]} : vector<4x256xf32> to vector<1x256xf32>
    %26 = vector.broadcast %25 : vector<1x256xf32> to vector<8x256xf32>
    %27 = arith.addf %24, %26 : vector<8x256xf32>
    %cst_18 = arith.constant 0.000000e+00 : f32
    %28 = vector.broadcast %cst_18 : f32 to vector<8x256xf32>
    %29 = arith.maximumf %27, %28 : vector<8x256xf32>
    %30 = arith.truncf %29 : vector<8x256xf32> to vector<8x256xbf16>
    %c0_19 = arith.constant 0 : index
    %c0_20 = arith.constant 0 : index
    %c0_21 = arith.constant 0 : index
    %31 = vector.load %arg5[%c0_19, %c0_20, %c0_21] : memref<6x256x256xbf16, #tpu.memory_space<vmem>>, vector<1x256x256xbf16>
    %32 = vector.shape_cast %31 : vector<1x256x256xbf16> to vector<256x256xbf16>
    %cst_22 = arith.constant dense<0.000000e+00> : vector<8x256xf32>
    %33 = tpu.matmul %30, %32, %cst_22 {dimension_numbers = #tpu.dot_dimension_numbers<[1], [0], [0], [1], [0, 0, 1, 1], [], []>} : vector<8x256xbf16>, vector<256x256xbf16>, vector<8x256xf32> -> vector<8x256xf32>
    %34 = vector.extract_strided_slice %3 {offsets = [3, 0], sizes = [1, 256], strides = [1, 1]} : vector<4x256xf32> to vector<1x256xf32>
    %35 = vector.broadcast %34 : vector<1x256xf32> to vector<8x256xf32>
    %36 = arith.addf %33, %35 : vector<8x256xf32>
    %cst_23 = arith.constant 0.000000e+00 : f32
    %37 = vector.broadcast %cst_23 : f32 to vector<8x256xf32>
    %38 = arith.maximumf %36, %37 : vector<8x256xf32>
    %39 = arith.truncf %38 : vector<8x256xf32> to vector<8x256xbf16>
    %c0_24 = arith.constant 0 : index
    %c0_25 = arith.constant 0 : index
    %c0_26 = arith.constant 0 : index
    %40 = vector.load %arg7[%c0_24, %c0_25, %c0_26] : memref<6x256x15xbf16, #tpu.memory_space<vmem>>, vector<1x256x15xbf16>
    %41 = vector.shape_cast %40 : vector<1x256x15xbf16> to vector<256x15xbf16>
    %cst_27 = arith.constant dense<0.000000e+00> : vector<8x15xf32>
    %42 = tpu.matmul %39, %41, %cst_27 {dimension_numbers = #tpu.dot_dimension_numbers<[1], [0], [0], [1], [0, 0, 1, 1], [], []>} : vector<8x256xbf16>, vector<256x15xbf16>, vector<8x15xf32> -> vector<8x15xf32>
    %c0_28 = arith.constant 0 : index
    %c0_29 = arith.constant 0 : index
    %c0_30 = arith.constant 0 : index
    %43 = vector.load %arg8[%c0_28, %c0_29, %c0_30] : memref<6x1x15xf32, #tpu.memory_space<vmem>>, vector<1x1x15xf32>
    %44 = vector.shape_cast %43 : vector<1x1x15xf32> to vector<1x15xf32>
    %45 = vector.broadcast %44 : vector<1x15xf32> to vector<8x15xf32>
    %46 = arith.addf %42, %45 : vector<8x15xf32>
    %47 = vector.extract_strided_slice %46 {offsets = [0, 0], sizes = [8, 10], strides = [1, 1]} : vector<8x15xf32> to vector<8x10xf32>
    %48 = arith.subf %0, %47 : vector<8x10xf32>
    %49 = vector.extract_strided_slice %46 {offsets = [0, 10], sizes = [8, 5], strides = [1, 1]} : vector<8x15xf32> to vector<8x5xf32>
    %50 = arith.addf %1, %49 : vector<8x5xf32>
    %c1 = arith.constant 1 : index
    %c0_31 = arith.constant 0 : index
    %c0_32 = arith.constant 0 : index
    %51 = vector.load %arg6[%c1, %c0_31, %c0_32] : memref<6x4x256xf32, #tpu.memory_space<vmem>>, vector<1x4x256xf32>
    %52 = vector.shape_cast %51 : vector<1x4x256xf32> to vector<4x256xf32>
    %c1_33 = arith.constant 1 : index
    %c0_34 = arith.constant 0 : index
    %c0_35 = arith.constant 0 : index
    %53 = vector.load %arg2[%c1_33, %c0_34, %c0_35] : memref<6x10x256xf32, #tpu.memory_space<vmem>>, vector<1x10x256xf32>
    %54 = vector.shape_cast %53 : vector<1x10x256xf32> to vector<10x256xf32>
    %cst_36 = arith.constant dense<0.000000e+00> : vector<8x256xf32>
    %55 = tpu.matmul %48, %54, %cst_36 {dimension_numbers = #tpu.dot_dimension_numbers<[1], [0], [0], [1], [0, 0, 1, 1], [], []>} : vector<8x10xf32>, vector<10x256xf32>, vector<8x256xf32> -> vector<8x256xf32>
    %56 = vector.extract_strided_slice %52 {offsets = [0, 0], sizes = [1, 256], strides = [1, 1]} : vector<4x256xf32> to vector<1x256xf32>
    %57 = vector.broadcast %56 : vector<1x256xf32> to vector<8x256xf32>
    %58 = arith.addf %55, %57 : vector<8x256xf32>
    %cst_37 = arith.constant 0.000000e+00 : f32
    %59 = vector.broadcast %cst_37 : f32 to vector<8x256xf32>
    %60 = arith.maximumf %58, %59 : vector<8x256xf32>
    %61 = arith.truncf %60 : vector<8x256xf32> to vector<8x256xbf16>
    %c1_38 = arith.constant 1 : index
    %c0_39 = arith.constant 0 : index
    %c0_40 = arith.constant 0 : index
    %62 = vector.load %arg3[%c1_38, %c0_39, %c0_40] : memref<6x256x256xbf16, #tpu.memory_space<vmem>>, vector<1x256x256xbf16>
    %63 = vector.shape_cast %62 : vector<1x256x256xbf16> to vector<256x256xbf16>
    %cst_41 = arith.constant dense<0.000000e+00> : vector<8x256xf32>
    %64 = tpu.matmul %61, %63, %cst_41 {dimension_numbers = #tpu.dot_dimension_numbers<[1], [0], [0], [1], [0, 0, 1, 1], [], []>} : vector<8x256xbf16>, vector<256x256xbf16>, vector<8x256xf32> -> vector<8x256xf32>
    %65 = vector.extract_strided_slice %52 {offsets = [1, 0], sizes = [1, 256], strides = [1, 1]} : vector<4x256xf32> to vector<1x256xf32>
    %66 = vector.broadcast %65 : vector<1x256xf32> to vector<8x256xf32>
    %67 = arith.addf %64, %66 : vector<8x256xf32>
    %cst_42 = arith.constant 0.000000e+00 : f32
    %68 = vector.broadcast %cst_42 : f32 to vector<8x256xf32>
    %69 = arith.maximumf %67, %68 : vector<8x256xf32>
    %70 = arith.truncf %69 : vector<8x256xf32> to vector<8x256xbf16>
    %c1_43 = arith.constant 1 : index
    %c0_44 = arith.constant 0 : index
    %c0_45 = arith.constant 0 : index
    %71 = vector.load %arg4[%c1_43, %c0_44, %c0_45] : memref<6x256x256xbf16, #tpu.memory_space<vmem>>, vector<1x256x256xbf16>
    %72 = vector.shape_cast %71 : vector<1x256x256xbf16> to vector<256x256xbf16>
    %cst_46 = arith.constant dense<0.000000e+00> : vector<8x256xf32>
    %73 = tpu.matmul %70, %72, %cst_46 {dimension_numbers = #tpu.dot_dimension_numbers<[1], [0], [0], [1], [0, 0, 1, 1], [], []>} : vector<8x256xbf16>, vector<256x256xbf16>, vector<8x256xf32> -> vector<8x256xf32>
    %74 = vector.extract_strided_slice %52 {offsets = [2, 0], sizes = [1, 256], strides = [1, 1]} : vector<4x256xf32> to vector<1x256xf32>
    %75 = vector.broadcast %74 : vector<1x256xf32> to vector<8x256xf32>
    %76 = arith.addf %73, %75 : vector<8x256xf32>
    %cst_47 = arith.constant 0.000000e+00 : f32
    %77 = vector.broadcast %cst_47 : f32 to vector<8x256xf32>
    %78 = arith.maximumf %76, %77 : vector<8x256xf32>
    %79 = arith.truncf %78 : vector<8x256xf32> to vector<8x256xbf16>
    %c1_48 = arith.constant 1 : index
    %c0_49 = arith.constant 0 : index
    %c0_50 = arith.constant 0 : index
    %80 = vector.load %arg5[%c1_48, %c0_49, %c0_50] : memref<6x256x256xbf16, #tpu.memory_space<vmem>>, vector<1x256x256xbf16>
    %81 = vector.shape_cast %80 : vector<1x256x256xbf16> to vector<256x256xbf16>
    %cst_51 = arith.constant dense<0.000000e+00> : vector<8x256xf32>
    %82 = tpu.matmul %79, %81, %cst_51 {dimension_numbers = #tpu.dot_dimension_numbers<[1], [0], [0], [1], [0, 0, 1, 1], [], []>} : vector<8x256xbf16>, vector<256x256xbf16>, vector<8x256xf32> -> vector<8x256xf32>
    %83 = vector.extract_strided_slice %52 {offsets = [3, 0], sizes = [1, 256], strides = [1, 1]} : vector<4x256xf32> to vector<1x256xf32>
    %84 = vector.broadcast %83 : vector<1x256xf32> to vector<8x256xf32>
    %85 = arith.addf %82, %84 : vector<8x256xf32>
    %cst_52 = arith.constant 0.000000e+00 : f32
    %86 = vector.broadcast %cst_52 : f32 to vector<8x256xf32>
    %87 = arith.maximumf %85, %86 : vector<8x256xf32>
    %88 = arith.truncf %87 : vector<8x256xf32> to vector<8x256xbf16>
    %c1_53 = arith.constant 1 : index
    %c0_54 = arith.constant 0 : index
    %c0_55 = arith.constant 0 : index
    %89 = vector.load %arg7[%c1_53, %c0_54, %c0_55] : memref<6x256x15xbf16, #tpu.memory_space<vmem>>, vector<1x256x15xbf16>
    %90 = vector.shape_cast %89 : vector<1x256x15xbf16> to vector<256x15xbf16>
    %cst_56 = arith.constant dense<0.000000e+00> : vector<8x15xf32>
    %91 = tpu.matmul %88, %90, %cst_56 {dimension_numbers = #tpu.dot_dimension_numbers<[1], [0], [0], [1], [0, 0, 1, 1], [], []>} : vector<8x256xbf16>, vector<256x15xbf16>, vector<8x15xf32> -> vector<8x15xf32>
    %c1_57 = arith.constant 1 : index
    %c0_58 = arith.constant 0 : index
    %c0_59 = arith.constant 0 : index
    %92 = vector.load %arg8[%c1_57, %c0_58, %c0_59] : memref<6x1x15xf32, #tpu.memory_space<vmem>>, vector<1x1x15xf32>
    %93 = vector.shape_cast %92 : vector<1x1x15xf32> to vector<1x15xf32>
    %94 = vector.broadcast %93 : vector<1x15xf32> to vector<8x15xf32>
    %95 = arith.addf %91, %94 : vector<8x15xf32>
    %96 = vector.extract_strided_slice %95 {offsets = [0, 0], sizes = [8, 10], strides = [1, 1]} : vector<8x15xf32> to vector<8x10xf32>
    %97 = arith.subf %48, %96 : vector<8x10xf32>
    %98 = vector.extract_strided_slice %95 {offsets = [0, 10], sizes = [8, 5], strides = [1, 1]} : vector<8x15xf32> to vector<8x5xf32>
    %99 = arith.addf %50, %98 : vector<8x5xf32>
    %c2 = arith.constant 2 : index
    %c0_60 = arith.constant 0 : index
    %c0_61 = arith.constant 0 : index
    %100 = vector.load %arg6[%c2, %c0_60, %c0_61] : memref<6x4x256xf32, #tpu.memory_space<vmem>>, vector<1x4x256xf32>
    %101 = vector.shape_cast %100 : vector<1x4x256xf32> to vector<4x256xf32>
    %c2_62 = arith.constant 2 : index
    %c0_63 = arith.constant 0 : index
    %c0_64 = arith.constant 0 : index
    %102 = vector.load %arg2[%c2_62, %c0_63, %c0_64] : memref<6x10x256xf32, #tpu.memory_space<vmem>>, vector<1x10x256xf32>
    %103 = vector.shape_cast %102 : vector<1x10x256xf32> to vector<10x256xf32>
    %cst_65 = arith.constant dense<0.000000e+00> : vector<8x256xf32>
    %104 = tpu.matmul %97, %103, %cst_65 {dimension_numbers = #tpu.dot_dimension_numbers<[1], [0], [0], [1], [0, 0, 1, 1], [], []>} : vector<8x10xf32>, vector<10x256xf32>, vector<8x256xf32> -> vector<8x256xf32>
    %105 = vector.extract_strided_slice %101 {offsets = [0, 0], sizes = [1, 256], strides = [1, 1]} : vector<4x256xf32> to vector<1x256xf32>
    %106 = vector.broadcast %105 : vector<1x256xf32> to vector<8x256xf32>
    %107 = arith.addf %104, %106 : vector<8x256xf32>
    %cst_66 = arith.constant 0.000000e+00 : f32
    %108 = vector.broadcast %cst_66 : f32 to vector<8x256xf32>
    %109 = arith.maximumf %107, %108 : vector<8x256xf32>
    %110 = arith.truncf %109 : vector<8x256xf32> to vector<8x256xbf16>
    %c2_67 = arith.constant 2 : index
    %c0_68 = arith.constant 0 : index
    %c0_69 = arith.constant 0 : index
    %111 = vector.load %arg3[%c2_67, %c0_68, %c0_69] : memref<6x256x256xbf16, #tpu.memory_space<vmem>>, vector<1x256x256xbf16>
    %112 = vector.shape_cast %111 : vector<1x256x256xbf16> to vector<256x256xbf16>
    %cst_70 = arith.constant dense<0.000000e+00> : vector<8x256xf32>
    %113 = tpu.matmul %110, %112, %cst_70 {dimension_numbers = #tpu.dot_dimension_numbers<[1], [0], [0], [1], [0, 0, 1, 1], [], []>} : vector<8x256xbf16>, vector<256x256xbf16>, vector<8x256xf32> -> vector<8x256xf32>
    %114 = vector.extract_strided_slice %101 {offsets = [1, 0], sizes = [1, 256], strides = [1, 1]} : vector<4x256xf32> to vector<1x256xf32>
    %115 = vector.broadcast %114 : vector<1x256xf32> to vector<8x256xf32>
    %116 = arith.addf %113, %115 : vector<8x256xf32>
    %cst_71 = arith.constant 0.000000e+00 : f32
    %117 = vector.broadcast %cst_71 : f32 to vector<8x256xf32>
    %118 = arith.maximumf %116, %117 : vector<8x256xf32>
    %119 = arith.truncf %118 : vector<8x256xf32> to vector<8x256xbf16>
    %c2_72 = arith.constant 2 : index
    %c0_73 = arith.constant 0 : index
    %c0_74 = arith.constant 0 : index
    %120 = vector.load %arg4[%c2_72, %c0_73, %c0_74] : memref<6x256x256xbf16, #tpu.memory_space<vmem>>, vector<1x256x256xbf16>
    %121 = vector.shape_cast %120 : vector<1x256x256xbf16> to vector<256x256xbf16>
    %cst_75 = arith.constant dense<0.000000e+00> : vector<8x256xf32>
    %122 = tpu.matmul %119, %121, %cst_75 {dimension_numbers = #tpu.dot_dimension_numbers<[1], [0], [0], [1], [0, 0, 1, 1], [], []>} : vector<8x256xbf16>, vector<256x256xbf16>, vector<8x256xf32> -> vector<8x256xf32>
    %123 = vector.extract_strided_slice %101 {offsets = [2, 0], sizes = [1, 256], strides = [1, 1]} : vector<4x256xf32> to vector<1x256xf32>
    %124 = vector.broadcast %123 : vector<1x256xf32> to vector<8x256xf32>
    %125 = arith.addf %122, %124 : vector<8x256xf32>
    %cst_76 = arith.constant 0.000000e+00 : f32
    %126 = vector.broadcast %cst_76 : f32 to vector<8x256xf32>
    %127 = arith.maximumf %125, %126 : vector<8x256xf32>
    %128 = arith.truncf %127 : vector<8x256xf32> to vector<8x256xbf16>
    %c2_77 = arith.constant 2 : index
    %c0_78 = arith.constant 0 : index
    %c0_79 = arith.constant 0 : index
    %129 = vector.load %arg5[%c2_77, %c0_78, %c0_79] : memref<6x256x256xbf16, #tpu.memory_space<vmem>>, vector<1x256x256xbf16>
    %130 = vector.shape_cast %129 : vector<1x256x256xbf16> to vector<256x256xbf16>
    %cst_80 = arith.constant dense<0.000000e+00> : vector<8x256xf32>
    %131 = tpu.matmul %128, %130, %cst_80 {dimension_numbers = #tpu.dot_dimension_numbers<[1], [0], [0], [1], [0, 0, 1, 1], [], []>} : vector<8x256xbf16>, vector<256x256xbf16>, vector<8x256xf32> -> vector<8x256xf32>
    %132 = vector.extract_strided_slice %101 {offsets = [3, 0], sizes = [1, 256], strides = [1, 1]} : vector<4x256xf32> to vector<1x256xf32>
    %133 = vector.broadcast %132 : vector<1x256xf32> to vector<8x256xf32>
    %134 = arith.addf %131, %133 : vector<8x256xf32>
    %cst_81 = arith.constant 0.000000e+00 : f32
    %135 = vector.broadcast %cst_81 : f32 to vector<8x256xf32>
    %136 = arith.maximumf %134, %135 : vector<8x256xf32>
    %137 = arith.truncf %136 : vector<8x256xf32> to vector<8x256xbf16>
    %c2_82 = arith.constant 2 : index
    %c0_83 = arith.constant 0 : index
    %c0_84 = arith.constant 0 : index
    %138 = vector.load %arg7[%c2_82, %c0_83, %c0_84] : memref<6x256x15xbf16, #tpu.memory_space<vmem>>, vector<1x256x15xbf16>
    %139 = vector.shape_cast %138 : vector<1x256x15xbf16> to vector<256x15xbf16>
    %cst_85 = arith.constant dense<0.000000e+00> : vector<8x15xf32>
    %140 = tpu.matmul %137, %139, %cst_85 {dimension_numbers = #tpu.dot_dimension_numbers<[1], [0], [0], [1], [0, 0, 1, 1], [], []>} : vector<8x256xbf16>, vector<256x15xbf16>, vector<8x15xf32> -> vector<8x15xf32>
    %c2_86 = arith.constant 2 : index
    %c0_87 = arith.constant 0 : index
    %c0_88 = arith.constant 0 : index
    %141 = vector.load %arg8[%c2_86, %c0_87, %c0_88] : memref<6x1x15xf32, #tpu.memory_space<vmem>>, vector<1x1x15xf32>
    %142 = vector.shape_cast %141 : vector<1x1x15xf32> to vector<1x15xf32>
    %143 = vector.broadcast %142 : vector<1x15xf32> to vector<8x15xf32>
    %144 = arith.addf %140, %143 : vector<8x15xf32>
    %145 = vector.extract_strided_slice %144 {offsets = [0, 0], sizes = [8, 10], strides = [1, 1]} : vector<8x15xf32> to vector<8x10xf32>
    %146 = arith.subf %97, %145 : vector<8x10xf32>
    %147 = vector.extract_strided_slice %144 {offsets = [0, 10], sizes = [8, 5], strides = [1, 1]} : vector<8x15xf32> to vector<8x5xf32>
    %148 = arith.addf %99, %147 : vector<8x5xf32>
    %c3 = arith.constant 3 : index
    %c0_89 = arith.constant 0 : index
    %c0_90 = arith.constant 0 : index
    %149 = vector.load %arg6[%c3, %c0_89, %c0_90] : memref<6x4x256xf32, #tpu.memory_space<vmem>>, vector<1x4x256xf32>
    %150 = vector.shape_cast %149 : vector<1x4x256xf32> to vector<4x256xf32>
    %c3_91 = arith.constant 3 : index
    %c0_92 = arith.constant 0 : index
    %c0_93 = arith.constant 0 : index
    %151 = vector.load %arg2[%c3_91, %c0_92, %c0_93] : memref<6x10x256xf32, #tpu.memory_space<vmem>>, vector<1x10x256xf32>
    %152 = vector.shape_cast %151 : vector<1x10x256xf32> to vector<10x256xf32>
    %cst_94 = arith.constant dense<0.000000e+00> : vector<8x256xf32>
    %153 = tpu.matmul %146, %152, %cst_94 {dimension_numbers = #tpu.dot_dimension_numbers<[1], [0], [0], [1], [0, 0, 1, 1], [], []>} : vector<8x10xf32>, vector<10x256xf32>, vector<8x256xf32> -> vector<8x256xf32>
    %154 = vector.extract_strided_slice %150 {offsets = [0, 0], sizes = [1, 256], strides = [1, 1]} : vector<4x256xf32> to vector<1x256xf32>
    %155 = vector.broadcast %154 : vector<1x256xf32> to vector<8x256xf32>
    %156 = arith.addf %153, %155 : vector<8x256xf32>
    %cst_95 = arith.constant 0.000000e+00 : f32
    %157 = vector.broadcast %cst_95 : f32 to vector<8x256xf32>
    %158 = arith.maximumf %156, %157 : vector<8x256xf32>
    %159 = arith.truncf %158 : vector<8x256xf32> to vector<8x256xbf16>
    %c3_96 = arith.constant 3 : index
    %c0_97 = arith.constant 0 : index
    %c0_98 = arith.constant 0 : index
    %160 = vector.load %arg3[%c3_96, %c0_97, %c0_98] : memref<6x256x256xbf16, #tpu.memory_space<vmem>>, vector<1x256x256xbf16>
    %161 = vector.shape_cast %160 : vector<1x256x256xbf16> to vector<256x256xbf16>
    %cst_99 = arith.constant dense<0.000000e+00> : vector<8x256xf32>
    %162 = tpu.matmul %159, %161, %cst_99 {dimension_numbers = #tpu.dot_dimension_numbers<[1], [0], [0], [1], [0, 0, 1, 1], [], []>} : vector<8x256xbf16>, vector<256x256xbf16>, vector<8x256xf32> -> vector<8x256xf32>
    %163 = vector.extract_strided_slice %150 {offsets = [1, 0], sizes = [1, 256], strides = [1, 1]} : vector<4x256xf32> to vector<1x256xf32>
    %164 = vector.broadcast %163 : vector<1x256xf32> to vector<8x256xf32>
    %165 = arith.addf %162, %164 : vector<8x256xf32>
    %cst_100 = arith.constant 0.000000e+00 : f32
    %166 = vector.broadcast %cst_100 : f32 to vector<8x256xf32>
    %167 = arith.maximumf %165, %166 : vector<8x256xf32>
    %168 = arith.truncf %167 : vector<8x256xf32> to vector<8x256xbf16>
    %c3_101 = arith.constant 3 : index
    %c0_102 = arith.constant 0 : index
    %c0_103 = arith.constant 0 : index
    %169 = vector.load %arg4[%c3_101, %c0_102, %c0_103] : memref<6x256x256xbf16, #tpu.memory_space<vmem>>, vector<1x256x256xbf16>
    %170 = vector.shape_cast %169 : vector<1x256x256xbf16> to vector<256x256xbf16>
    %cst_104 = arith.constant dense<0.000000e+00> : vector<8x256xf32>
    %171 = tpu.matmul %168, %170, %cst_104 {dimension_numbers = #tpu.dot_dimension_numbers<[1], [0], [0], [1], [0, 0, 1, 1], [], []>} : vector<8x256xbf16>, vector<256x256xbf16>, vector<8x256xf32> -> vector<8x256xf32>
    %172 = vector.extract_strided_slice %150 {offsets = [2, 0], sizes = [1, 256], strides = [1, 1]} : vector<4x256xf32> to vector<1x256xf32>
    %173 = vector.broadcast %172 : vector<1x256xf32> to vector<8x256xf32>
    %174 = arith.addf %171, %173 : vector<8x256xf32>
    %cst_105 = arith.constant 0.000000e+00 : f32
    %175 = vector.broadcast %cst_105 : f32 to vector<8x256xf32>
    %176 = arith.maximumf %174, %175 : vector<8x256xf32>
    %177 = arith.truncf %176 : vector<8x256xf32> to vector<8x256xbf16>
    %c3_106 = arith.constant 3 : index
    %c0_107 = arith.constant 0 : index
    %c0_108 = arith.constant 0 : index
    %178 = vector.load %arg5[%c3_106, %c0_107, %c0_108] : memref<6x256x256xbf16, #tpu.memory_space<vmem>>, vector<1x256x256xbf16>
    %179 = vector.shape_cast %178 : vector<1x256x256xbf16> to vector<256x256xbf16>
    %cst_109 = arith.constant dense<0.000000e+00> : vector<8x256xf32>
    %180 = tpu.matmul %177, %179, %cst_109 {dimension_numbers = #tpu.dot_dimension_numbers<[1], [0], [0], [1], [0, 0, 1, 1], [], []>} : vector<8x256xbf16>, vector<256x256xbf16>, vector<8x256xf32> -> vector<8x256xf32>
    %181 = vector.extract_strided_slice %150 {offsets = [3, 0], sizes = [1, 256], strides = [1, 1]} : vector<4x256xf32> to vector<1x256xf32>
    %182 = vector.broadcast %181 : vector<1x256xf32> to vector<8x256xf32>
    %183 = arith.addf %180, %182 : vector<8x256xf32>
    %cst_110 = arith.constant 0.000000e+00 : f32
    %184 = vector.broadcast %cst_110 : f32 to vector<8x256xf32>
    %185 = arith.maximumf %183, %184 : vector<8x256xf32>
    %186 = arith.truncf %185 : vector<8x256xf32> to vector<8x256xbf16>
    %c3_111 = arith.constant 3 : index
    %c0_112 = arith.constant 0 : index
    %c0_113 = arith.constant 0 : index
    %187 = vector.load %arg7[%c3_111, %c0_112, %c0_113] : memref<6x256x15xbf16, #tpu.memory_space<vmem>>, vector<1x256x15xbf16>
    %188 = vector.shape_cast %187 : vector<1x256x15xbf16> to vector<256x15xbf16>
    %cst_114 = arith.constant dense<0.000000e+00> : vector<8x15xf32>
    %189 = tpu.matmul %186, %188, %cst_114 {dimension_numbers = #tpu.dot_dimension_numbers<[1], [0], [0], [1], [0, 0, 1, 1], [], []>} : vector<8x256xbf16>, vector<256x15xbf16>, vector<8x15xf32> -> vector<8x15xf32>
    %c3_115 = arith.constant 3 : index
    %c0_116 = arith.constant 0 : index
    %c0_117 = arith.constant 0 : index
    %190 = vector.load %arg8[%c3_115, %c0_116, %c0_117] : memref<6x1x15xf32, #tpu.memory_space<vmem>>, vector<1x1x15xf32>
    %191 = vector.shape_cast %190 : vector<1x1x15xf32> to vector<1x15xf32>
    %192 = vector.broadcast %191 : vector<1x15xf32> to vector<8x15xf32>
    %193 = arith.addf %189, %192 : vector<8x15xf32>
    %194 = vector.extract_strided_slice %193 {offsets = [0, 0], sizes = [8, 10], strides = [1, 1]} : vector<8x15xf32> to vector<8x10xf32>
    %195 = arith.subf %146, %194 : vector<8x10xf32>
    %196 = vector.extract_strided_slice %193 {offsets = [0, 10], sizes = [8, 5], strides = [1, 1]} : vector<8x15xf32> to vector<8x5xf32>
    %197 = arith.addf %148, %196 : vector<8x5xf32>
    %c4 = arith.constant 4 : index
    %c0_118 = arith.constant 0 : index
    %c0_119 = arith.constant 0 : index
    %198 = vector.load %arg6[%c4, %c0_118, %c0_119] : memref<6x4x256xf32, #tpu.memory_space<vmem>>, vector<1x4x256xf32>
    %199 = vector.shape_cast %198 : vector<1x4x256xf32> to vector<4x256xf32>
    %c4_120 = arith.constant 4 : index
    %c0_121 = arith.constant 0 : index
    %c0_122 = arith.constant 0 : index
    %200 = vector.load %arg2[%c4_120, %c0_121, %c0_122] : memref<6x10x256xf32, #tpu.memory_space<vmem>>, vector<1x10x256xf32>
    %201 = vector.shape_cast %200 : vector<1x10x256xf32> to vector<10x256xf32>
    %cst_123 = arith.constant dense<0.000000e+00> : vector<8x256xf32>
    %202 = tpu.matmul %195, %201, %cst_123 {dimension_numbers = #tpu.dot_dimension_numbers<[1], [0], [0], [1], [0, 0, 1, 1], [], []>} : vector<8x10xf32>, vector<10x256xf32>, vector<8x256xf32> -> vector<8x256xf32>
    %203 = vector.extract_strided_slice %199 {offsets = [0, 0], sizes = [1, 256], strides = [1, 1]} : vector<4x256xf32> to vector<1x256xf32>
    %204 = vector.broadcast %203 : vector<1x256xf32> to vector<8x256xf32>
    %205 = arith.addf %202, %204 : vector<8x256xf32>
    %cst_124 = arith.constant 0.000000e+00 : f32
    %206 = vector.broadcast %cst_124 : f32 to vector<8x256xf32>
    %207 = arith.maximumf %205, %206 : vector<8x256xf32>
    %208 = arith.truncf %207 : vector<8x256xf32> to vector<8x256xbf16>
    %c4_125 = arith.constant 4 : index
    %c0_126 = arith.constant 0 : index
    %c0_127 = arith.constant 0 : index
    %209 = vector.load %arg3[%c4_125, %c0_126, %c0_127] : memref<6x256x256xbf16, #tpu.memory_space<vmem>>, vector<1x256x256xbf16>
    %210 = vector.shape_cast %209 : vector<1x256x256xbf16> to vector<256x256xbf16>
    %cst_128 = arith.constant dense<0.000000e+00> : vector<8x256xf32>
    %211 = tpu.matmul %208, %210, %cst_128 {dimension_numbers = #tpu.dot_dimension_numbers<[1], [0], [0], [1], [0, 0, 1, 1], [], []>} : vector<8x256xbf16>, vector<256x256xbf16>, vector<8x256xf32> -> vector<8x256xf32>
    %212 = vector.extract_strided_slice %199 {offsets = [1, 0], sizes = [1, 256], strides = [1, 1]} : vector<4x256xf32> to vector<1x256xf32>
    %213 = vector.broadcast %212 : vector<1x256xf32> to vector<8x256xf32>
    %214 = arith.addf %211, %213 : vector<8x256xf32>
    %cst_129 = arith.constant 0.000000e+00 : f32
    %215 = vector.broadcast %cst_129 : f32 to vector<8x256xf32>
    %216 = arith.maximumf %214, %215 : vector<8x256xf32>
    %217 = arith.truncf %216 : vector<8x256xf32> to vector<8x256xbf16>
    %c4_130 = arith.constant 4 : index
    %c0_131 = arith.constant 0 : index
    %c0_132 = arith.constant 0 : index
    %218 = vector.load %arg4[%c4_130, %c0_131, %c0_132] : memref<6x256x256xbf16, #tpu.memory_space<vmem>>, vector<1x256x256xbf16>
    %219 = vector.shape_cast %218 : vector<1x256x256xbf16> to vector<256x256xbf16>
    %cst_133 = arith.constant dense<0.000000e+00> : vector<8x256xf32>
    %220 = tpu.matmul %217, %219, %cst_133 {dimension_numbers = #tpu.dot_dimension_numbers<[1], [0], [0], [1], [0, 0, 1, 1], [], []>} : vector<8x256xbf16>, vector<256x256xbf16>, vector<8x256xf32> -> vector<8x256xf32>
    %221 = vector.extract_strided_slice %199 {offsets = [2, 0], sizes = [1, 256], strides = [1, 1]} : vector<4x256xf32> to vector<1x256xf32>
    %222 = vector.broadcast %221 : vector<1x256xf32> to vector<8x256xf32>
    %223 = arith.addf %220, %222 : vector<8x256xf32>
    %cst_134 = arith.constant 0.000000e+00 : f32
    %224 = vector.broadcast %cst_134 : f32 to vector<8x256xf32>
    %225 = arith.maximumf %223, %224 : vector<8x256xf32>
    %226 = arith.truncf %225 : vector<8x256xf32> to vector<8x256xbf16>
    %c4_135 = arith.constant 4 : index
    %c0_136 = arith.constant 0 : index
    %c0_137 = arith.constant 0 : index
    %227 = vector.load %arg5[%c4_135, %c0_136, %c0_137] : memref<6x256x256xbf16, #tpu.memory_space<vmem>>, vector<1x256x256xbf16>
    %228 = vector.shape_cast %227 : vector<1x256x256xbf16> to vector<256x256xbf16>
    %cst_138 = arith.constant dense<0.000000e+00> : vector<8x256xf32>
    %229 = tpu.matmul %226, %228, %cst_138 {dimension_numbers = #tpu.dot_dimension_numbers<[1], [0], [0], [1], [0, 0, 1, 1], [], []>} : vector<8x256xbf16>, vector<256x256xbf16>, vector<8x256xf32> -> vector<8x256xf32>
    %230 = vector.extract_strided_slice %199 {offsets = [3, 0], sizes = [1, 256], strides = [1, 1]} : vector<4x256xf32> to vector<1x256xf32>
    %231 = vector.broadcast %230 : vector<1x256xf32> to vector<8x256xf32>
    %232 = arith.addf %229, %231 : vector<8x256xf32>
    %cst_139 = arith.constant 0.000000e+00 : f32
    %233 = vector.broadcast %cst_139 : f32 to vector<8x256xf32>
    %234 = arith.maximumf %232, %233 : vector<8x256xf32>
    %235 = arith.truncf %234 : vector<8x256xf32> to vector<8x256xbf16>
    %c4_140 = arith.constant 4 : index
    %c0_141 = arith.constant 0 : index
    %c0_142 = arith.constant 0 : index
    %236 = vector.load %arg7[%c4_140, %c0_141, %c0_142] : memref<6x256x15xbf16, #tpu.memory_space<vmem>>, vector<1x256x15xbf16>
    %237 = vector.shape_cast %236 : vector<1x256x15xbf16> to vector<256x15xbf16>
    %cst_143 = arith.constant dense<0.000000e+00> : vector<8x15xf32>
    %238 = tpu.matmul %235, %237, %cst_143 {dimension_numbers = #tpu.dot_dimension_numbers<[1], [0], [0], [1], [0, 0, 1, 1], [], []>} : vector<8x256xbf16>, vector<256x15xbf16>, vector<8x15xf32> -> vector<8x15xf32>
    %c4_144 = arith.constant 4 : index
    %c0_145 = arith.constant 0 : index
    %c0_146 = arith.constant 0 : index
    %239 = vector.load %arg8[%c4_144, %c0_145, %c0_146] : memref<6x1x15xf32, #tpu.memory_space<vmem>>, vector<1x1x15xf32>
    %240 = vector.shape_cast %239 : vector<1x1x15xf32> to vector<1x15xf32>
    %241 = vector.broadcast %240 : vector<1x15xf32> to vector<8x15xf32>
    %242 = arith.addf %238, %241 : vector<8x15xf32>
    %243 = vector.extract_strided_slice %242 {offsets = [0, 0], sizes = [8, 10], strides = [1, 1]} : vector<8x15xf32> to vector<8x10xf32>
    %244 = arith.subf %195, %243 : vector<8x10xf32>
    %245 = vector.extract_strided_slice %242 {offsets = [0, 10], sizes = [8, 5], strides = [1, 1]} : vector<8x15xf32> to vector<8x5xf32>
    %246 = arith.addf %197, %245 : vector<8x5xf32>
    %c5 = arith.constant 5 : index
    %c0_147 = arith.constant 0 : index
    %c0_148 = arith.constant 0 : index
    %247 = vector.load %arg6[%c5, %c0_147, %c0_148] : memref<6x4x256xf32, #tpu.memory_space<vmem>>, vector<1x4x256xf32>
    %248 = vector.shape_cast %247 : vector<1x4x256xf32> to vector<4x256xf32>
    %c5_149 = arith.constant 5 : index
    %c0_150 = arith.constant 0 : index
    %c0_151 = arith.constant 0 : index
    %249 = vector.load %arg2[%c5_149, %c0_150, %c0_151] : memref<6x10x256xf32, #tpu.memory_space<vmem>>, vector<1x10x256xf32>
    %250 = vector.shape_cast %249 : vector<1x10x256xf32> to vector<10x256xf32>
    %cst_152 = arith.constant dense<0.000000e+00> : vector<8x256xf32>
    %251 = tpu.matmul %244, %250, %cst_152 {dimension_numbers = #tpu.dot_dimension_numbers<[1], [0], [0], [1], [0, 0, 1, 1], [], []>} : vector<8x10xf32>, vector<10x256xf32>, vector<8x256xf32> -> vector<8x256xf32>
    %252 = vector.extract_strided_slice %248 {offsets = [0, 0], sizes = [1, 256], strides = [1, 1]} : vector<4x256xf32> to vector<1x256xf32>
    %253 = vector.broadcast %252 : vector<1x256xf32> to vector<8x256xf32>
    %254 = arith.addf %251, %253 : vector<8x256xf32>
    %cst_153 = arith.constant 0.000000e+00 : f32
    %255 = vector.broadcast %cst_153 : f32 to vector<8x256xf32>
    %256 = arith.maximumf %254, %255 : vector<8x256xf32>
    %257 = arith.truncf %256 : vector<8x256xf32> to vector<8x256xbf16>
    %c5_154 = arith.constant 5 : index
    %c0_155 = arith.constant 0 : index
    %c0_156 = arith.constant 0 : index
    %258 = vector.load %arg3[%c5_154, %c0_155, %c0_156] : memref<6x256x256xbf16, #tpu.memory_space<vmem>>, vector<1x256x256xbf16>
    %259 = vector.shape_cast %258 : vector<1x256x256xbf16> to vector<256x256xbf16>
    %cst_157 = arith.constant dense<0.000000e+00> : vector<8x256xf32>
    %260 = tpu.matmul %257, %259, %cst_157 {dimension_numbers = #tpu.dot_dimension_numbers<[1], [0], [0], [1], [0, 0, 1, 1], [], []>} : vector<8x256xbf16>, vector<256x256xbf16>, vector<8x256xf32> -> vector<8x256xf32>
    %261 = vector.extract_strided_slice %248 {offsets = [1, 0], sizes = [1, 256], strides = [1, 1]} : vector<4x256xf32> to vector<1x256xf32>
    %262 = vector.broadcast %261 : vector<1x256xf32> to vector<8x256xf32>
    %263 = arith.addf %260, %262 : vector<8x256xf32>
    %cst_158 = arith.constant 0.000000e+00 : f32
    %264 = vector.broadcast %cst_158 : f32 to vector<8x256xf32>
    %265 = arith.maximumf %263, %264 : vector<8x256xf32>
    %266 = arith.truncf %265 : vector<8x256xf32> to vector<8x256xbf16>
    %c5_159 = arith.constant 5 : index
    %c0_160 = arith.constant 0 : index
    %c0_161 = arith.constant 0 : index
    %267 = vector.load %arg4[%c5_159, %c0_160, %c0_161] : memref<6x256x256xbf16, #tpu.memory_space<vmem>>, vector<1x256x256xbf16>
    %268 = vector.shape_cast %267 : vector<1x256x256xbf16> to vector<256x256xbf16>
    %cst_162 = arith.constant dense<0.000000e+00> : vector<8x256xf32>
    %269 = tpu.matmul %266, %268, %cst_162 {dimension_numbers = #tpu.dot_dimension_numbers<[1], [0], [0], [1], [0, 0, 1, 1], [], []>} : vector<8x256xbf16>, vector<256x256xbf16>, vector<8x256xf32> -> vector<8x256xf32>
    %270 = vector.extract_strided_slice %248 {offsets = [2, 0], sizes = [1, 256], strides = [1, 1]} : vector<4x256xf32> to vector<1x256xf32>
    %271 = vector.broadcast %270 : vector<1x256xf32> to vector<8x256xf32>
    %272 = arith.addf %269, %271 : vector<8x256xf32>
    %cst_163 = arith.constant 0.000000e+00 : f32
    %273 = vector.broadcast %cst_163 : f32 to vector<8x256xf32>
    %274 = arith.maximumf %272, %273 : vector<8x256xf32>
    %275 = arith.truncf %274 : vector<8x256xf32> to vector<8x256xbf16>
    %c5_164 = arith.constant 5 : index
    %c0_165 = arith.constant 0 : index
    %c0_166 = arith.constant 0 : index
    %276 = vector.load %arg5[%c5_164, %c0_165, %c0_166] : memref<6x256x256xbf16, #tpu.memory_space<vmem>>, vector<1x256x256xbf16>
    %277 = vector.shape_cast %276 : vector<1x256x256xbf16> to vector<256x256xbf16>
    %cst_167 = arith.constant dense<0.000000e+00> : vector<8x256xf32>
    %278 = tpu.matmul %275, %277, %cst_167 {dimension_numbers = #tpu.dot_dimension_numbers<[1], [0], [0], [1], [0, 0, 1, 1], [], []>} : vector<8x256xbf16>, vector<256x256xbf16>, vector<8x256xf32> -> vector<8x256xf32>
    %279 = vector.extract_strided_slice %248 {offsets = [3, 0], sizes = [1, 256], strides = [1, 1]} : vector<4x256xf32> to vector<1x256xf32>
    %280 = vector.broadcast %279 : vector<1x256xf32> to vector<8x256xf32>
    %281 = arith.addf %278, %280 : vector<8x256xf32>
    %cst_168 = arith.constant 0.000000e+00 : f32
    %282 = vector.broadcast %cst_168 : f32 to vector<8x256xf32>
    %283 = arith.maximumf %281, %282 : vector<8x256xf32>
    %284 = arith.truncf %283 : vector<8x256xf32> to vector<8x256xbf16>
    %c5_169 = arith.constant 5 : index
    %c0_170 = arith.constant 0 : index
    %c0_171 = arith.constant 0 : index
    %285 = vector.load %arg7[%c5_169, %c0_170, %c0_171] : memref<6x256x15xbf16, #tpu.memory_space<vmem>>, vector<1x256x15xbf16>
    %286 = vector.shape_cast %285 : vector<1x256x15xbf16> to vector<256x15xbf16>
    %cst_172 = arith.constant dense<0.000000e+00> : vector<8x15xf32>
    %287 = tpu.matmul %284, %286, %cst_172 {dimension_numbers = #tpu.dot_dimension_numbers<[1], [0], [0], [1], [0, 0, 1, 1], [], []>} : vector<8x256xbf16>, vector<256x15xbf16>, vector<8x15xf32> -> vector<8x15xf32>
    %c5_173 = arith.constant 5 : index
    %c0_174 = arith.constant 0 : index
    %c0_175 = arith.constant 0 : index
    %288 = vector.load %arg8[%c5_173, %c0_174, %c0_175] : memref<6x1x15xf32, #tpu.memory_space<vmem>>, vector<1x1x15xf32>
    %289 = vector.shape_cast %288 : vector<1x1x15xf32> to vector<1x15xf32>
    %290 = vector.broadcast %289 : vector<1x15xf32> to vector<8x15xf32>
    %291 = arith.addf %287, %290 : vector<8x15xf32>
    %292 = vector.extract_strided_slice %291 {offsets = [0, 0], sizes = [8, 10], strides = [1, 1]} : vector<8x15xf32> to vector<8x10xf32>
    %293 = arith.subf %244, %292 : vector<8x10xf32>
    %294 = vector.extract_strided_slice %291 {offsets = [0, 10], sizes = [8, 5], strides = [1, 1]} : vector<8x15xf32> to vector<8x5xf32>
    %295 = arith.addf %246, %294 : vector<8x5xf32>
    %c0_176 = arith.constant 0 : index
    %c0_177 = arith.constant 0 : index
    %296 = vector.load %arg9[%c0_176, %c0_177] : memref<8x10xf32, #tpu.memory_space<vmem>>, vector<8x10xf32>
    tpu.vector_store %arg9[%c0_176, %c0_177], %293 {strides = array<i32>} : memref<8x10xf32, #tpu.memory_space<vmem>>, vector<8x10xf32>,
    %c0_178 = arith.constant 0 : index
    %c0_179 = arith.constant 0 : index
    %297 = vector.load %arg10[%c0_178, %c0_179] : memref<8x5xf32, #tpu.memory_space<vmem>>, vector<8x5xf32>
    tpu.vector_store %arg10[%c0_178, %c0_179], %295 {strides = array<i32>} : memref<8x5xf32, #tpu.memory_space<vmem>>, vector<8x5xf32>,
    return
  }
  func.func @transform_0(%arg0: i32) -> (i32, i32) {
    %c0_i32 = arith.constant 0 : i32
    %c0_i32_0 = arith.constant 0 : i32
    return %arg0, %c0_i32 : i32, i32
  }
  func.func @transform_1(%arg0: i32) -> (i32, i32, i32) {
    %c0_i32 = arith.constant 0 : i32
    %c0_i32_0 = arith.constant 0 : i32
    %c0_i32_1 = arith.constant 0 : i32
    %c0_i32_2 = arith.constant 0 : i32
    return %c0_i32, %c0_i32_0, %c0_i32_1 : i32, i32, i32
  }
  func.func @transform_2(%arg0: i32) -> (i32, i32, i32) {
    %c0_i32 = arith.constant 0 : i32
    %c0_i32_0 = arith.constant 0 : i32
    %c0_i32_1 = arith.constant 0 : i32
    %c0_i32_2 = arith.constant 0 : i32
    return %c0_i32, %c0_i32_0, %c0_i32_1 : i32, i32, i32
  }
  func.func @transform_3(%arg0: i32) -> (i32, i32, i32) {
    %c0_i32 = arith.constant 0 : i32
    %c0_i32_0 = arith.constant 0 : i32
    %c0_i32_1 = arith.constant 0 : i32
    %c0_i32_2 = arith.constant 0 : i32
    return %c0_i32, %c0_i32_0, %c0_i32_1 : i32, i32, i32
  }
  func.func @transform_4(%arg0: i32) -> (i32, i32, i32) {
    %c0_i32 = arith.constant 0 : i32
    %c0_i32_0 = arith.constant 0 : i32
    %c0_i32_1 = arith.constant 0 : i32
    %c0_i32_2 = arith.constant 0 : i32
    return %c0_i32, %c0_i32_0, %c0_i32_1 : i32, i32, i32
  }
  func.func @transform_5(%arg0: i32) -> (i32, i32, i32) {
    %c0_i32 = arith.constant 0 : i32
    %c0_i32_0 = arith.constant 0 : i32
    %c0_i32_1 = arith.constant 0 : i32
    %c0_i32_2 = arith.constant 0 : i32
    return %c0_i32, %c0_i32_0, %c0_i32_1 : i32, i32, i32
  }
  func.func @transform_6(%arg0: i32) -> (i32, i32, i32) {
    %c0_i32 = arith.constant 0 : i32
    %c0_i32_0 = arith.constant 0 : i32
    %c0_i32_1 = arith.constant 0 : i32
    %c0_i32_2 = arith.constant 0 : i32
    return %c0_i32, %c0_i32_0, %c0_i32_1 : i32, i32, i32
  }
  func.func @transform_7(%arg0: i32) -> (i32, i32, i32) {
    %c0_i32 = arith.constant 0 : i32
    %c0_i32_0 = arith.constant 0 : i32
    %c0_i32_1 = arith.constant 0 : i32
    %c0_i32_2 = arith.constant 0 : i32
    return %c0_i32, %c0_i32_0, %c0_i32_1 : i32, i32, i32
  }
  func.func @transform_8(%arg0: i32) -> (i32, i32) {
    %c0_i32 = arith.constant 0 : i32
    %c0_i32_0 = arith.constant 0 : i32
    return %arg0, %c0_i32 : i32, i32
  }
  func.func @transform_9(%arg0: i32) -> (i32, i32) {
    %c0_i32 = arith.constant 0 : i32
    %c0_i32_0 = arith.constant 0 : i32
    return %arg0, %c0_i32 : i32, i32
  }
}

</mosaic_0001>

<llo_original>
// kernel: _nbeats_forward_impl.1
$region0: #{_nbeats_forward_impl.1}
  #allocation0 [shape = 'u32[]', space=smem, size = 0x4, offset = 0x4, fixed_abs, tag = 'smem constant byte address 0x4 - core index']
  #allocation1 [shape = 'u32[72,128]{1,0:T(1,128)}', space=vmem, size = 0x9000, scoped, tag = 'internal scratch']
  %s0 = inlined_call_operand.vmem [shape: f32[8,10], index: 0, kind: input, shape index: {}]
  %s1 = inlined_call_operand.vmem [shape: f32[6,10,256], index: 1, kind: input, shape index: {}]
  %s2 = inlined_call_operand.hbm [shape: bf16[6,256,256], index: 2, kind: input, shape index: {}]
  %s3 = inlined_call_operand.hbm [shape: bf16[6,256,256], index: 3, kind: input, shape index: {}]
  %s4 = inlined_call_operand.hbm [shape: bf16[6,256,256], index: 4, kind: input, shape index: {}]
  %s5 = inlined_call_operand.vmem [shape: f32[6,4,256], index: 5, kind: input, shape index: {}]
  %s6 = inlined_call_operand.vmem [shape: bf16[6,256,15], index: 6, kind: input, shape index: {}]
  %s7 = inlined_call_operand.vmem [shape: f32[6,1,15], index: 7, kind: input, shape index: {}]
  %s8 = inlined_call_operand.hbm [shape: f32[8,10], index: 8, kind: output, shape index: {0}]
  %s9 = inlined_call_operand.hbm [shape: f32[8,5], index: 9, kind: output, shape index: {1}]
  %10 = xla_tuple %s8, %s9
  %s11 = sld [smem:[#allocation0]]
  $region62: #{_nbeats_forward_impl.1} parent=0
    _
  %s13 = ssub.s32 1, %s11
  %s14 = scalar_select 0, %s13, %s11
  $region1: #{_nbeats_forward_impl.1} parent=0
    #allocation2 [shape = 'u8[786432]{0}', space=vmem, size = 0xc0000, scoped, tag = 'input window, operand 2, single buffered']
    #allocation3 [shape = 's32[1]{0}', space=sflag, size = 0x4, scoped, tag = 'scoped memory for _nbeats_forward_impl.1']
    #allocation4 [shape = 's32[1]{0}', space=sflag, size = 0x4, scoped, tag = 'scoped memory for _nbeats_forward_impl.1']
    #allocation5 [shape = 'u8[786432]{0}', space=vmem, size = 0xc0000, scoped, tag = 'input window, operand 3, single buffered']
    #allocation6 [shape = 's32[1]{0}', space=sflag, size = 0x4, scoped, tag = 'scoped memory for _nbeats_forward_impl.1']
    #allocation7 [shape = 'u8[786432]{0}', space=vmem, size = 0xc0000, scoped, tag = 'input window, operand 4, single buffered']
    #allocation8 [shape = 'u8[4096]{0}', space=vmem, size = 0x1000, scoped, tag = 'output window, operand 0, single buffered']
    #allocation9 [shape = 'u8[4096]{0}', space=vmem, size = 0x1000, scoped, tag = 'output window, operand 1, single buffered']
    #allocation10 [shape = 's32[1]{0}', space=sflag, size = 0x4, scoped, tag = 'scoped memory for _nbeats_forward_impl.1']
    %15 = vsyncpa [#allocation3], 0
    %16 = vsyncpa [#allocation6], 0
    %17 = vsyncpa [#allocation4], 0
    %18 = vsyncpa [#allocation10], 0
    // Predicated region
    $region2: #{_nbeats_forward_impl.1} parent=1 // pred_check
      _
    $region3: #{_nbeats_forward_impl.1} parent=1 // pred_check_branch
      %20 = sbr.rel (0) target = $region5
    $region4: #{_nbeats_forward_impl.1} parent=1 // pred_region
      _
    $region5: #{_nbeats_forward_impl.1} parent=1 // pred_fallthru
      _
    // Predicated region
    $region6: #{_nbeats_forward_impl.1} parent=1 // pred_check
      _
    $region7: #{_nbeats_forward_impl.1} parent=1 // pred_check_branch
      %22 = sbr.rel (0) target = $region9
    $region8: #{_nbeats_forward_impl.1} parent=1 // pred_region
      _
    $region9: #{_nbeats_forward_impl.1} parent=1 // pred_fallthru
      _
    // Predicated region
    $region10: #{_nbeats_forward_impl.1} parent=1 // pred_check
      _
    $region11: #{_nbeats_forward_impl.1} parent=1 // pred_check_branch
      %24 = sbr.rel (0) target = $region13
    $region12: #{_nbeats_forward_impl.1} parent=1 // pred_region
      %26 = vsyncadd [#allocation3], 0
      %s27 = sshll.u32 %s2, 4
      %s28 = int_to_ptr.hbm [resolvable:$true] %s27
      %s29 = sshll.u32 [#allocation2], 4
      %s30 = int_to_ptr.vmem [resolvable:$true] %s29
      %35 = dma.hbm_to_vmem [thread:$0]  %s28, 24576, %s30, [#allocation3], 128, 128, 8
    $region13: #{_nbeats_forward_impl.1} parent=1 // pred_fallthru
      _
    // Predicated region
    $region14: #{_nbeats_forward_impl.1} parent=1 // pred_check
      _
    $region15: #{_nbeats_forward_impl.1} parent=1 // pred_check_branch
      %37 = sbr.rel (0) target = $region17
    $region16: #{_nbeats_forward_impl.1} parent=1 // pred_region
      %39 = vsyncadd [#allocation6], 0
      %s40 = sshll.u32 %s3, 4
      %s41 = int_to_ptr.hbm [resolvable:$true] %s40
      %s42 = sshll.u32 [#allocation5], 4
      %s43 = int_to_ptr.vmem [resolvable:$true] %s42
      %48 = dma.hbm_to_vmem [thread:$0]  %s41, 24576, %s43, [#allocation6], 128, 128, 8
    $region17: #{_nbeats_forward_impl.1} parent=1 // pred_fallthru
      _
    // Predicated region
    $region18: #{_nbeats_forward_impl.1} parent=1 // pred_check
      _
    $region19: #{_nbeats_forward_impl.1} parent=1 // pred_check_branch
      %50 = sbr.rel (0) target = $region21
    $region20: #{_nbeats_forward_impl.1} parent=1 // pred_region
      %52 = vsyncadd [#allocation6], 0
      %s53 = sshll.u32 %s4, 4
      %s54 = int_to_ptr.hbm [resolvable:$true] %s53
      %s55 = sshll.u32 [#allocation7], 4
      %s56 = int_to_ptr.vmem [resolvable:$true] %s55
      %61 = dma.hbm_to_vmem [thread:$0]  %s54, 24576, %s56, [#allocation6], 128, 128, 8
    $region21: #{_nbeats_forward_impl.1} parent=1 // pred_fallthru
      _
    // Predicated region
    $region22: #{_nbeats_forward_impl.1} parent=1 // pred_check
      _
    $region23: #{_nbeats_forward_impl.1} parent=1 // pred_check_branch
      %63 = sbr.rel (0) target = $region25
    $region24: #{_nbeats_forward_impl.1} parent=1 // pred_region
      _
    $region25: #{_nbeats_forward_impl.1} parent=1 // pred_fallthru
      _
    // Predicated region
    $region26: #{_nbeats_forward_impl.1} parent=1 // pred_check
      _
    $region27: #{_nbeats_forward_impl.1} parent=1 // pred_check_branch
      %65 = sbr.rel (0) target = $region29
    $region28: #{_nbeats_forward_impl.1} parent=1 // pred_region
      _
    $region29: #{_nbeats_forward_impl.1} parent=1 // pred_fallthru
      _
    // Predicated region
    $region30: #{_nbeats_forward_impl.1} parent=1 // pred_check
      _
    $region31: #{_nbeats_forward_impl.1} parent=1 // pred_check_branch
      %67 = sbr.rel (0) target = $region33
    $region32: #{_nbeats_forward_impl.1} parent=1 // pred_region
      _
    $region33: #{_nbeats_forward_impl.1} parent=1 // pred_fallthru
      _
    // Predicated region
    $region34: #{_nbeats_forward_impl.1} parent=1 // pred_check
      _
    $region35: #{_nbeats_forward_impl.1} parent=1 // pred_check_branch
      %69 = sbr.rel (0) target = $region37
    $region36: #{_nbeats_forward_impl.1} parent=1 // pred_region
      %71 = dma.done [#allocation3], 24576
    $region37: #{_nbeats_forward_impl.1} parent=1 // pred_fallthru
      _
    // Predicated region
    $region38: #{_nbeats_forward_impl.1} parent=1 // pred_check
      _
    $region39: #{_nbeats_forward_impl.1} parent=1 // pred_check_branch
      %73 = sbr.rel (0) target = $region41
    $region40: #{_nbeats_forward_impl.1} parent=1 // pred_region
      %75 = dma.done [#allocation6], 24576
    $region41: #{_nbeats_forward_impl.1} parent=1 // pred_fallthru
      _
    // Predicated region
    $region42: #{_nbeats_forward_impl.1} parent=1 // pred_check
      _
    $region43: #{_nbeats_forward_impl.1} parent=1 // pred_check_branch
      %77 = sbr.rel (0) target = $region45
    $region44: #{_nbeats_forward_impl.1} parent=1 // pred_region
      %79 = dma.done [#allocation6], 24576
    $region45: #{_nbeats_forward_impl.1} parent=1 // pred_fallthru
      _
    %v80 = vld [vmem:[%s0] sm:$0xff]
    %v81 = vld [vmem:[%s5] sm:$0xff]
    %v82 = vld [vmem:[%s1] sm:$0xff]
    %v83 = vld [vmem:[%s1 + $0x8] sm:$0xff]
    %v84 = vld [vmem:[%s1 + $0x10] sm:$0x3]
    %v85 = vld [vmem:[%s1 + $0x18] sm:$0x3]
    %v87 = vperm.slane %v81, 0
    %v88 = vperm.slane %v81, 4
    %v91 = vperm.slane %v87, 0
    %v92 = vperm.slane %v88, 0
    %vm93 = vcmask 80896
    %v95 = vsel %vm93, %v80, 0
    %vm97 = vcmask 1041408
    %v99 = vsel %vm97, %v84, 0
    %v102 = vsel %vm97, %v85, 0
    %104 = vmatpush.msra.mxu0 0.0
    %105 = vmatpush.msra.mxu0 0.0
    %106 = vmatpush.msra.mxu0 0.0
    %107 = vmatpush.msra.mxu0 0.0
    %108 = vmatpush.msra.mxu0 0.0
    %109 = vmatpush.msra.mxu0 0.0
    %110 = vmatpush.msra.mxu0 0.0
    %111 = vmatpush.msra.mxu0 0.0
    %112 = vmatpush.msra.mxu0 0.0
    %113 = vmatpush.msra.mxu0 0.0
    %114 = vmatpush.msra.mxu0 0.0
    %115 = vmatpush.msra.mxu0 0.0
    %116 = vmatpush.msra.mxu0 0.0
    %117 = vmatpush.msra.mxu0 0.0
    %118 = vmatpush.msra.mxu0 %v99
    %119 = vmatpush.msra.mxu0 %v82
    %120 = vmatmul.f32.gmra.mxu0 %v95
    %v121 = vpop.f32.mrf.mxu0
    %v122 = vadd.f32 %v91, %v121
    %123 = vdwg.mxu0
    %124 = vmatpush.msra.mxu0 0.0
    %125 = vmatpush.msra.mxu0 0.0
    %126 = vmatpush.msra.mxu0 0.0
    %127 = vmatpush.msra.mxu0 0.0
    %128 = vmatpush.msra.mxu0 0.0
    %129 = vmatpush.msra.mxu0 0.0
    %130 = vmatpush.msra.mxu0 0.0
    %131 = vmatpush.msra.mxu0 0.0
    %132 = vmatpush.msra.mxu0 0.0
    %133 = vmatpush.msra.mxu0 0.0
    %134 = vmatpush.msra.mxu0 0.0
    %135 = vmatpush.msra.mxu0 0.0
    %136 = vmatpush.msra.mxu0 0.0
    %137 = vmatpush.msra.mxu0 0.0
    %138 = vmatpush.msra.mxu0 %v102
    %139 = vmatpush.msra.mxu0 %v83
    %140 = vmatmul.f32.gmra.mxu0 %v95
    %v141 = vpop.f32.mrf.mxu0
    %v142 = vadd.f32 %v92, %v141
    %143 = vdwg.mxu0
    %v144 = vmax.f32 %v122, 0.0
    %v145 = vmax.f32 %v142, 0.0
    %v146 = vpack.c.bf16 %v144, %v144
    %v147 = vpack.c.bf16 %v145, %v145
    %v148 = vld [vmem:[#allocation2] sm:$0xff]
    %v149 = vld [vmem:[#allocation2 + $0x8] sm:$0xff]
    %v150 = vld [vmem:[#allocation2 + $0x10] sm:$0xff]
    %v151 = vld [vmem:[#allocation2 + $0x18] sm:$0xff]
    %v152 = vld [vmem:[#allocation2 + $0x20] sm:$0xff]
    %v153 = vld [vmem:[#allocation2 + $0x28] sm:$0xff]
    %v154 = vld [vmem:[#allocation2 + $0x30] sm:$0xff]
    %v155 = vld [vmem:[#allocation2 + $0x38] sm:$0xff]
    %v156 = vld [vmem:[#allocation2 + $0x40] sm:$0xff]
    %v157 = vld [vmem:[#allocation2 + $0x48] sm:$0xff]
    %v158 = vld [vmem:[#allocation2 + $0x50] sm:$0xff]
    %v159 = vld [vmem:[#allocation2 + $0x58] sm:$0xff]
    %v160 = vld [vmem:[#allocation2 + $0x60] sm:$0xff]
    %v161 = vld [vmem:[#allocation2 + $0x68] sm:$0xff]
    %v162 = vld [vmem:[#allocation2 + $0x70] sm:$0xff]
    %v163 = vld [vmem:[#allocation2 + $0x78] sm:$0xff]
    %v164 = vld [vmem:[#allocation2 + $0x80] sm:$0xff]
    %v165 = vld [vmem:[#allocation2 + $0x88] sm:$0xff]
    %v166 = vld [vmem:[#allocation2 + $0x90] sm:$0xff]
    %v167 = vld [vmem:[#allocation2 + $0x98] sm:$0xff]
    %v168 = vld [vmem:[#allocation2 + $0xa0] sm:$0xff]
    %v169 = vld [vmem:[#allocation2 + $0xa8] sm:$0xff]
    %v170 = vld [vmem:[#allocation2 + $0xb0] sm:$0xff]
    %v171 = vld [vmem:[#allocation2 + $0xb8] sm:$0xff]
    %v172 = vld [vmem:[#allocation2 + $0xc0] sm:$0xff]
    %v173 = vld [vmem:[#allocation2 + $0xc8] sm:$0xff]
    %v174 = vld [vmem:[#allocation2 + $0xd0] sm:$0xff]
    %v175 = vld [vmem:[#allocation2 + $0xd8] sm:$0xff]
    %v176 = vld [vmem:[#allocation2 + $0xe0] sm:$0xff]
    %v177 = vld [vmem:[#allocation2 + $0xe8] sm:$0xff]
    %v178 = vld [vmem:[#allocation2 + $0xf0] sm:$0xff]
    %v179 = vld [vmem:[#allocation2 + $0xf8] sm:$0xff]
    %v180 = vperm.slane %v81, 1
    %v181 = vperm.slane %v81, 5
    %v184 = vperm.slane %v180, 1
    %v185 = vperm.slane %v181, 1
    %v218 = vunpack.c.l.b16 %v148
    %v219 = vunpack.c.h.b16 %v148
    %v220 = vunpack.c.l.b16 %v149
    %v221 = vunpack.c.h.b16 %v149
    %v222 = vunpack.c.l.b16 %v150
    %v223 = vunpack.c.h.b16 %v150
    %v224 = vunpack.c.l.b16 %v151
    %v225 = vunpack.c.h.b16 %v151
    %v226 = vunpack.c.l.b16 %v152
    %v227 = vunpack.c.h.b16 %v152
    %v228 = vunpack.c.l.b16 %v153
    %v229 = vunpack.c.h.b16 %v153
    %v230 = vunpack.c.l.b16 %v154
    %v231 = vunpack.c.h.b16 %v154
    %v232 = vunpack.c.l.b16 %v155
    %v233 = vunpack.c.h.b16 %v155
    %v234 = vunpack.c.l.b16 %v156
    %v235 = vunpack.c.h.b16 %v156
    %v236 = vunpack.c.l.b16 %v157
    %v237 = vunpack.c.h.b16 %v157
    %v238 = vunpack.c.l.b16 %v158
    %v239 = vunpack.c.h.b16 %v158
    %v240 = vunpack.c.l.b16 %v159
    %v241 = vunpack.c.h.b16 %v159
    %v242 = vunpack.c.l.b16 %v160
    %v243 = vunpack.c.h.b16 %v160
    %v244 = vunpack.c.l.b16 %v161
    %v245 = vunpack.c.h.b16 %v161
    %v246 = vunpack.c.l.b16 %v162
    %v247 = vunpack.c.h.b16 %v162
    %v248 = vunpack.c.l.b16 %v163
    %v249 = vunpack.c.h.b16 %v163
    %v250 = vunpack.c.l.b16 %v164
    %v251 = vunpack.c.h.b16 %v164
    %v252 = vunpack.c.l.b16 %v165
    %v253 = vunpack.c.h.b16 %v165
    %v254 = vunpack.c.l.b16 %v166
    %v255 = vunpack.c.h.b16 %v166
    %v256 = vunpack.c.l.b16 %v167
    %v257 = vunpack.c.h.b16 %v167
    %v258 = vunpack.c.l.b16 %v168
    %v259 = vunpack.c.h.b16 %v168
    %v260 = vunpack.c.l.b16 %v169
    %v261 = vunpack.c.h.b16 %v169
    %v262 = vunpack.c.l.b16 %v170
    %v263 = vunpack.c.h.b16 %v170
    %v264 = vunpack.c.l.b16 %v171
    %v265 = vunpack.c.h.b16 %v171
    %v266 = vunpack.c.l.b16 %v172
    %v267 = vunpack.c.h.b16 %v172
    %v268 = vunpack.c.l.b16 %v173
    %v269 = vunpack.c.h.b16 %v173
    %v270 = vunpack.c.l.b16 %v174
    %v271 = vunpack.c.h.b16 %v174
    %v272 = vunpack.c.l.b16 %v175
    %v273 = vunpack.c.h.b16 %v175
    %v274 = vunpack.c.l.b16 %v176
    %v275 = vunpack.c.h.b16 %v176
    %v276 = vunpack.c.l.b16 %v177
    %v277 = vunpack.c.h.b16 %v177
    %v278 = vunpack.c.l.b16 %v178
    %v279 = vunpack.c.h.b16 %v178
    %v280 = vunpack.c.l.b16 %v179
    %v281 = vunpack.c.h.b16 %v179
    %v282 = vpack.c.b16 %v220, %v218
    %v283 = vpack.c.b16 %v221, %v219
    %v284 = vpack.c.b16 %v224, %v222
    %v285 = vpack.c.b16 %v225, %v223
    %v286 = vpack.c.b16 %v228, %v226
    %v287 = vpack.c.b16 %v229, %v227
    %v288 = vpack.c.b16 %v232, %v230
    %v289 = vpack.c.b16 %v233, %v231
    %v290 = vpack.c.b16 %v236, %v234
    %v291 = vpack.c.b16 %v237, %v235
    %v292 = vpack.c.b16 %v240, %v238
    %v293 = vpack.c.b16 %v241, %v239
    %v294 = vpack.c.b16 %v244, %v242
    %v295 = vpack.c.b16 %v245, %v243
    %v296 = vpack.c.b16 %v248, %v246
    %v297 = vpack.c.b16 %v249, %v247
    %v298 = vpack.c.b16 %v252, %v250
    %v299 = vpack.c.b16 %v253, %v251
    %v300 = vpack.c.b16 %v256, %v254
    %v301 = vpack.c.b16 %v257, %v255
    %v302 = vpack.c.b16 %v260, %v258
    %v303 = vpack.c.b16 %v261, %v259
    %v304 = vpack.c.b16 %v264, %v262
    %v305 = vpack.c.b16 %v265, %v263
    %v306 = vpack.c.b16 %v268, %v266
    %v307 = vpack.c.b16 %v269, %v267
    %v308 = vpack.c.b16 %v272, %v270
    %v309 = vpack.c.b16 %v273, %v271
    %v310 = vpack.c.b16 %v276, %v274
    %v311 = vpack.c.b16 %v277, %v275
    %v312 = vpack.c.b16 %v280, %v278
    %v313 = vpack.c.b16 %v281, %v279
    %346 = vmatpush.bf16.msra.mxu0 %v296
    %347 = vmatpush.bf16.msra.mxu0 %v294
    %348 = vmatpush.bf16.msra.mxu0 %v292
    %349 = vmatpush.bf16.msra.mxu0 %v290
    %350 = vmatpush.bf16.msra.mxu0 %v288
    %351 = vmatpush.bf16.msra.mxu0 %v286
    %352 = vmatpush.bf16.msra.mxu0 %v284
    %353 = vmatpush.bf16.msra.mxu0 %v282
    %354 = vmatmul.bf16.gmra.mxu0 %v146
    %v355 = vpop.f32.mrf.mxu0
    %v356 = vadd.f32 %v184, %v355
    %v357 = vpop.f32.mrf.mxu0
    %358 = vdwg.mxu0
    %359 = vmatpush.bf16.msra.mxu0 %v312
    %360 = vmatpush.bf16.msra.mxu0 %v310
    %361 = vmatpush.bf16.msra.mxu0 %v308
    %362 = vmatpush.bf16.msra.mxu0 %v306
    %363 = vmatpush.bf16.msra.mxu0 %v304
    %364 = vmatpush.bf16.msra.mxu0 %v302
    %365 = vmatpush.bf16.msra.mxu0 %v300
    %366 = vmatpush.bf16.msra.mxu0 %v298
    %367 = vmatmul.bf16.gmra.mxu0 %v147
    %v368 = vpop.f32.mrf.mxu0
    %v369 = vadd.f32 %v356, %v368
    %v370 = vpop.f32.mrf.mxu0
    %371 = vdwg.mxu0
    %372 = vmatpush.bf16.msra.mxu0 %v297
    %373 = vmatpush.bf16.msra.mxu0 %v295
    %374 = vmatpush.bf16.msra.mxu0 %v293
    %375 = vmatpush.bf16.msra.mxu0 %v291
    %376 = vmatpush.bf16.msra.mxu0 %v289
    %377 = vmatpush.bf16.msra.mxu0 %v287
    %378 = vmatpush.bf16.msra.mxu0 %v285
    %379 = vmatpush.bf16.msra.mxu0 %v283
    %380 = vmatmul.bf16.gmra.mxu0 %v146
    %v381 = vpop.f32.mrf.mxu0
    %v382 = vadd.f32 %v185, %v381
    %v383 = vpop.f32.mrf.mxu0
    %384 = vdwg.mxu0
    %385 = vmatpush.bf16.msra.mxu0 %v313
    %386 = vmatpush.bf16.msra.mxu0 %v311
    %387 = vmatpush.bf16.msra.mxu0 %v309
    %388 = vmatpush.bf16.msra.mxu0 %v307
    %389 = vmatpush.bf16.msra.mxu0 %v305
    %390 = vmatpush.bf16.msra.mxu0 %v303
    %391 = vmatpush.bf16.msra.mxu0 %v301
    %392 = vmatpush.bf16.msra.mxu0 %v299
    %393 = vmatmul.bf16.gmra.mxu0 %v147
    %v394 = vpop.f32.mrf.mxu0
    %v395 = vadd.f32 %v382, %v394
    %v396 = vpop.f32.mrf.mxu0
    %397 = vdwg.mxu0
    %v398 = vmax.f32 %v369, 0.0
    %v399 = vmax.f32 %v395, 0.0
    %v400 = vpack.c.bf16 %v398, %v398
    %v401 = vpack.c.bf16 %v399, %v399
    %v402 = vld [vmem:[#allocation5] sm:$0xff]
    %v403 = vld [vmem:[#allocation5 + $0x8] sm:$0xff]
    %v404 = vld [vmem:[#allocation5 + $0x10] sm:$0xff]
    %v405 = vld [vmem:[#allocation5 + $0x18] sm:$0xff]
    %v406 = vld [vmem:[#allocation5 + $0x20] sm:$0xff]
    %v407 = vld [vmem:[#allocation5 + $0x28] sm:$0xff]
    %v408 = vld [vmem:[#allocation5 + $0x30] sm:$0xff]
    %v409 = vld [vmem:[#allocation5 + $0x38] sm:$0xff]
    %v410 = vld [vmem:[#allocation5 + $0x40] sm:$0xff]
    %v411 = vld [vmem:[#allocation5 + $0x48] sm:$0xff]
    %v412 = vld [vmem:[#allocation5 + $0x50] sm:$0xff]
    %v413 = vld [vmem:[#allocation5 + $0x58] sm:$0xff]
    %v414 = vld [vmem:[#allocation5 + $0x60] sm:$0xff]
    %v415 = vld [vmem:[#allocation5 + $0x68] sm:$0xff]
    %v416 = vld [vmem:[#allocation5 + $0x70] sm:$0xff]
    %v417 = vld [vmem:[#allocation5 + $0x78] sm:$0xff]
    %v418 = vld [vmem:[#allocation5 + $0x80] sm:$0xff]
    %v419 = vld [vmem:[#allocation5 + $0x88] sm:$0xff]
    %v420 = vld [vmem:[#allocation5 + $0x90] sm:$0xff]
    %v421 = vld [vmem:[#allocation5 + $0x98] sm:$0xff]
    %v422 = vld [vmem:[#allocation5 + $0xa0] sm:$0xff]
    %v423 = vld [vmem:[#allocation5 + $0xa8] sm:$0xff]
    %v424 = vld [vmem:[#allocation5 + $0xb0] sm:$0xff]
    %v425 = vld [vmem:[#allocation5 + $0xb8] sm:$0xff]
    %v426 = vld [vmem:[#allocation5 + $0xc0] sm:$0xff]
    %v427 = vld [vmem:[#allocation5 + $0xc8] sm:$0xff]
    %v428 = vld [vmem:[#allocation5 + $0xd0] sm:$0xff]
    %v429 = vld [vmem:[#allocation5 + $0xd8] sm:$0xff]
    %v430 = vld [vmem:[#allocation5 + $0xe0] sm:$0xff]
    %v431 = vld [vmem:[#allocation5 + $0xe8] sm:$0xff]
    %v432 = vld [vmem:[#allocation5 + $0xf0] sm:$0xff]
    %v433 = vld [vmem:[#allocation5 + $0xf8] sm:$0xff]
    %v434 = vperm.slane %v81, 2
    %v435 = vperm.slane %v81, 6
    %v438 = vperm.slane %v434, 2
    %v439 = vperm.slane %v435, 2
    %v472 = vunpack.c.l.b16 %v402
    %v473 = vunpack.c.h.b16 %v402
    %v474 = vunpack.c.l.b16 %v403
    %v475 = vunpack.c.h.b16 %v403
    %v476 = vunpack.c.l.b16 %v404
    %v477 = vunpack.c.h.b16 %v404
    %v478 = vunpack.c.l.b16 %v405
    %v479 = vunpack.c.h.b16 %v405
    %v480 = vunpack.c.l.b16 %v406
    %v481 = vunpack.c.h.b16 %v406
    %v482 = vunpack.c.l.b16 %v407
    %v483 = vunpack.c.h.b16 %v407
    %v484 = vunpack.c.l.b16 %v408
    %v485 = vunpack.c.h.b16 %v408
    %v486 = vunpack.c.l.b16 %v409
    %v487 = vunpack.c.h.b16 %v409
    %v488 = vunpack.c.l.b16 %v410
    %v489 = vunpack.c.h.b16 %v410
    %v490 = vunpack.c.l.b16 %v411
    %v491 = vunpack.c.h.b16 %v411
    %v492 = vunpack.c.l.b16 %v412
    %v493 = vunpack.c.h.b16 %v412
    %v494 = vunpack.c.l.b16 %v413
    %v495 = vunpack.c.h.b16 %v413
    %v496 = vunpack.c.l.b16 %v414
    %v497 = vunpack.c.h.b16 %v414
    %v498 = vunpack.c.l.b16 %v415
    %v499 = vunpack.c.h.b16 %v415
    %v500 = vunpack.c.l.b16 %v416
    %v501 = vunpack.c.h.b16 %v416
    %v502 = vunpack.c.l.b16 %v417
    %v503 = vunpack.c.h.b16 %v417
    %v504 = vunpack.c.l.b16 %v418
    %v505 = vunpack.c.h.b16 %v418
    %v506 = vunpack.c.l.b16 %v419
    %v507 = vunpack.c.h.b16 %v419
    %v508 = vunpack.c.l.b16 %v420
    %v509 = vunpack.c.h.b16 %v420
    %v510 = vunpack.c.l.b16 %v421
    %v511 = vunpack.c.h.b16 %v421
    %v512 = vunpack.c.l.b16 %v422
    %v513 = vunpack.c.h.b16 %v422
    %v514 = vunpack.c.l.b16 %v423
    %v515 = vunpack.c.h.b16 %v423
    %v516 = vunpack.c.l.b16 %v424
    %v517 = vunpack.c.h.b16 %v424
    %v518 = vunpack.c.l.b16 %v425
    %v519 = vunpack.c.h.b16 %v425
    %v520 = vunpack.c.l.b16 %v426
    %v521 = vunpack.c.h.b16 %v426
    %v522 = vunpack.c.l.b16 %v427
    %v523 = vunpack.c.h.b16 %v427
    %v524 = vunpack.c.l.b16 %v428
    %v525 = vunpack.c.h.b16 %v428
    %v526 = vunpack.c.l.b16 %v429
    %v527 = vunpack.c.h.b16 %v429
    %v528 = vunpack.c.l.b16 %v430
    %v529 = vunpack.c.h.b16 %v430
    %v530 = vunpack.c.l.b16 %v431
    %v531 = vunpack.c.h.b16 %v431
    %v532 = vunpack.c.l.b16 %v432
    %v533 = vunpack.c.h.b16 %v432
    %v534 = vunpack.c.l.b16 %v433
    %v535 = vunpack.c.h.b16 %v433
    %v536 = vpack.c.b16 %v474, %v472
    %v537 = vpack.c.b16 %v475, %v473
    %v538 = vpack.c.b16 %v478, %v476
    %v539 = vpack.c.b16 %v479, %v477
    %v540 = vpack.c.b16 %v482, %v480
    %v541 = vpack.c.b16 %v483, %v481
    %v542 = vpack.c.b16 %v486, %v484
    %v543 = vpack.c.b16 %v487, %v485
    %v544 = vpack.c.b16 %v490, %v488
    %v545 = vpack.c.b16 %v491, %v489
    %v546 = vpack.c.b16 %v494, %v492
    %v547 = vpack.c.b16 %v495, %v493
    %v548 = vpack.c.b16 %v498, %v496
    %v549 = vpack.c.b16 %v499, %v497
    %v550 = vpack.c.b16 %v502, %v500
    %v551 = vpack.c.b16 %v503, %v501
    %v552 = vpack.c.b16 %v506, %v504
    %v553 = vpack.c.b16 %v507, %v505
    %v554 = vpack.c.b16 %v510, %v508
    %v555 = vpack.c.b16 %v511, %v509
    %v556 = vpack.c.b16 %v514, %v512
    %v557 = vpack.c.b16 %v515, %v513
    %v558 = vpack.c.b16 %v518, %v516
    %v559 = vpack.c.b16 %v519, %v517
    %v560 = vpack.c.b16 %v522, %v520
    %v561 = vpack.c.b16 %v523, %v521
    %v562 = vpack.c.b16 %v526, %v524
    %v563 = vpack.c.b16 %v527, %v525
    %v564 = vpack.c.b16 %v530, %v528
    %v565 = vpack.c.b16 %v531, %v529
    %v566 = vpack.c.b16 %v534, %v532
    %v567 = vpack.c.b16 %v535, %v533
    %600 = vmatpush.bf16.msra.mxu0 %v550
    %601 = vmatpush.bf16.msra.mxu0 %v548
    %602 = vmatpush.bf16.msra.mxu0 %v546
    %603 = vmatpush.bf16.msra.mxu0 %v544
    %604 = vmatpush.bf16.msra.mxu0 %v542
    %605 = vmatpush.bf16.msra.mxu0 %v540
    %606 = vmatpush.bf16.msra.mxu0 %v538
    %607 = vmatpush.bf16.msra.mxu0 %v536
    %608 = vmatmul.bf16.gmra.mxu0 %v400
    %v609 = vpop.f32.mrf.mxu0
    %v610 = vadd.f32 %v438, %v609
    %v611 = vpop.f32.mrf.mxu0
    %612 = vdwg.mxu0
    %613 = vmatpush.bf16.msra.mxu0 %v566
    %614 = vmatpush.bf16.msra.mxu0 %v564
    %615 = vmatpush.bf16.msra.mxu0 %v562
    %616 = vmatpush.bf16.msra.mxu0 %v560
    %617 = vmatpush.bf16.msra.mxu0 %v558
    %618 = vmatpush.bf16.msra.mxu0 %v556
    %619 = vmatpush.bf16.msra.mxu0 %v554
    %620 = vmatpush.bf16.msra.mxu0 %v552
    %621 = vmatmul.bf16.gmra.mxu0 %v401
    %v622 = vpop.f32.mrf.mxu0
    %v623 = vadd.f32 %v610, %v622
    %v624 = vpop.f32.mrf.mxu0
    %625 = vdwg.mxu0
    %626 = vmatpush.bf16.msra.mxu0 %v551
    %627 = vmatpush.bf16.msra.mxu0 %v549
    %628 = vmatpush.bf16.msra.mxu0 %v547
    %629 = vmatpush.bf16.msra.mxu0 %v545
    %630 = vmatpush.bf16.msra.mxu0 %v543
    %631 = vmatpush.bf16.msra.mxu0 %v541
    %632 = vmatpush.bf16.msra.mxu0 %v539
    %633 = vmatpush.bf16.msra.mxu0 %v537
    %634 = vmatmul.bf16.gmra.mxu0 %v400
    %v635 = vpop.f32.mrf.mxu0
    %v636 = vadd.f32 %v439, %v635
    %v637 = vpop.f32.mrf.mxu0
    %638 = vdwg.mxu0
    %639 = vmatpush.bf16.msra.mxu0 %v567
    %640 = vmatpush.bf16.msra.mxu0 %v565
    %641 = vmatpush.bf16.msra.mxu0 %v563
    %642 = vmatpush.bf16.msra.mxu0 %v561
    %643 = vmatpush.bf16.msra.mxu0 %v559
    %644 = vmatpush.bf16.msra.mxu0 %v557
    %645 = vmatpush.bf16.msra.mxu0 %v555
    %646 = vmatpush.bf16.msra.mxu0 %v553
    %647 = vmatmul.bf16.gmra.mxu0 %v401
    %v648 = vpop.f32.mrf.mxu0
    %v649 = vadd.f32 %v636, %v648
    %v650 = vpop.f32.mrf.mxu0
    %651 = vdwg.mxu0
    %v652 = vmax.f32 %v623, 0.0
    %v653 = vmax.f32 %v649, 0.0
    %v654 = vpack.c.bf16 %v652, %v652
    %v655 = vpack.c.bf16 %v653, %v653
    %v656 = vld [vmem:[#allocation7] sm:$0xff]
    %v657 = vld [vmem:[#allocation7 + $0x8] sm:$0xff]
    %v658 = vld [vmem:[#allocation7 + $0x10] sm:$0xff]
    %v659 = vld [vmem:[#allocation7 + $0x18] sm:$0xff]
    %v660 = vld [vmem:[#allocation7 + $0x20] sm:$0xff]
    %v661 = vld [vmem:[#allocation7 + $0x28] sm:$0xff]
    %v662 = vld [vmem:[#allocation7 + $0x30] sm:$0xff]
    %v663 = vld [vmem:[#allocation7 + $0x38] sm:$0xff]
    %v664 = vld [vmem:[#allocation7 + $0x40] sm:$0xff]
    %v665 = vld [vmem:[#allocation7 + $0x48] sm:$0xff]
    %v666 = vld [vmem:[#allocation7 + $0x50] sm:$0xff]
    %v667 = vld [vmem:[#allocation7 + $0x58] sm:$0xff]
    %v668 = vld [vmem:[#allocation7 + $0x60] sm:$0xff]
    %v669 = vld [vmem:[#allocation7 + $0x68] sm:$0xff]
    %v670 = vld [vmem:[#allocation7 + $0x70] sm:$0xff]
    %v671 = vld [vmem:[#allocation7 + $0x78] sm:$0xff]
    %v672 = vld [vmem:[#allocation7 + $0x80] sm:$0xff]
    %v673 = vld [vmem:[#allocation7 + $0x88] sm:$0xff]
    %v674 = vld [vmem:[#allocation7 + $0x90] sm:$0xff]
    %v675 = vld [vmem:[#allocation7 + $0x98] sm:$0xff]
    %v676 = vld [vmem:[#allocation7 + $0xa0] sm:$0xff]
    %v677 = vld [vmem:[#allocation7 + $0xa8] sm:$0xff]
    %v678 = vld [vmem:[#allocation7 + $0xb0] sm:$0xff]
    %v679 = vld [vmem:[#allocation7 + $0xb8] sm:$0xff]
    %v680 = vld [vmem:[#allocation7 + $0xc0] sm:$0xff]
    %v681 = vld [vmem:[#allocation7 + $0xc8] sm:$0xff]
    %v682 = vld [vmem:[#allocation7 + $0xd0] sm:$0xff]
    %v683 = vld [vmem:[#allocation7 + $0xd8] sm:$0xff]
    %v684 = vld [vmem:[#allocation7 + $0xe0] sm:$0xff]
    %v685 = vld [vmem:[#allocation7 + $0xe8] sm:$0xff]
    %v686 = vld [vmem:[#allocation7 + $0xf0] sm:$0xff]
    %v687 = vld [vmem:[#allocation7 + $0xf8] sm:$0xff]
    %v688 = vperm.slane %v81, 3
    %v689 = vperm.slane %v81, 7
    %v692 = vperm.slane %v688, 3
    %v693 = vperm.slane %v689, 3
    %v726 = vunpack.c.l.b16 %v656
    %v727 = vunpack.c.h.b16 %v656
    %v728 = vunpack.c.l.b16 %v657
    %v729 = vunpack.c.h.b16 %v657
    %v730 = vunpack.c.l.b16 %v658
    %v731 = vunpack.c.h.b16 %v658
    %v732 = vunpack.c.l.b16 %v659
    %v733 = vunpack.c.h.b16 %v659
    %v734 = vunpack.c.l.b16 %v660
    %v735 = vunpack.c.h.b16 %v660
    %v736 = vunpack.c.l.b16 %v661
    %v737 = vunpack.c.h.b16 %v661
    %v738 = vunpack.c.l.b16 %v662
    %v739 = vunpack.c.h.b16 %v662
    %v740 = vunpack.c.l.b16 %v663
    %v741 = vunpack.c.h.b16 %v663
    %v742 = vunpack.c.l.b16 %v664
    %v743 = vunpack.c.h.b16 %v664
    %v744 = vunpack.c.l.b16 %v665
    %v745 = vunpack.c.h.b16 %v665
    %v746 = vunpack.c.l.b16 %v666
    %v747 = vunpack.c.h.b16 %v666
    %v748 = vunpack.c.l.b16 %v667
    %v749 = vunpack.c.h.b16 %v667
    %v750 = vunpack.c.l.b16 %v668
    %v751 = vunpack.c.h.b16 %v668
    %v752 = vunpack.c.l.b16 %v669
    %v753 = vunpack.c.h.b16 %v669
    %v754 = vunpack.c.l.b16 %v670
    %v755 = vunpack.c.h.b16 %v670
    %v756 = vunpack.c.l.b16 %v671
    %v757 = vunpack.c.h.b16 %v671
    %v758 = vunpack.c.l.b16 %v672
    %v759 = vunpack.c.h.b16 %v672
    %v760 = vunpack.c.l.b16 %v673
    %v761 = vunpack.c.h.b16 %v673
    %v762 = vunpack.c.l.b16 %v674
    %v763 = vunpack.c.h.b16 %v674
    %v764 = vunpack.c.l.b16 %v675
    %v765 = vunpack.c.h.b16 %v675
    %v766 = vunpack.c.l.b16 %v676
    %v767 = vunpack.c.h.b16 %v676
    %v768 = vunpack.c.l.b16 %v677
    %v769 = vunpack.c.h.b16 %v677
    %v770 = vunpack.c.l.b16 %v678
    %v771 = vunpack.c.h.b16 %v678
    %v772 = vunpack.c.l.b16 %v679
    %v773 = vunpack.c.h.b16 %v679
    %v774 = vunpack.c.l.b16 %v680
    %v775 = vunpack.c.h.b16 %v680
    %v776 = vunpack.c.l.b16 %v681
    %v777 = vunpack.c.h.b16 %v681
    %v778 = vunpack.c.l.b16 %v682
    %v779 = vunpack.c.h.b16 %v682
    %v780 = vunpack.c.l.b16 %v683
    %v781 = vunpack.c.h.b16 %v683
    %v782 = vunpack.c.l.b16 %v684
    %v783 = vunpack.c.h.b16 %v684
    %v784 = vunpack.c.l.b16 %v685
    %v785 = vunpack.c.h.b16 %v685
    %v786 = vunpack.c.l.b16 %v686
    %v787 = vunpack.c.h.b16 %v686
    %v788 = vunpack.c.l.b16 %v687
    %v789 = vunpack.c.h.b16 %v687
    %v790 = vpack.c.b16 %v728, %v726
    %v791 = vpack.c.b16 %v729, %v727
    %v792 = vpack.c.b16 %v732, %v730
    %v793 = vpack.c.b16 %v733, %v731
    %v794 = vpack.c.b16 %v736, %v734
    %v795 = vpack.c.b16 %v737, %v735
    %v796 = vpack.c.b16 %v740, %v738
    %v797 = vpack.c.b16 %v741, %v739
    %v798 = vpack.c.b16 %v744, %v742
    %v799 = vpack.c.b16 %v745, %v743
    %v800 = vpack.c.b16 %v748, %v746
    %v801 = vpack.c.b16 %v749, %v747
    %v802 = vpack.c.b16 %v752, %v750
    %v803 = vpack.c.b16 %v753, %v751
    %v804 = vpack.c.b16 %v756, %v754
    %v805 = vpack.c.b16 %v757, %v755
    %v806 = vpack.c.b16 %v760, %v758
    %v807 = vpack.c.b16 %v761, %v759
    %v808 = vpack.c.b16 %v764, %v762
    %v809 = vpack.c.b16 %v765, %v763
    %v810 = vpack.c.b16 %v768, %v766
    %v811 = vpack.c.b16 %v769, %v767
    %v812 = vpack.c.b16 %v772, %v770
    %v813 = vpack.c.b16 %v773, %v771
    %v814 = vpack.c.b16 %v776, %v774
    %v815 = vpack.c.b16 %v777, %v775
    %v816 = vpack.c.b16 %v780, %v778
    %v817 = vpack.c.b16 %v781, %v779
    %v818 = vpack.c.b16 %v784, %v782
    %v819 = vpack.c.b16 %v785, %v783
    %v820 = vpack.c.b16 %v788, %v786
    %v821 = vpack.c.b16 %v789, %v787
    %854 = vmatpush.bf16.msra.mxu0 %v804
    %855 = vmatpush.bf16.msra.mxu0 %v802
    %856 = vmatpush.bf16.msra.mxu0 %v800
    %857 = vmatpush.bf16.msra.mxu0 %v798
    %858 = vmatpush.bf16.msra.mxu0 %v796
    %859 = vmatpush.bf16.msra.mxu0 %v794
    %860 = vmatpush.bf16.msra.mxu0 %v792
    %861 = vmatpush.bf16.msra.mxu0 %v790
    %862 = vmatmul.bf16.gmra.mxu0 %v654
    %v863 = vpop.f32.mrf.mxu0
    %v864 = vadd.f32 %v692, %v863
    %v865 = vpop.f32.mrf.mxu0
    %866 = vdwg.mxu0
    %867 = vmatpush.bf16.msra.mxu0 %v820
    %868 = vmatpush.bf16.msra.mxu0 %v818
    %869 = vmatpush.bf16.msra.mxu0 %v816
    %870 = vmatpush.bf16.msra.mxu0 %v814
    %871 = vmatpush.bf16.msra.mxu0 %v812
    %872 = vmatpush.bf16.msra.mxu0 %v810
    %873 = vmatpush.bf16.msra.mxu0 %v808
    %874 = vmatpush.bf16.msra.mxu0 %v806
    %875 = vmatmul.bf16.gmra.mxu0 %v655
    %v876 = vpop.f32.mrf.mxu0
    %v877 = vadd.f32 %v864, %v876
    %v878 = vpop.f32.mrf.mxu0
    %879 = vdwg.mxu0
    %880 = vmatpush.bf16.msra.mxu0 %v805
    %881 = vmatpush.bf16.msra.mxu0 %v803
    %882 = vmatpush.bf16.msra.mxu0 %v801
    %883 = vmatpush.bf16.msra.mxu0 %v799
    %884 = vmatpush.bf16.msra.mxu0 %v797
    %885 = vmatpush.bf16.msra.mxu0 %v795
    %886 = vmatpush.bf16.msra.mxu0 %v793
    %887 = vmatpush.bf16.msra.mxu0 %v791
    %888 = vmatmul.bf16.gmra.mxu0 %v654
    %v889 = vpop.f32.mrf.mxu0
    %v890 = vadd.f32 %v693, %v889
    %v891 = vpop.f32.mrf.mxu0
    %892 = vdwg.mxu0
    %893 = vmatpush.bf16.msra.mxu0 %v821
    %894 = vmatpush.bf16.msra.mxu0 %v819
    %895 = vmatpush.bf16.msra.mxu0 %v817
    %896 = vmatpush.bf16.msra.mxu0 %v815
    %897 = vmatpush.bf16.msra.mxu0 %v813
    %898 = vmatpush.bf16.msra.mxu0 %v811
    %899 = vmatpush.bf16.msra.mxu0 %v809
    %900 = vmatpush.bf16.msra.mxu0 %v807
    %901 = vmatmul.bf16.gmra.mxu0 %v655
    %v902 = vpop.f32.mrf.mxu0
    %v903 = vadd.f32 %v890, %v902
    %v904 = vpop.f32.mrf.mxu0
    %905 = vdwg.mxu0
    %v906 = vmax.f32 %v877, 0.0
    %v907 = vmax.f32 %v903, 0.0
    %v908 = vpack.c.bf16 %v906, %v906
    %v909 = vpack.c.bf16 %v907, %v907
    %v910 = vld [vmem:[%s6] sm:$0xf]
    %v911 = vld [vmem:[%s6 + $0x4] sm:$0xf]
    %v912 = vld [vmem:[%s6 + $0x8] sm:$0xf]
    %v913 = vld [vmem:[%s6 + $0xc] sm:$0xf]
    %v914 = vld [vmem:[%s6 + $0x10] sm:$0xf]
    %v915 = vld [vmem:[%s6 + $0x14] sm:$0xf]
    %v916 = vld [vmem:[%s6 + $0x18] sm:$0xf]
    %v917 = vld [vmem:[%s6 + $0x1c] sm:$0xf]
    %v918 = vld [vmem:[%s6 + $0x20] sm:$0xf]
    %v919 = vld [vmem:[%s6 + $0x24] sm:$0xf]
    %v920 = vld [vmem:[%s6 + $0x28] sm:$0xf]
    %v921 = vld [vmem:[%s6 + $0x2c] sm:$0xf]
    %v922 = vld [vmem:[%s6 + $0x30] sm:$0xf]
    %v923 = vld [vmem:[%s6 + $0x34] sm:$0xf]
    %v924 = vld [vmem:[%s6 + $0x38] sm:$0xf]
    %v925 = vld [vmem:[%s6 + $0x3c] sm:$0xf]
    %v926 = vld [vmem:[%s6 + $0x40] sm:$0xf]
    %v927 = vld [vmem:[%s6 + $0x44] sm:$0xf]
    %v928 = vld [vmem:[%s6 + $0x48] sm:$0xf]
    %v929 = vld [vmem:[%s6 + $0x4c] sm:$0xf]
    %v930 = vld [vmem:[%s6 + $0x50] sm:$0xf]
    %v931 = vld [vmem:[%s6 + $0x54] sm:$0xf]
    %v932 = vld [vmem:[%s6 + $0x58] sm:$0xf]
    %v933 = vld [vmem:[%s6 + $0x5c] sm:$0xf]
    %v934 = vld [vmem:[%s6 + $0x60] sm:$0xf]
    %v935 = vld [vmem:[%s6 + $0x64] sm:$0xf]
    %v936 = vld [vmem:[%s6 + $0x68] sm:$0xf]
    %v937 = vld [vmem:[%s6 + $0x6c] sm:$0xf]
    %v938 = vld [vmem:[%s6 + $0x70] sm:$0xf]
    %v939 = vld [vmem:[%s6 + $0x74] sm:$0xf]
    %v940 = vld [vmem:[%s6 + $0x78] sm:$0xf]
    %v941 = vld [vmem:[%s6 + $0x7c] sm:$0xf]
    %v942 = vld [vmem:[%s7] sm:$0x1]
    %v944 = vperm.slane %v942, 0
    %v978 = vunpack.c.l.b16 %v910
    %v979 = vunpack.c.l.b16 %v911
    %v980 = vunpack.c.l.b16 %v912
    %v981 = vunpack.c.l.b16 %v913
    %v982 = vunpack.c.l.b16 %v914
    %v983 = vunpack.c.l.b16 %v915
    %v984 = vunpack.c.l.b16 %v916
    %v985 = vunpack.c.l.b16 %v917
    %v986 = vunpack.c.l.b16 %v918
    %v987 = vunpack.c.l.b16 %v919
    %v988 = vunpack.c.l.b16 %v920
    %v989 = vunpack.c.l.b16 %v921
    %v990 = vunpack.c.l.b16 %v922
    %v991 = vunpack.c.l.b16 %v923
    %v992 = vunpack.c.l.b16 %v924
    %v993 = vunpack.c.l.b16 %v925
    %v994 = vunpack.c.l.b16 %v926
    %v995 = vunpack.c.l.b16 %v927
    %v996 = vunpack.c.l.b16 %v928
    %v997 = vunpack.c.l.b16 %v929
    %v998 = vunpack.c.l.b16 %v930
    %v999 = vunpack.c.l.b16 %v931
    %v1000 = vunpack.c.l.b16 %v932
    %v1001 = vunpack.c.l.b16 %v933
    %v1002 = vunpack.c.l.b16 %v934
    %v1003 = vunpack.c.l.b16 %v935
    %v1004 = vunpack.c.l.b16 %v936
    %v1005 = vunpack.c.l.b16 %v937
    %v1006 = vunpack.c.l.b16 %v938
    %v1007 = vunpack.c.l.b16 %v939
    %v1008 = vunpack.c.l.b16 %v940
    %v1009 = vunpack.c.l.b16 %v941
    %v1010 = vpack.c.b16 %v979, %v978
    %v1011 = vpack.c.b16 %v981, %v980
    %v1012 = vpack.c.b16 %v983, %v982
    %v1013 = vpack.c.b16 %v985, %v984
    %v1014 = vpack.c.b16 %v987, %v986
    %v1015 = vpack.c.b16 %v989, %v988
    %v1016 = vpack.c.b16 %v991, %v990
    %v1017 = vpack.c.b16 %v993, %v992
    %v1018 = vpack.c.b16 %v995, %v994
    %v1019 = vpack.c.b16 %v997, %v996
    %v1020 = vpack.c.b16 %v999, %v998
    %v1021 = vpack.c.b16 %v1001, %v1000
    %v1022 = vpack.c.b16 %v1003, %v1002
    %v1023 = vpack.c.b16 %v1005, %v1004
    %v1024 = vpack.c.b16 %v1007, %v1006
    %v1025 = vpack.c.b16 %v1009, %v1008
    %1042 = vmatpush.bf16.msra.mxu0 %v1017
    %1043 = vmatpush.bf16.msra.mxu0 %v1016
    %1044 = vmatpush.bf16.msra.mxu0 %v1015
    %1045 = vmatpush.bf16.msra.mxu0 %v1014
    %1046 = vmatpush.bf16.msra.mxu0 %v1013
    %1047 = vmatpush.bf16.msra.mxu0 %v1012
    %1048 = vmatpush.bf16.msra.mxu0 %v1011
    %1049 = vmatpush.bf16.msra.mxu0 %v1010
    %1050 = vmatmul.bf16.gmra.mxu0 %v908
    %v1051 = vpop.f32.mrf.mxu0
    %v1052 = vadd.f32 %v944, %v1051
    %v1053 = vpop.f32.mrf.mxu0
    %1054 = vdwg.mxu0
    %1055 = vmatpush.bf16.msra.mxu0 %v1025
    %1056 = vmatpush.bf16.msra.mxu0 %v1024
    %1057 = vmatpush.bf16.msra.mxu0 %v1023
    %1058 = vmatpush.bf16.msra.mxu0 %v1022
    %1059 = vmatpush.bf16.msra.mxu0 %v1021
    %1060 = vmatpush.bf16.msra.mxu0 %v1020
    %1061 = vmatpush.bf16.msra.mxu0 %v1019
    %1062 = vmatpush.bf16.msra.mxu0 %v1018
    %1063 = vmatmul.bf16.gmra.mxu0 %v909
    %v1064 = vpop.f32.mrf.mxu0
    %v1065 = vadd.f32 %v1052, %v1064
    %v1066 = vpop.f32.mrf.mxu0
    %1067 = vdwg.mxu0
    %v1068 = vsub.f32 %v80, %v1065
    %v1069 = vadd.f32 %v1065, 0.0
    %s1070 = scalar_lea.vmem %s5, 8
    %v1071 = vld [vmem:[%s1070] sm:$0xff]
    %s1072 = scalar_lea.vmem %s1, 32
    %v1073 = vld [vmem:[%s1072] sm:$0xff]
    %v1074 = vld [vmem:[%s1072 + $0x8] sm:$0xff]
    %v1075 = vld [vmem:[%s1072 + $0x10] sm:$0x3]
    %v1076 = vld [vmem:[%s1072 + $0x18] sm:$0x3]
    %v1078 = vperm.slane %v1071, 0
    %v1079 = vperm.slane %v1071, 4
    %v1082 = vperm.slane %v1078, 0
    %v1083 = vperm.slane %v1079, 0
    %v1085 = vsel %vm93, %v1068, 0
    %v1088 = vsel %vm97, %v1075, 0
    %v1091 = vsel %vm97, %v1076, 0
    %1093 = vmatpush.msra.mxu0 0.0
    %1094 = vmatpush.msra.mxu0 0.0
    %1095 = vmatpush.msra.mxu0 0.0
    %1096 = vmatpush.msra.mxu0 0.0
    %1097 = vmatpush.msra.mxu0 0.0
    %1098 = vmatpush.msra.mxu0 0.0
    %1099 = vmatpush.msra.mxu0 0.0
    %1100 = vmatpush.msra.mxu0 0.0
    %1101 = vmatpush.msra.mxu0 0.0
    %1102 = vmatpush.msra.mxu0 0.0
    %1103 = vmatpush.msra.mxu0 0.0
    %1104 = vmatpush.msra.mxu0 0.0
    %1105 = vmatpush.msra.mxu0 0.0
    %1106 = vmatpush.msra.mxu0 0.0
    %1107 = vmatpush.msra.mxu0 %v1088
    %1108 = vmatpush.msra.mxu0 %v1073
    %1109 = vmatmul.f32.gmra.mxu0 %v1085
    %v1110 = vpop.f32.mrf.mxu0
    %v1111 = vadd.f32 %v1082, %v1110
    %1112 = vdwg.mxu0
    %1113 = vmatpush.msra.mxu0 0.0
    %1114 = vmatpush.msra.mxu0 0.0
    %1115 = vmatpush.msra.mxu0 0.0
    %1116 = vmatpush.msra.mxu0 0.0
    %1117 = vmatpush.msra.mxu0 0.0
    %1118 = vmatpush.msra.mxu0 0.0
    %1119 = vmatpush.msra.mxu0 0.0
    %1120 = vmatpush.msra.mxu0 0.0
    %1121 = vmatpush.msra.mxu0 0.0
    %1122 = vmatpush.msra.mxu0 0.0
    %1123 = vmatpush.msra.mxu0 0.0
    %1124 = vmatpush.msra.mxu0 0.0
    %1125 = vmatpush.msra.mxu0 0.0
    %1126 = vmatpush.msra.mxu0 0.0
    %1127 = vmatpush.msra.mxu0 %v1091
    %1128 = vmatpush.msra.mxu0 %v1074
    %1129 = vmatmul.f32.gmra.mxu0 %v1085
    %v1130 = vpop.f32.mrf.mxu0
    %v1131 = vadd.f32 %v1083, %v1130
    %1132 = vdwg.mxu0
    %v1133 = vmax.f32 %v1111, 0.0
    %v1134 = vmax.f32 %v1131, 0.0
    %v1135 = vpack.c.bf16 %v1133, %v1133
    %v1136 = vpack.c.bf16 %v1134, %v1134
    %s1137 = scalar_lea.vmem [#allocation2], 256
    %v1138 = vld [vmem:[%s1137] sm:$0xff]
    %v1139 = vld [vmem:[%s1137 + $0x8] sm:$0xff]
    %v1140 = vld [vmem:[%s1137 + $0x10] sm:$0xff]
    %v1141 = vld [vmem:[%s1137 + $0x18] sm:$0xff]
    %v1142 = vld [vmem:[%s1137 + $0x20] sm:$0xff]
    %v1143 = vld [vmem:[%s1137 + $0x28] sm:$0xff]
    %v1144 = vld [vmem:[%s1137 + $0x30] sm:$0xff]
    %v1145 = vld [vmem:[%s1137 + $0x38] sm:$0xff]
    %v1146 = vld [vmem:[%s1137 + $0x40] sm:$0xff]
    %v1147 = vld [vmem:[%s1137 + $0x48] sm:$0xff]
    %v1148 = vld [vmem:[%s1137 + $0x50] sm:$0xff]
    %v1149 = vld [vmem:[%s1137 + $0x58] sm:$0xff]
    %v1150 = vld [vmem:[%s1137 + $0x60] sm:$0xff]
    %v1151 = vld [vmem:[%s1137 + $0x68] sm:$0xff]
    %v1152 = vld [vmem:[%s1137 + $0x70] sm:$0xff]
    %v1153 = vld [vmem:[%s1137 + $0x78] sm:$0xff]
    %v1154 = vld [vmem:[%s1137 + $0x80] sm:$0xff]
    %v1155 = vld [vmem:[%s1137 + $0x88] sm:$0xff]
    %v1156 = vld [vmem:[%s1137 + $0x90] sm:$0xff]
    %v1157 = vld [vmem:[%s1137 + $0x98] sm:$0xff]
    %v1158 = vld [vmem:[%s1137 + $0xa0] sm:$0xff]
    %v1159 = vld [vmem:[%s1137 + $0xa8] sm:$0xff]
    %v1160 = vld [vmem:[%s1137 + $0xb0] sm:$0xff]
    %v1161 = vld [vmem:[%s1137 + $0xb8] sm:$0xff]
    %v1162 = vld [vmem:[%s1137 + $0xc0] sm:$0xff]
    %v1163 = vld [vmem:[%s1137 + $0xc8] sm:$0xff]
    %v1164 = vld [vmem:[%s1137 + $0xd0] sm:$0xff]
    %v1165 = vld [vmem:[%s1137 + $0xd8] sm:$0xff]
    %v1166 = vld [vmem:[%s1137 + $0xe0] sm:$0xff]
    %v1167 = vld [vmem:[%s1137 + $0xe8] sm:$0xff]
    %v1168 = vld [vmem:[%s1137 + $0xf0] sm:$0xff]
    %v1169 = vld [vmem:[%s1137 + $0xf8] sm:$0xff]
    %v1170 = vperm.slane %v1071, 1
    %v1171 = vperm.slane %v1071, 5
    %v1174 = vperm.slane %v1170, 1
    %v1175 = vperm.slane %v1171, 1
    %v1208 = vunpack.c.l.b16 %v1138
    %v1209 = vunpack.c.h.b16 %v1138
    %v1210 = vunpack.c.l.b16 %v1139
    %v1211 = vunpack.c.h.b16 %v1139
    %v1212 = vunpack.c.l.b16 %v1140
    %v1213 = vunpack.c.h.b16 %v1140
    %v1214 = vunpack.c.l.b16 %v1141
    %v1215 = vunpack.c.h.b16 %v1141
    %v1216 = vunpack.c.l.b16 %v1142
    %v1217 = vunpack.c.h.b16 %v1142
    %v1218 = vunpack.c.l.b16 %v1143
    %v1219 = vunpack.c.h.b16 %v1143
    %v1220 = vunpack.c.l.b16 %v1144
    %v1221 = vunpack.c.h.b16 %v1144
    %v1222 = vunpack.c.l.b16 %v1145
    %v1223 = vunpack.c.h.b16 %v1145
    %v1224 = vunpack.c.l.b16 %v1146
    %v1225 = vunpack.c.h.b16 %v1146
    %v1226 = vunpack.c.l.b16 %v1147
    %v1227 = vunpack.c.h.b16 %v1147
    %v1228 = vunpack.c.l.b16 %v1148
    %v1229 = vunpack.c.h.b16 %v1148
    %v1230 = vunpack.c.l.b16 %v1149
    %v1231 = vunpack.c.h.b16 %v1149
    %v1232 = vunpack.c.l.b16 %v1150
    %v1233 = vunpack.c.h.b16 %v1150
    %v1234 = vunpack.c.l.b16 %v1151
    %v1235 = vunpack.c.h.b16 %v1151
    %v1236 = vunpack.c.l.b16 %v1152
    %v1237 = vunpack.c.h.b16 %v1152
    %v1238 = vunpack.c.l.b16 %v1153
    %v1239 = vunpack.c.h.b16 %v1153
    %v1240 = vunpack.c.l.b16 %v1154
    %v1241 = vunpack.c.h.b16 %v1154
    %v1242 = vunpack.c.l.b16 %v1155
    %v1243 = vunpack.c.h.b16 %v1155
    %v1244 = vunpack.c.l.b16 %v1156
    %v1245 = vunpack.c.h.b16 %v1156
    %v1246 = vunpack.c.l.b16 %v1157
    %v1247 = vunpack.c.h.b16 %v1157
    %v1248 = vunpack.c.l.b16 %v1158
    %v1249 = vunpack.c.h.b16 %v1158
    %v1250 = vunpack.c.l.b16 %v1159
    %v1251 = vunpack.c.h.b16 %v1159
    %v1252 = vunpack.c.l.b16 %v1160
    %v1253 = vunpack.c.h.b16 %v1160
    %v1254 = vunpack.c.l.b16 %v1161
    %v1255 = vunpack.c.h.b16 %v1161
    %v1256 = vunpack.c.l.b16 %v1162
    %v1257 = vunpack.c.h.b16 %v1162
    %v1258 = vunpack.c.l.b16 %v1163
    %v1259 = vunpack.c.h.b16 %v1163
    %v1260 = vunpack.c.l.b16 %v1164
    %v1261 = vunpack.c.h.b16 %v1164
    %v1262 = vunpack.c.l.b16 %v1165
    %v1263 = vunpack.c.h.b16 %v1165
    %v1264 = vunpack.c.l.b16 %v1166
    %v1265 = vunpack.c.h.b16 %v1166
    %v1266 = vunpack.c.l.b16 %v1167
    %v1267 = vunpack.c.h.b16 %v1167
    %v1268 = vunpack.c.l.b16 %v1168
    %v1269 = vunpack.c.h.b16 %v1168
    %v1270 = vunpack.c.l.b16 %v1169
    %v1271 = vunpack.c.h.b16 %v1169
    %v1272 = vpack.c.b16 %v1210, %v1208
    %v1273 = vpack.c.b16 %v1211, %v1209
    %v1274 = vpack.c.b16 %v1214, %v1212
    %v1275 = vpack.c.b16 %v1215, %v1213
    %v1276 = vpack.c.b16 %v1218, %v1216
    %v1277 = vpack.c.b16 %v1219, %v1217
    %v1278 = vpack.c.b16 %v1222, %v1220
    %v1279 = vpack.c.b16 %v1223, %v1221
    %v1280 = vpack.c.b16 %v1226, %v1224
    %v1281 = vpack.c.b16 %v1227, %v1225
    %v1282 = vpack.c.b16 %v1230, %v1228
    %v1283 = vpack.c.b16 %v1231, %v1229
    %v1284 = vpack.c.b16 %v1234, %v1232
    %v1285 = vpack.c.b16 %v1235, %v1233
    %v1286 = vpack.c.b16 %v1238, %v1236
    %v1287 = vpack.c.b16 %v1239, %v1237
    %v1288 = vpack.c.b16 %v1242, %v1240
    %v1289 = vpack.c.b16 %v1243, %v1241
    %v1290 = vpack.c.b16 %v1246, %v1244
    %v1291 = vpack.c.b16 %v1247, %v1245
    %v1292 = vpack.c.b16 %v1250, %v1248
    %v1293 = vpack.c.b16 %v1251, %v1249
    %v1294 = vpack.c.b16 %v1254, %v1252
    %v1295 = vpack.c.b16 %v1255, %v1253
    %v1296 = vpack.c.b16 %v1258, %v1256
    %v1297 = vpack.c.b16 %v1259, %v1257
    %v1298 = vpack.c.b16 %v1262, %v1260
    %v1299 = vpack.c.b16 %v1263, %v1261
    %v1300 = vpack.c.b16 %v1266, %v1264
    %v1301 = vpack.c.b16 %v1267, %v1265
    %v1302 = vpack.c.b16 %v1270, %v1268
    %v1303 = vpack.c.b16 %v1271, %v1269
    %1336 = vmatpush.bf16.msra.mxu0 %v1286
    %1337 = vmatpush.bf16.msra.mxu0 %v1284
    %1338 = vmatpush.bf16.msra.mxu0 %v1282
    %1339 = vmatpush.bf16.msra.mxu0 %v1280
    %1340 = vmatpush.bf16.msra.mxu0 %v1278
    %1341 = vmatpush.bf16.msra.mxu0 %v1276
    %1342 = vmatpush.bf16.msra.mxu0 %v1274
    %1343 = vmatpush.bf16.msra.mxu0 %v1272
    %1344 = vmatmul.bf16.gmra.mxu0 %v1135
    %v1345 = vpop.f32.mrf.mxu0
    %v1346 = vadd.f32 %v1174, %v1345
    %v1347 = vpop.f32.mrf.mxu0
    %1348 = vdwg.mxu0
    %1349 = vmatpush.bf16.msra.mxu0 %v1302
    %1350 = vmatpush.bf16.msra.mxu0 %v1300
    %1351 = vmatpush.bf16.msra.mxu0 %v1298
    %1352 = vmatpush.bf16.msra.mxu0 %v1296
    %1353 = vmatpush.bf16.msra.mxu0 %v1294
    %1354 = vmatpush.bf16.msra.mxu0 %v1292
    %1355 = vmatpush.bf16.msra.mxu0 %v1290
    %1356 = vmatpush.bf16.msra.mxu0 %v1288
    %1357 = vmatmul.bf16.gmra.mxu0 %v1136
    %v1358 = vpop.f32.mrf.mxu0
    %v1359 = vadd.f32 %v1346, %v1358
    %v1360 = vpop.f32.mrf.mxu0
    %1361 = vdwg.mxu0
    %1362 = vmatpush.bf16.msra.mxu0 %v1287
    %1363 = vmatpush.bf16.msra.mxu0 %v1285
    %1364 = vmatpush.bf16.msra.mxu0 %v1283
    %1365 = vmatpush.bf16.msra.mxu0 %v1281
    %1366 = vmatpush.bf16.msra.mxu0 %v1279
    %1367 = vmatpush.bf16.msra.mxu0 %v1277
    %1368 = vmatpush.bf16.msra.mxu0 %v1275
    %1369 = vmatpush.bf16.msra.mxu0 %v1273
    %1370 = vmatmul.bf16.gmra.mxu0 %v1135
    %v1371 = vpop.f32.mrf.mxu0
    %v1372 = vadd.f32 %v1175, %v1371
    %v1373 = vpop.f32.mrf.mxu0
    %1374 = vdwg.mxu0
    %1375 = vmatpush.bf16.msra.mxu0 %v1303
    %1376 = vmatpush.bf16.msra.mxu0 %v1301
    %1377 = vmatpush.bf16.msra.mxu0 %v1299
    %1378 = vmatpush.bf16.msra.mxu0 %v1297
    %1379 = vmatpush.bf16.msra.mxu0 %v1295
    %1380 = vmatpush.bf16.msra.mxu0 %v1293
    %1381 = vmatpush.bf16.msra.mxu0 %v1291
    %1382 = vmatpush.bf16.msra.mxu0 %v1289
    %1383 = vmatmul.bf16.gmra.mxu0 %v1136
    %v1384 = vpop.f32.mrf.mxu0
    %v1385 = vadd.f32 %v1372, %v1384
    %v1386 = vpop.f32.mrf.mxu0
    %1387 = vdwg.mxu0
    %v1388 = vmax.f32 %v1359, 0.0
    %v1389 = vmax.f32 %v1385, 0.0
    %v1390 = vpack.c.bf16 %v1388, %v1388
    %v1391 = vpack.c.bf16 %v1389, %v1389
    %s1392 = scalar_lea.vmem [#allocation5], 256
    %v1393 = vld [vmem:[%s1392] sm:$0xff]
    %v1394 = vld [vmem:[%s1392 + $0x8] sm:$0xff]
    %v1395 = vld [vmem:[%s1392 + $0x10] sm:$0xff]
    %v1396 = vld [vmem:[%s1392 + $0x18] sm:$0xff]
    %v1397 = vld [vmem:[%s1392 + $0x20] sm:$0xff]
    %v1398 = vld [vmem:[%s1392 + $0x28] sm:$0xff]
    %v1399 = vld [vmem:[%s1392 + $0x30] sm:$0xff]
    %v1400 = vld [vmem:[%s1392 + $0x38] sm:$0xff]
    %v1401 = vld [vmem:[%s1392 + $0x40] sm:$0xff]
    %v1402 = vld [vmem:[%s1392 + $0x48] sm:$0xff]
    %v1403 = vld [vmem:[%s1392 + $0x50] sm:$0xff]
    %v1404 = vld [vmem:[%s1392 + $0x58] sm:$0xff]
    %v1405 = vld [vmem:[%s1392 + $0x60] sm:$0xff]
    %v1406 = vld [vmem:[%s1392 + $0x68] sm:$0xff]
    %v1407 = vld [vmem:[%s1392 + $0x70] sm:$0xff]
    %v1408 = vld [vmem:[%s1392 + $0x78] sm:$0xff]
    %v1409 = vld [vmem:[%s1392 + $0x80] sm:$0xff]
    %v1410 = vld [vmem:[%s1392 + $0x88] sm:$0xff]
    %v1411 = vld [vmem:[%s1392 + $0x90] sm:$0xff]
    %v1412 = vld [vmem:[%s1392 + $0x98] sm:$0xff]
    %v1413 = vld [vmem:[%s1392 + $0xa0] sm:$0xff]
    %v1414 = vld [vmem:[%s1392 + $0xa8] sm:$0xff]
    %v1415 = vld [vmem:[%s1392 + $0xb0] sm:$0xff]
    %v1416 = vld [vmem:[%s1392 + $0xb8] sm:$0xff]
    %v1417 = vld [vmem:[%s1392 + $0xc0] sm:$0xff]
    %v1418 = vld [vmem:[%s1392 + $0xc8] sm:$0xff]
    %v1419 = vld [vmem:[%s1392 + $0xd0] sm:$0xff]
    %v1420 = vld [vmem:[%s1392 + $0xd8] sm:$0xff]
    %v1421 = vld [vmem:[%s1392 + $0xe0] sm:$0xff]
    %v1422 = vld [vmem:[%s1392 + $0xe8] sm:$0xff]
    %v1423 = vld [vmem:[%s1392 + $0xf0] sm:$0xff]
    %v1424 = vld [vmem:[%s1392 + $0xf8] sm:$0xff]
    %v1425 = vperm.slane %v1071, 2
    %v1426 = vperm.slane %v1071, 6
    %v1429 = vperm.slane %v1425, 2
    %v1430 = vperm.slane %v1426, 2
    %v1463 = vunpack.c.l.b16 %v1393
    %v1464 = vunpack.c.h.b16 %v1393
    %v1465 = vunpack.c.l.b16 %v1394
    %v1466 = vunpack.c.h.b16 %v1394
    %v1467 = vunpack.c.l.b16 %v1395
    %v1468 = vunpack.c.h.b16 %v1395
    %v1469 = vunpack.c.l.b16 %v1396
    %v1470 = vunpack.c.h.b16 %v1396
    %v1471 = vunpack.c.l.b16 %v1397
    %v1472 = vunpack.c.h.b16 %v1397
    %v1473 = vunpack.c.l.b16 %v1398
    %v1474 = vunpack.c.h.b16 %v1398
    %v1475 = vunpack.c.l.b16 %v1399
    %v1476 = vunpack.c.h.b16 %v1399
    %v1477 = vunpack.c.l.b16 %v1400
    %v1478 = vunpack.c.h.b16 %v1400
    %v1479 = vunpack.c.l.b16 %v1401
    %v1480 = vunpack.c.h.b16 %v1401
    %v1481 = vunpack.c.l.b16 %v1402
    %v1482 = vunpack.c.h.b16 %v1402
    %v1483 = vunpack.c.l.b16 %v1403
    %v1484 = vunpack.c.h.b16 %v1403
    %v1485 = vunpack.c.l.b16 %v1404
    %v1486 = vunpack.c.h.b16 %v1404
    %v1487 = vunpack.c.l.b16 %v1405
    %v1488 = vunpack.c.h.b16 %v1405
    %v1489 = vunpack.c.l.b16 %v1406
    %v1490 = vunpack.c.h.b16 %v1406
    %v1491 = vunpack.c.l.b16 %v1407
    %v1492 = vunpack.c.h.b16 %v1407
    %v1493 = vunpack.c.l.b16 %v1408
    %v1494 = vunpack.c.h.b16 %v1408
    %v1495 = vunpack.c.l.b16 %v1409
    %v1496 = vunpack.c.h.b16 %v1409
    %v1497 = vunpack.c.l.b16 %v1410
    %v1498 = vunpack.c.h.b16 %v1410
    %v1499 = vunpack.c.l.b16 %v1411
    %v1500 = vunpack.c.h.b16 %v1411
    %v1501 = vunpack.c.l.b16 %v1412
    %v1502 = vunpack.c.h.b16 %v1412
    %v1503 = vunpack.c.l.b16 %v1413
    %v1504 = vunpack.c.h.b16 %v1413
    %v1505 = vunpack.c.l.b16 %v1414
    %v1506 = vunpack.c.h.b16 %v1414
    %v1507 = vunpack.c.l.b16 %v1415
    %v1508 = vunpack.c.h.b16 %v1415
    %v1509 = vunpack.c.l.b16 %v1416
    %v1510 = vunpack.c.h.b16 %v1416
    %v1511 = vunpack.c.l.b16 %v1417
    %v1512 = vunpack.c.h.b16 %v1417
    %v1513 = vunpack.c.l.b16 %v1418
    %v1514 = vunpack.c.h.b16 %v1418
    %v1515 = vunpack.c.l.b16 %v1419
    %v1516 = vunpack.c.h.b16 %v1419
    %v1517 = vunpack.c.l.b16 %v1420
    %v1518 = vunpack.c.h.b16 %v1420
    %v1519 = vunpack.c.l.b16 %v1421
    %v1520 = vunpack.c.h.b16 %v1421
    %v1521 = vunpack.c.l.b16 %v1422
    %v1522 = vunpack.c.h.b16 %v1422
    %v1523 = vunpack.c.l.b16 %v1423
    %v1524 = vunpack.c.h.b16 %v1423
    %v1525 = vunpack.c.l.b16 %v1424
    %v1526 = vunpack.c.h.b16 %v1424
    %v1527 = vpack.c.b16 %v1465, %v1463
    %v1528 = vpack.c.b16 %v1466, %v1464
    %v1529 = vpack.c.b16 %v1469, %v1467
    %v1530 = vpack.c.b16 %v1470, %v1468
    %v1531 = vpack.c.b16 %v1473, %v1471
    %v1532 = vpack.c.b16 %v1474, %v1472
    %v1533 = vpack.c.b16 %v1477, %v1475
    %v1534 = vpack.c.b16 %v1478, %v1476
    %v1535 = vpack.c.b16 %v1481, %v1479
    %v1536 = vpack.c.b16 %v1482, %v1480
    %v1537 = vpack.c.b16 %v1485, %v1483
    %v1538 = vpack.c.b16 %v1486, %v1484
    %v1539 = vpack.c.b16 %v1489, %v1487
    %v1540 = vpack.c.b16 %v1490, %v1488
    %v1541 = vpack.c.b16 %v1493, %v1491
    %v1542 = vpack.c.b16 %v1494, %v1492
    %v1543 = vpack.c.b16 %v1497, %v1495
    %v1544 = vpack.c.b16 %v1498, %v1496
    %v1545 = vpack.c.b16 %v1501, %v1499
    %v1546 = vpack.c.b16 %v1502, %v1500
    %v1547 = vpack.c.b16 %v1505, %v1503
    %v1548 = vpack.c.b16 %v1506, %v1504
    %v1549 = vpack.c.b16 %v1509, %v1507
    %v1550 = vpack.c.b16 %v1510, %v1508
    %v1551 = vpack.c.b16 %v1513, %v1511
    %v1552 = vpack.c.b16 %v1514, %v1512
    %v1553 = vpack.c.b16 %v1517, %v1515
    %v1554 = vpack.c.b16 %v1518, %v1516
    %v1555 = vpack.c.b16 %v1521, %v1519
    %v1556 = vpack.c.b16 %v1522, %v1520
    %v1557 = vpack.c.b16 %v1525, %v1523
    %v1558 = vpack.c.b16 %v1526, %v1524
    %1591 = vmatpush.bf16.msra.mxu0 %v1541
    %1592 = vmatpush.bf16.msra.mxu0 %v1539
    %1593 = vmatpush.bf16.msra.mxu0 %v1537
    %1594 = vmatpush.bf16.msra.mxu0 %v1535
    %1595 = vmatpush.bf16.msra.mxu0 %v1533
    %1596 = vmatpush.bf16.msra.mxu0 %v1531
    %1597 = vmatpush.bf16.msra.mxu0 %v1529
    %1598 = vmatpush.bf16.msra.mxu0 %v1527
    %1599 = vmatmul.bf16.gmra.mxu0 %v1390
    %v1600 = vpop.f32.mrf.mxu0
    %v1601 = vadd.f32 %v1429, %v1600
    %v1602 = vpop.f32.mrf.mxu0
    %1603 = vdwg.mxu0
    %1604 = vmatpush.bf16.msra.mxu0 %v1557
    %1605 = vmatpush.bf16.msra.mxu0 %v1555
    %1606 = vmatpush.bf16.msra.mxu0 %v1553
    %1607 = vmatpush.bf16.msra.mxu0 %v1551
    %1608 = vmatpush.bf16.msra.mxu0 %v1549
    %1609 = vmatpush.bf16.msra.mxu0 %v1547
    %1610 = vmatpush.bf16.msra.mxu0 %v1545
    %1611 = vmatpush.bf16.msra.mxu0 %v1543
    %1612 = vmatmul.bf16.gmra.mxu0 %v1391
    %v1613 = vpop.f32.mrf.mxu0
    %v1614 = vadd.f32 %v1601, %v1613
    %v1615 = vpop.f32.mrf.mxu0
    %1616 = vdwg.mxu0
    %1617 = vmatpush.bf16.msra.mxu0 %v1542
    %1618 = vmatpush.bf16.msra.mxu0 %v1540
    %1619 = vmatpush.bf16.msra.mxu0 %v1538
    %1620 = vmatpush.bf16.msra.mxu0 %v1536
    %1621 = vmatpush.bf16.msra.mxu0 %v1534
    %1622 = vmatpush.bf16.msra.mxu0 %v1532
    %1623 = vmatpush.bf16.msra.mxu0 %v1530
    %1624 = vmatpush.bf16.msra.mxu0 %v1528
    %1625 = vmatmul.bf16.gmra.mxu0 %v1390
    %v1626 = vpop.f32.mrf.mxu0
    %v1627 = vadd.f32 %v1430, %v1626
    %v1628 = vpop.f32.mrf.mxu0
    %1629 = vdwg.mxu0
    %1630 = vmatpush.bf16.msra.mxu0 %v1558
    %1631 = vmatpush.bf16.msra.mxu0 %v1556
    %1632 = vmatpush.bf16.msra.mxu0 %v1554
    %1633 = vmatpush.bf16.msra.mxu0 %v1552
    %1634 = vmatpush.bf16.msra.mxu0 %v1550
    %1635 = vmatpush.bf16.msra.mxu0 %v1548
    %1636 = vmatpush.bf16.msra.mxu0 %v1546
    %1637 = vmatpush.bf16.msra.mxu0 %v1544
    %1638 = vmatmul.bf16.gmra.mxu0 %v1391
    %v1639 = vpop.f32.mrf.mxu0
    %v1640 = vadd.f32 %v1627, %v1639
    %v1641 = vpop.f32.mrf.mxu0
    %1642 = vdwg.mxu0
    %v1643 = vmax.f32 %v1614, 0.0
    %v1644 = vmax.f32 %v1640, 0.0
    %v1645 = vpack.c.bf16 %v1643, %v1643
    %v1646 = vpack.c.bf16 %v1644, %v1644
    %s1647 = scalar_lea.vmem [#allocation7], 256
    %v1648 = vld [vmem:[%s1647] sm:$0xff]
    %v1649 = vld [vmem:[%s1647 + $0x8] sm:$0xff]
    %v1650 = vld [vmem:[%s1647 + $0x10] sm:$0xff]
    %v1651 = vld [vmem:[%s1647 + $0x18] sm:$0xff]
    %v1652 = vld [vmem:[%s1647 + $0x20] sm:$0xff]
    %v1653 = vld [vmem:[%s1647 + $0x28] sm:$0xff]
    %v1654 = vld [vmem:[%s1647 + $0x30] sm:$0xff]
    %v1655 = vld [vmem:[%s1647 + $0x38] sm:$0xff]
    %v1656 = vld [vmem:[%s1647 + $0x40] sm:$0xff]
    %v1657 = vld [vmem:[%s1647 + $0x48] sm:$0xff]
    %v1658 = vld [vmem:[%s1647 + $0x50] sm:$0xff]
    %v1659 = vld [vmem:[%s1647 + $0x58] sm:$0xff]
    %v1660 = vld [vmem:[%s1647 + $0x60] sm:$0xff]
    %v1661 = vld [vmem:[%s1647 + $0x68] sm:$0xff]
    %v1662 = vld [vmem:[%s1647 + $0x70] sm:$0xff]
    %v1663 = vld [vmem:[%s1647 + $0x78] sm:$0xff]
    %v1664 = vld [vmem:[%s1647 + $0x80] sm:$0xff]
    %v1665 = vld [vmem:[%s1647 + $0x88] sm:$0xff]
    %v1666 = vld [vmem:[%s1647 + $0x90] sm:$0xff]
    %v1667 = vld [vmem:[%s1647 + $0x98] sm:$0xff]
    %v1668 = vld [vmem:[%s1647 + $0xa0] sm:$0xff]
    %v1669 = vld [vmem:[%s1647 + $0xa8] sm:$0xff]
    %v1670 = vld [vmem:[%s1647 + $0xb0] sm:$0xff]
    %v1671 = vld [vmem:[%s1647 + $0xb8] sm:$0xff]
    %v1672 = vld [vmem:[%s1647 + $0xc0] sm:$0xff]
    %v1673 = vld [vmem:[%s1647 + $0xc8] sm:$0xff]
    %v1674 = vld [vmem:[%s1647 + $0xd0] sm:$0xff]
    %v1675 = vld [vmem:[%s1647 + $0xd8] sm:$0xff]
    %v1676 = vld [vmem:[%s1647 + $0xe0] sm:$0xff]
    %v1677 = vld [vmem:[%s1647 + $0xe8] sm:$0xff]
    %v1678 = vld [vmem:[%s1647 + $0xf0] sm:$0xff]
    %v1679 = vld [vmem:[%s1647 + $0xf8] sm:$0xff]
    %v1680 = vperm.slane %v1071, 3
    %v1681 = vperm.slane %v1071, 7
    %v1684 = vperm.slane %v1680, 3
    %v1685 = vperm.slane %v1681, 3
    %v1718 = vunpack.c.l.b16 %v1648
    %v1719 = vunpack.c.h.b16 %v1648
    %v1720 = vunpack.c.l.b16 %v1649
    %v1721 = vunpack.c.h.b16 %v1649
    %v1722 = vunpack.c.l.b16 %v1650
    %v1723 = vunpack.c.h.b16 %v1650
    %v1724 = vunpack.c.l.b16 %v1651
    %v1725 = vunpack.c.h.b16 %v1651
    %v1726 = vunpack.c.l.b16 %v1652
    %v1727 = vunpack.c.h.b16 %v1652
    %v1728 = vunpack.c.l.b16 %v1653
    %v1729 = vunpack.c.h.b16 %v1653
    %v1730 = vunpack.c.l.b16 %v1654
    %v1731 = vunpack.c.h.b16 %v1654
    %v1732 = vunpack.c.l.b16 %v1655
    %v1733 = vunpack.c.h.b16 %v1655
    %v1734 = vunpack.c.l.b16 %v1656
    %v1735 = vunpack.c.h.b16 %v1656
    %v1736 = vunpack.c.l.b16 %v1657
    %v1737 = vunpack.c.h.b16 %v1657
    %v1738 = vunpack.c.l.b16 %v1658
    %v1739 = vunpack.c.h.b16 %v1658
    %v1740 = vunpack.c.l.b16 %v1659
    %v1741 = vunpack.c.h.b16 %v1659
    %v1742 = vunpack.c.l.b16 %v1660
    %v1743 = vunpack.c.h.b16 %v1660
    %v1744 = vunpack.c.l.b16 %v1661
    %v1745 = vunpack.c.h.b16 %v1661
    %v1746 = vunpack.c.l.b16 %v1662
    %v1747 = vunpack.c.h.b16 %v1662
    %v1748 = vunpack.c.l.b16 %v1663
    %v1749 = vunpack.c.h.b16 %v1663
    %v1750 = vunpack.c.l.b16 %v1664
    %v1751 = vunpack.c.h.b16 %v1664
    %v1752 = vunpack.c.l.b16 %v1665
    %v1753 = vunpack.c.h.b16 %v1665
    %v1754 = vunpack.c.l.b16 %v1666
    %v1755 = vunpack.c.h.b16 %v1666
    %v1756 = vunpack.c.l.b16 %v1667
    %v1757 = vunpack.c.h.b16 %v1667
    %v1758 = vunpack.c.l.b16 %v1668
    %v1759 = vunpack.c.h.b16 %v1668
    %v1760 = vunpack.c.l.b16 %v1669
    %v1761 = vunpack.c.h.b16 %v1669
    %v1762 = vunpack.c.l.b16 %v1670
    %v1763 = vunpack.c.h.b16 %v1670
    %v1764 = vunpack.c.l.b16 %v1671
    %v1765 = vunpack.c.h.b16 %v1671
    %v1766 = vunpack.c.l.b16 %v1672
    %v1767 = vunpack.c.h.b16 %v1672
    %v1768 = vunpack.c.l.b16 %v1673
    %v1769 = vunpack.c.h.b16 %v1673
    %v1770 = vunpack.c.l.b16 %v1674
    %v1771 = vunpack.c.h.b16 %v1674
    %v1772 = vunpack.c.l.b16 %v1675
    %v1773 = vunpack.c.h.b16 %v1675
    %v1774 = vunpack.c.l.b16 %v1676
    %v1775 = vunpack.c.h.b16 %v1676
    %v1776 = vunpack.c.l.b16 %v1677
    %v1777 = vunpack.c.h.b16 %v1677
    %v1778 = vunpack.c.l.b16 %v1678
    %v1779 = vunpack.c.h.b16 %v1678
    %v1780 = vunpack.c.l.b16 %v1679
    %v1781 = vunpack.c.h.b16 %v1679
    %v1782 = vpack.c.b16 %v1720, %v1718
    %v1783 = vpack.c.b16 %v1721, %v1719
    %v1784 = vpack.c.b16 %v1724, %v1722
    %v1785 = vpack.c.b16 %v1725, %v1723
    %v1786 = vpack.c.b16 %v1728, %v1726
    %v1787 = vpack.c.b16 %v1729, %v1727
    %v1788 = vpack.c.b16 %v1732, %v1730
    %v1789 = vpack.c.b16 %v1733, %v1731
    %v1790 = vpack.c.b16 %v1736, %v1734
    %v1791 = vpack.c.b16 %v1737, %v1735
    %v1792 = vpack.c.b16 %v1740, %v1738
    %v1793 = vpack.c.b16 %v1741, %v1739
    %v1794 = vpack.c.b16 %v1744, %v1742
    %v1795 = vpack.c.b16 %v1745, %v1743
    %v1796 = vpack.c.b16 %v1748, %v1746
    %v1797 = vpack.c.b16 %v1749, %v1747
    %v1798 = vpack.c.b16 %v1752, %v1750
    %v1799 = vpack.c.b16 %v1753, %v1751
    %v1800 = vpack.c.b16 %v1756, %v1754
    %v1801 = vpack.c.b16 %v1757, %v1755
    %v1802 = vpack.c.b16 %v1760, %v1758
    %v1803 = vpack.c.b16 %v1761, %v1759
    %v1804 = vpack.c.b16 %v1764, %v1762
    %v1805 = vpack.c.b16 %v1765, %v1763
    %v1806 = vpack.c.b16 %v1768, %v1766
    %v1807 = vpack.c.b16 %v1769, %v1767
    %v1808 = vpack.c.b16 %v1772, %v1770
    %v1809 = vpack.c.b16 %v1773, %v1771
    %v1810 = vpack.c.b16 %v1776, %v1774
    %v1811 = vpack.c.b16 %v1777, %v1775
    %v1812 = vpack.c.b16 %v1780, %v1778
    %v1813 = vpack.c.b16 %v1781, %v1779
    %1846 = vmatpush.bf16.msra.mxu0 %v1796
    %1847 = vmatpush.bf16.msra.mxu0 %v1794
    %1848 = vmatpush.bf16.msra.mxu0 %v1792
    %1849 = vmatpush.bf16.msra.mxu0 %v1790
    %1850 = vmatpush.bf16.msra.mxu0 %v1788
    %1851 = vmatpush.bf16.msra.mxu0 %v1786
    %1852 = vmatpush.bf16.msra.mxu0 %v1784
    %1853 = vmatpush.bf16.msra.mxu0 %v1782
    %1854 = vmatmul.bf16.gmra.mxu0 %v1645
    %v1855 = vpop.f32.mrf.mxu0
    %v1856 = vadd.f32 %v1684, %v1855
    %v1857 = vpop.f32.mrf.mxu0
    %1858 = vdwg.mxu0
    %1859 = vmatpush.bf16.msra.mxu0 %v1812
    %1860 = vmatpush.bf16.msra.mxu0 %v1810
    %1861 = vmatpush.bf16.msra.mxu0 %v1808
    %1862 = vmatpush.bf16.msra.mxu0 %v1806
    %1863 = vmatpush.bf16.msra.mxu0 %v1804
    %1864 = vmatpush.bf16.msra.mxu0 %v1802
    %1865 = vmatpush.bf16.msra.mxu0 %v1800
    %1866 = vmatpush.bf16.msra.mxu0 %v1798
    %1867 = vmatmul.bf16.gmra.mxu0 %v1646
    %v1868 = vpop.f32.mrf.mxu0
    %v1869 = vadd.f32 %v1856, %v1868
    %v1870 = vpop.f32.mrf.mxu0
    %1871 = vdwg.mxu0
    %1872 = vmatpush.bf16.msra.mxu0 %v1797
    %1873 = vmatpush.bf16.msra.mxu0 %v1795
    %1874 = vmatpush.bf16.msra.mxu0 %v1793
    %1875 = vmatpush.bf16.msra.mxu0 %v1791
    %1876 = vmatpush.bf16.msra.mxu0 %v1789
    %1877 = vmatpush.bf16.msra.mxu0 %v1787
    %1878 = vmatpush.bf16.msra.mxu0 %v1785
    %1879 = vmatpush.bf16.msra.mxu0 %v1783
    %1880 = vmatmul.bf16.gmra.mxu0 %v1645
    %v1881 = vpop.f32.mrf.mxu0
    %v1882 = vadd.f32 %v1685, %v1881
    %v1883 = vpop.f32.mrf.mxu0
    %1884 = vdwg.mxu0
    %1885 = vmatpush.bf16.msra.mxu0 %v1813
    %1886 = vmatpush.bf16.msra.mxu0 %v1811
    %1887 = vmatpush.bf16.msra.mxu0 %v1809
    %1888 = vmatpush.bf16.msra.mxu0 %v1807
    %1889 = vmatpush.bf16.msra.mxu0 %v1805
    %1890 = vmatpush.bf16.msra.mxu0 %v1803
    %1891 = vmatpush.bf16.msra.mxu0 %v1801
    %1892 = vmatpush.bf16.msra.mxu0 %v1799
    %1893 = vmatmul.bf16.gmra.mxu0 %v1646
    %v1894 = vpop.f32.mrf.mxu0
    %v1895 = vadd.f32 %v1882, %v1894
    %v1896 = vpop.f32.mrf.mxu0
    %1897 = vdwg.mxu0
    %v1898 = vmax.f32 %v1869, 0.0
    %v1899 = vmax.f32 %v1895, 0.0
    %v1900 = vpack.c.bf16 %v1898, %v1898
    %v1901 = vpack.c.bf16 %v1899, %v1899
    %s1902 = scalar_lea.vmem %s6, 128
    %v1903 = vld [vmem:[%s1902] sm:$0xf]
    %v1904 = vld [vmem:[%s1902 + $0x4] sm:$0xf]
    %v1905 = vld [vmem:[%s1902 + $0x8] sm:$0xf]
    %v1906 = vld [vmem:[%s1902 + $0xc] sm:$0xf]
    %v1907 = vld [vmem:[%s1902 + $0x10] sm:$0xf]
    %v1908 = vld [vmem:[%s1902 + $0x14] sm:$0xf]
    %v1909 = vld [vmem:[%s1902 + $0x18] sm:$0xf]
    %v1910 = vld [vmem:[%s1902 + $0x1c] sm:$0xf]
    %v1911 = vld [vmem:[%s1902 + $0x20] sm:$0xf]
    %v1912 = vld [vmem:[%s1902 + $0x24] sm:$0xf]
    %v1913 = vld [vmem:[%s1902 + $0x28] sm:$0xf]
    %v1914 = vld [vmem:[%s1902 + $0x2c] sm:$0xf]
    %v1915 = vld [vmem:[%s1902 + $0x30] sm:$0xf]
    %v1916 = vld [vmem:[%s1902 + $0x34] sm:$0xf]
    %v1917 = vld [vmem:[%s1902 + $0x38] sm:$0xf]
    %v1918 = vld [vmem:[%s1902 + $0x3c] sm:$0xf]
    %v1919 = vld [vmem:[%s1902 + $0x40] sm:$0xf]
    %v1920 = vld [vmem:[%s1902 + $0x44] sm:$0xf]
    %v1921 = vld [vmem:[%s1902 + $0x48] sm:$0xf]
    %v1922 = vld [vmem:[%s1902 + $0x4c] sm:$0xf]
    %v1923 = vld [vmem:[%s1902 + $0x50] sm:$0xf]
    %v1924 = vld [vmem:[%s1902 + $0x54] sm:$0xf]
    %v1925 = vld [vmem:[%s1902 + $0x58] sm:$0xf]
    %v1926 = vld [vmem:[%s1902 + $0x5c] sm:$0xf]
    %v1927 = vld [vmem:[%s1902 + $0x60] sm:$0xf]
    %v1928 = vld [vmem:[%s1902 + $0x64] sm:$0xf]
    %v1929 = vld [vmem:[%s1902 + $0x68] sm:$0xf]
    %v1930 = vld [vmem:[%s1902 + $0x6c] sm:$0xf]
    %v1931 = vld [vmem:[%s1902 + $0x70] sm:$0xf]
    %v1932 = vld [vmem:[%s1902 + $0x74] sm:$0xf]
    %v1933 = vld [vmem:[%s1902 + $0x78] sm:$0xf]
    %v1934 = vld [vmem:[%s1902 + $0x7c] sm:$0xf]
    %s1935 = scalar_lea.vmem %s7, 1
    %v1936 = vld [vmem:[%s1935] sm:$0x1]
    %v1938 = vperm.slane %v1936, 0
    %v1972 = vunpack.c.l.b16 %v1903
    %v1973 = vunpack.c.l.b16 %v1904
    %v1974 = vunpack.c.l.b16 %v1905
    %v1975 = vunpack.c.l.b16 %v1906
    %v1976 = vunpack.c.l.b16 %v1907
    %v1977 = vunpack.c.l.b16 %v1908
    %v1978 = vunpack.c.l.b16 %v1909
    %v1979 = vunpack.c.l.b16 %v1910
    %v1980 = vunpack.c.l.b16 %v1911
    %v1981 = vunpack.c.l.b16 %v1912
    %v1982 = vunpack.c.l.b16 %v1913
    %v1983 = vunpack.c.l.b16 %v1914
    %v1984 = vunpack.c.l.b16 %v1915
    %v1985 = vunpack.c.l.b16 %v1916
    %v1986 = vunpack.c.l.b16 %v1917
    %v1987 = vunpack.c.l.b16 %v1918
    %v1988 = vunpack.c.l.b16 %v1919
    %v1989 = vunpack.c.l.b16 %v1920
    %v1990 = vunpack.c.l.b16 %v1921
    %v1991 = vunpack.c.l.b16 %v1922
    %v1992 = vunpack.c.l.b16 %v1923
    %v1993 = vunpack.c.l.b16 %v1924
    %v1994 = vunpack.c.l.b16 %v1925
    %v1995 = vunpack.c.l.b16 %v1926
    %v1996 = vunpack.c.l.b16 %v1927
    %v1997 = vunpack.c.l.b16 %v1928
    %v1998 = vunpack.c.l.b16 %v1929
    %v1999 = vunpack.c.l.b16 %v1930
    %v2000 = vunpack.c.l.b16 %v1931
    %v2001 = vunpack.c.l.b16 %v1932
    %v2002 = vunpack.c.l.b16 %v1933
    %v2003 = vunpack.c.l.b16 %v1934
    %v2004 = vpack.c.b16 %v1973, %v1972
    %v2005 = vpack.c.b16 %v1975, %v1974
    %v2006 = vpack.c.b16 %v1977, %v1976
    %v2007 = vpack.c.b16 %v1979, %v1978
    %v2008 = vpack.c.b16 %v1981, %v1980
    %v2009 = vpack.c.b16 %v1983, %v1982
    %v2010 = vpack.c.b16 %v1985, %v1984
    %v2011 = vpack.c.b16 %v1987, %v1986
    %v2012 = vpack.c.b16 %v1989, %v1988
    %v2013 = vpack.c.b16 %v1991, %v1990
    %v2014 = vpack.c.b16 %v1993, %v1992
    %v2015 = vpack.c.b16 %v1995, %v1994
    %v2016 = vpack.c.b16 %v1997, %v1996
    %v2017 = vpack.c.b16 %v1999, %v1998
    %v2018 = vpack.c.b16 %v2001, %v2000
    %v2019 = vpack.c.b16 %v2003, %v2002
    %2036 = vmatpush.bf16.msra.mxu0 %v2011
    %2037 = vmatpush.bf16.msra.mxu0 %v2010
    %2038 = vmatpush.bf16.msra.mxu0 %v2009
    %2039 = vmatpush.bf16.msra.mxu0 %v2008
    %2040 = vmatpush.bf16.msra.mxu0 %v2007
    %2041 = vmatpush.bf16.msra.mxu0 %v2006
    %2042 = vmatpush.bf16.msra.mxu0 %v2005
    %2043 = vmatpush.bf16.msra.mxu0 %v2004
    %2044 = vmatmul.bf16.gmra.mxu0 %v1900
    %v2045 = vpop.f32.mrf.mxu0
    %v2046 = vadd.f32 %v1938, %v2045
    %v2047 = vpop.f32.mrf.mxu0
    %2048 = vdwg.mxu0
    %2049 = vmatpush.bf16.msra.mxu0 %v2019
    %2050 = vmatpush.bf16.msra.mxu0 %v2018
    %2051 = vmatpush.bf16.msra.mxu0 %v2017
    %2052 = vmatpush.bf16.msra.mxu0 %v2016
    %2053 = vmatpush.bf16.msra.mxu0 %v2015
    %2054 = vmatpush.bf16.msra.mxu0 %v2014
    %2055 = vmatpush.bf16.msra.mxu0 %v2013
    %2056 = vmatpush.bf16.msra.mxu0 %v2012
    %2057 = vmatmul.bf16.gmra.mxu0 %v1901
    %v2058 = vpop.f32.mrf.mxu0
    %v2059 = vadd.f32 %v2046, %v2058
    %v2060 = vpop.f32.mrf.mxu0
    %2061 = vdwg.mxu0
    %v2062 = vsub.f32 %v1068, %v2059
    %v2063 = vadd.f32 %v1069, %v2059
    %s2064 = scalar_lea.vmem %s5, 16
    %v2065 = vld [vmem:[%s2064] sm:$0xff]
    %s2066 = scalar_lea.vmem %s1, 64
    %v2067 = vld [vmem:[%s2066] sm:$0xff]
    %v2068 = vld [vmem:[%s2066 + $0x8] sm:$0xff]
    %v2069 = vld [vmem:[%s2066 + $0x10] sm:$0x3]
    %v2070 = vld [vmem:[%s2066 + $0x18] sm:$0x3]
    %v2072 = vperm.slane %v2065, 0
    %v2073 = vperm.slane %v2065, 4
    %v2076 = vperm.slane %v2072, 0
    %v2077 = vperm.slane %v2073, 0
    %v2079 = vsel %vm93, %v2062, 0
    %v2082 = vsel %vm97, %v2069, 0
    %v2085 = vsel %vm97, %v2070, 0
    %2087 = vmatpush.msra.mxu0 0.0
    %2088 = vmatpush.msra.mxu0 0.0
    %2089 = vmatpush.msra.mxu0 0.0
    %2090 = vmatpush.msra.mxu0 0.0
    %2091 = vmatpush.msra.mxu0 0.0
    %2092 = vmatpush.msra.mxu0 0.0
    %2093 = vmatpush.msra.mxu0 0.0
    %2094 = vmatpush.msra.mxu0 0.0
    %2095 = vmatpush.msra.mxu0 0.0
    %2096 = vmatpush.msra.mxu0 0.0
    %2097 = vmatpush.msra.mxu0 0.0
    %2098 = vmatpush.msra.mxu0 0.0
    %2099 = vmatpush.msra.mxu0 0.0
    %2100 = vmatpush.msra.mxu0 0.0
    %2101 = vmatpush.msra.mxu0 %v2082
    %2102 = vmatpush.msra.mxu0 %v2067
    %2103 = vmatmul.f32.gmra.mxu0 %v2079
    %v2104 = vpop.f32.mrf.mxu0
    %v2105 = vadd.f32 %v2076, %v2104
    %2106 = vdwg.mxu0
    %2107 = vmatpush.msra.mxu0 0.0
    %2108 = vmatpush.msra.mxu0 0.0
    %2109 = vmatpush.msra.mxu0 0.0
    %2110 = vmatpush.msra.mxu0 0.0
    %2111 = vmatpush.msra.mxu0 0.0
    %2112 = vmatpush.msra.mxu0 0.0
    %2113 = vmatpush.msra.mxu0 0.0
    %2114 = vmatpush.msra.mxu0 0.0
    %2115 = vmatpush.msra.mxu0 0.0
    %2116 = vmatpush.msra.mxu0 0.0
    %2117 = vmatpush.msra.mxu0 0.0
    %2118 = vmatpush.msra.mxu0 0.0
    %2119 = vmatpush.msra.mxu0 0.0
    %2120 = vmatpush.msra.mxu0 0.0
    %2121 = vmatpush.msra.mxu0 %v2085
    %2122 = vmatpush.msra.mxu0 %v2068
    %2123 = vmatmul.f32.gmra.mxu0 %v2079
    %v2124 = vpop.f32.mrf.mxu0
    %v2125 = vadd.f32 %v2077, %v2124
    %2126 = vdwg.mxu0
    %v2127 = vmax.f32 %v2105, 0.0
    %v2128 = vmax.f32 %v2125, 0.0
    %v2129 = vpack.c.bf16 %v2127, %v2127
    %v2130 = vpack.c.bf16 %v2128, %v2128
    %s2131 = scalar_lea.vmem [#allocation2], 512
    %v2132 = vld [vmem:[%s2131] sm:$0xff]
    %v2133 = vld [vmem:[%s2131 + $0x8] sm:$0xff]
    %v2134 = vld [vmem:[%s2131 + $0x10] sm:$0xff]
    %v2135 = vld [vmem:[%s2131 + $0x18] sm:$0xff]
    %v2136 = vld [vmem:[%s2131 + $0x20] sm:$0xff]
    %v2137 = vld [vmem:[%s2131 + $0x28] sm:$0xff]
    %v2138 = vld [vmem:[%s2131 + $0x30] sm:$0xff]
    %v2139 = vld [vmem:[%s2131 + $0x38] sm:$0xff]
    %v2140 = vld [vmem:[%s2131 + $0x40] sm:$0xff]
    %v2141 = vld [vmem:[%s2131 + $0x48] sm:$0xff]
    %v2142 = vld [vmem:[%s2131 + $0x50] sm:$0xff]
    %v2143 = vld [vmem:[%s2131 + $0x58] sm:$0xff]
    %v2144 = vld [vmem:[%s2131 + $0x60] sm:$0xff]
    %v2145 = vld [vmem:[%s2131 + $0x68] sm:$0xff]
    %v2146 = vld [vmem:[%s2131 + $0x70] sm:$0xff]
    %v2147 = vld [vmem:[%s2131 + $0x78] sm:$0xff]
    %v2148 = vld [vmem:[%s2131 + $0x80] sm:$0xff]
    %v2149 = vld [vmem:[%s2131 + $0x88] sm:$0xff]
    %v2150 = vld [vmem:[%s2131 + $0x90] sm:$0xff]
    %v2151 = vld [vmem:[%s2131 + $0x98] sm:$0xff]
    %v2152 = vld [vmem:[%s2131 + $0xa0] sm:$0xff]
    %v2153 = vld [vmem:[%s2131 + $0xa8] sm:$0xff]
    %v2154 = vld [vmem:[%s2131 + $0xb0] sm:$0xff]
    %v2155 = vld [vmem:[%s2131 + $0xb8] sm:$0xff]
    %v2156 = vld [vmem:[%s2131 + $0xc0] sm:$0xff]
    %v2157 = vld [vmem:[%s2131 + $0xc8] sm:$0xff]
    %v2158 = vld [vmem:[%s2131 + $0xd0] sm:$0xff]
    %v2159 = vld [vmem:[%s2131 + $0xd8] sm:$0xff]
    %v2160 = vld [vmem:[%s2131 + $0xe0] sm:$0xff]
    %v2161 = vld [vmem:[%s2131 + $0xe8] sm:$0xff]
    %v2162 = vld [vmem:[%s2131 + $0xf0] sm:$0xff]
    %v2163 = vld [vmem:[%s2131 + $0xf8] sm:$0xff]
    %v2164 = vperm.slane %v2065, 1
    %v2165 = vperm.slane %v2065, 5
    %v2168 = vperm.slane %v2164, 1
    %v2169 = vperm.slane %v2165, 1
    %v2202 = vunpack.c.l.b16 %v2132
    %v2203 = vunpack.c.h.b16 %v2132
    %v2204 = vunpack.c.l.b16 %v2133
    %v2205 = vunpack.c.h.b16 %v2133
    %v2206 = vunpack.c.l.b16 %v2134
    %v2207 = vunpack.c.h.b16 %v2134
    %v2208 = vunpack.c.l.b16 %v2135
    %v2209 = vunpack.c.h.b16 %v2135
    %v2210 = vunpack.c.l.b16 %v2136
    %v2211 = vunpack.c.h.b16 %v2136
    %v2212 = vunpack.c.l.b16 %v2137
    %v2213 = vunpack.c.h.b16 %v2137
    %v2214 = vunpack.c.l.b16 %v2138
    %v2215 = vunpack.c.h.b16 %v2138
    %v2216 = vunpack.c.l.b16 %v2139
    %v2217 = vunpack.c.h.b16 %v2139
    %v2218 = vunpack.c.l.b16 %v2140
    %v2219 = vunpack.c.h.b16 %v2140
    %v2220 = vunpack.c.l.b16 %v2141
    %v2221 = vunpack.c.h.b16 %v2141
    %v2222 = vunpack.c.l.b16 %v2142
    %v2223 = vunpack.c.h.b16 %v2142
    %v2224 = vunpack.c.l.b16 %v2143
    %v2225 = vunpack.c.h.b16 %v2143
    %v2226 = vunpack.c.l.b16 %v2144
    %v2227 = vunpack.c.h.b16 %v2144
    %v2228 = vunpack.c.l.b16 %v2145
    %v2229 = vunpack.c.h.b16 %v2145
    %v2230 = vunpack.c.l.b16 %v2146
    %v2231 = vunpack.c.h.b16 %v2146
    %v2232 = vunpack.c.l.b16 %v2147
    %v2233 = vunpack.c.h.b16 %v2147
    %v2234 = vunpack.c.l.b16 %v2148
    %v2235 = vunpack.c.h.b16 %v2148
    %v2236 = vunpack.c.l.b16 %v2149
    %v2237 = vunpack.c.h.b16 %v2149
    %v2238 = vunpack.c.l.b16 %v2150
    %v2239 = vunpack.c.h.b16 %v2150
    %v2240 = vunpack.c.l.b16 %v2151
    %v2241 = vunpack.c.h.b16 %v2151
    %v2242 = vunpack.c.l.b16 %v2152
    %v2243 = vunpack.c.h.b16 %v2152
    %v2244 = vunpack.c.l.b16 %v2153
    %v2245 = vunpack.c.h.b16 %v2153
    %v2246 = vunpack.c.l.b16 %v2154
    %v2247 = vunpack.c.h.b16 %v2154
    %v2248 = vunpack.c.l.b16 %v2155
    %v2249 = vunpack.c.h.b16 %v2155
    %v2250 = vunpack.c.l.b16 %v2156
    %v2251 = vunpack.c.h.b16 %v2156
    %v2252 = vunpack.c.l.b16 %v2157
    %v2253 = vunpack.c.h.b16 %v2157
    %v2254 = vunpack.c.l.b16 %v2158
    %v2255 = vunpack.c.h.b16 %v2158
    %v2256 = vunpack.c.l.b16 %v2159
    %v2257 = vunpack.c.h.b16 %v2159
    %v2258 = vunpack.c.l.b16 %v2160
    %v2259 = vunpack.c.h.b16 %v2160
    %v2260 = vunpack.c.l.b16 %v2161
    %v2261 = vunpack.c.h.b16 %v2161
    %v2262 = vunpack.c.l.b16 %v2162
    %v2263 = vunpack.c.h.b16 %v2162
    %v2264 = vunpack.c.l.b16 %v2163
    %v2265 = vunpack.c.h.b16 %v2163
    %v2266 = vpack.c.b16 %v2204, %v2202
    %v2267 = vpack.c.b16 %v2205, %v2203
    %v2268 = vpack.c.b16 %v2208, %v2206
    %v2269 = vpack.c.b16 %v2209, %v2207
    %v2270 = vpack.c.b16 %v2212, %v2210
    %v2271 = vpack.c.b16 %v2213, %v2211
    %v2272 = vpack.c.b16 %v2216, %v2214
    %v2273 = vpack.c.b16 %v2217, %v2215
    %v2274 = vpack.c.b16 %v2220, %v2218
    %v2275 = vpack.c.b16 %v2221, %v2219
    %v2276 = vpack.c.b16 %v2224, %v2222
    %v2277 = vpack.c.b16 %v2225, %v2223
    %v2278 = vpack.c.b16 %v2228, %v2226
    %v2279 = vpack.c.b16 %v2229, %v2227
    %v2280 = vpack.c.b16 %v2232, %v2230
    %v2281 = vpack.c.b16 %v2233, %v2231
    %v2282 = vpack.c.b16 %v2236, %v2234
    %v2283 = vpack.c.b16 %v2237, %v2235
    %v2284 = vpack.c.b16 %v2240, %v2238
    %v2285 = vpack.c.b16 %v2241, %v2239
    %v2286 = vpack.c.b16 %v2244, %v2242
    %v2287 = vpack.c.b16 %v2245, %v2243
    %v2288 = vpack.c.b16 %v2248, %v2246
    %v2289 = vpack.c.b16 %v2249, %v2247
    %v2290 = vpack.c.b16 %v2252, %v2250
    %v2291 = vpack.c.b16 %v2253, %v2251
    %v2292 = vpack.c.b16 %v2256, %v2254
    %v2293 = vpack.c.b16 %v2257, %v2255
    %v2294 = vpack.c.b16 %v2260, %v2258
    %v2295 = vpack.c.b16 %v2261, %v2259
    %v2296 = vpack.c.b16 %v2264, %v2262
    %v2297 = vpack.c.b16 %v2265, %v2263
    %2330 = vmatpush.bf16.msra.mxu0 %v2280
    %2331 = vmatpush.bf16.msra.mxu0 %v2278
    %2332 = vmatpush.bf16.msra.mxu0 %v2276
    %2333 = vmatpush.bf16.msra.mxu0 %v2274
    %2334 = vmatpush.bf16.msra.mxu0 %v2272
    %2335 = vmatpush.bf16.msra.mxu0 %v2270
    %2336 = vmatpush.bf16.msra.mxu0 %v2268
    %2337 = vmatpush.bf16.msra.mxu0 %v2266
    %2338 = vmatmul.bf16.gmra.mxu0 %v2129
    %v2339 = vpop.f32.mrf.mxu0
    %v2340 = vadd.f32 %v2168, %v2339
    %v2341 = vpop.f32.mrf.mxu0
    %2342 = vdwg.mxu0
    %2343 = vmatpush.bf16.msra.mxu0 %v2296
    %2344 = vmatpush.bf16.msra.mxu0 %v2294
    %2345 = vmatpush.bf16.msra.mxu0 %v2292
    %2346 = vmatpush.bf16.msra.mxu0 %v2290
    %2347 = vmatpush.bf16.msra.mxu0 %v2288
    %2348 = vmatpush.bf16.msra.mxu0 %v2286
    %2349 = vmatpush.bf16.msra.mxu0 %v2284
    %2350 = vmatpush.bf16.msra.mxu0 %v2282
    %2351 = vmatmul.bf16.gmra.mxu0 %v2130
    %v2352 = vpop.f32.mrf.mxu0
    %v2353 = vadd.f32 %v2340, %v2352
    %v2354 = vpop.f32.mrf.mxu0
    %2355 = vdwg.mxu0
    %2356 = vmatpush.bf16.msra.mxu0 %v2281
    %2357 = vmatpush.bf16.msra.mxu0 %v2279
    %2358 = vmatpush.bf16.msra.mxu0 %v2277
    %2359 = vmatpush.bf16.msra.mxu0 %v2275
    %2360 = vmatpush.bf16.msra.mxu0 %v2273
    %2361 = vmatpush.bf16.msra.mxu0 %v2271
    %2362 = vmatpush.bf16.msra.mxu0 %v2269
    %2363 = vmatpush.bf16.msra.mxu0 %v2267
    %2364 = vmatmul.bf16.gmra.mxu0 %v2129
    %v2365 = vpop.f32.mrf.mxu0
    %v2366 = vadd.f32 %v2169, %v2365
    %v2367 = vpop.f32.mrf.mxu0
    %2368 = vdwg.mxu0
    %2369 = vmatpush.bf16.msra.mxu0 %v2297
    %2370 = vmatpush.bf16.msra.mxu0 %v2295
    %2371 = vmatpush.bf16.msra.mxu0 %v2293
    %2372 = vmatpush.bf16.msra.mxu0 %v2291
    %2373 = vmatpush.bf16.msra.mxu0 %v2289
    %2374 = vmatpush.bf16.msra.mxu0 %v2287
    %2375 = vmatpush.bf16.msra.mxu0 %v2285
    %2376 = vmatpush.bf16.msra.mxu0 %v2283
    %2377 = vmatmul.bf16.gmra.mxu0 %v2130
    %v2378 = vpop.f32.mrf.mxu0
    %v2379 = vadd.f32 %v2366, %v2378
    %v2380 = vpop.f32.mrf.mxu0
    %2381 = vdwg.mxu0
    %v2382 = vmax.f32 %v2353, 0.0
    %v2383 = vmax.f32 %v2379, 0.0
    %v2384 = vpack.c.bf16 %v2382, %v2382
    %v2385 = vpack.c.bf16 %v2383, %v2383
    %s2386 = scalar_lea.vmem [#allocation5], 512
    %v2387 = vld [vmem:[%s2386] sm:$0xff]
    %v2388 = vld [vmem:[%s2386 + $0x8] sm:$0xff]
    %v2389 = vld [vmem:[%s2386 + $0x10] sm:$0xff]
    %v2390 = vld [vmem:[%s2386 + $0x18] sm:$0xff]
    %v2391 = vld [vmem:[%s2386 + $0x20] sm:$0xff]
    %v2392 = vld [vmem:[%s2386 + $0x28] sm:$0xff]
    %v2393 = vld [vmem:[%s2386 + $0x30] sm:$0xff]
    %v2394 = vld [vmem:[%s2386 + $0x38] sm:$0xff]
    %v2395 = vld [vmem:[%s2386 + $0x40] sm:$0xff]
    %v2396 = vld [vmem:[%s2386 + $0x48] sm:$0xff]
    %v2397 = vld [vmem:[%s2386 + $0x50] sm:$0xff]
    %v2398 = vld [vmem:[%s2386 + $0x58] sm:$0xff]
    %v2399 = vld [vmem:[%s2386 + $0x60] sm:$0xff]
    %v2400 = vld [vmem:[%s2386 + $0x68] sm:$0xff]
    %v2401 = vld [vmem:[%s2386 + $0x70] sm:$0xff]
    %v2402 = vld [vmem:[%s2386 + $0x78] sm:$0xff]
    %v2403 = vld [vmem:[%s2386 + $0x80] sm:$0xff]
    %v2404 = vld [vmem:[%s2386 + $0x88] sm:$0xff]
    %v2405 = vld [vmem:[%s2386 + $0x90] sm:$0xff]
    %v2406 = vld [vmem:[%s2386 + $0x98] sm:$0xff]
    %v2407 = vld [vmem:[%s2386 + $0xa0] sm:$0xff]
    %v2408 = vld [vmem:[%s2386 + $0xa8] sm:$0xff]
    %v2409 = vld [vmem:[%s2386 + $0xb0] sm:$0xff]
    %v2410 = vld [vmem:[%s2386 + $0xb8] sm:$0xff]
    %v2411 = vld [vmem:[%s2386 + $0xc0] sm:$0xff]
    %v2412 = vld [vmem:[%s2386 + $0xc8] sm:$0xff]
    %v2413 = vld [vmem:[%s2386 + $0xd0] sm:$0xff]
    %v2414 = vld [vmem:[%s2386 + $0xd8] sm:$0xff]
    %v2415 = vld [vmem:[%s2386 + $0xe0] sm:$0xff]
    %v2416 = vld [vmem:[%s2386 + $0xe8] sm:$0xff]
    %v2417 = vld [vmem:[%s2386 + $0xf0] sm:$0xff]
    %v2418 = vld [vmem:[%s2386 + $0xf8] sm:$0xff]
    %v2419 = vperm.slane %v2065, 2
    %v2420 = vperm.slane %v2065, 6
    %v2423 = vperm.slane %v2419, 2
    %v2424 = vperm.slane %v2420, 2
    %v2457 = vunpack.c.l.b16 %v2387
    %v2458 = vunpack.c.h.b16 %v2387
    %v2459 = vunpack.c.l.b16 %v2388
    %v2460 = vunpack.c.h.b16 %v2388
    %v2461 = vunpack.c.l.b16 %v2389
    %v2462 = vunpack.c.h.b16 %v2389
    %v2463 = vunpack.c.l.b16 %v2390
    %v2464 = vunpack.c.h.b16 %v2390
    %v2465 = vunpack.c.l.b16 %v2391
    %v2466 = vunpack.c.h.b16 %v2391
    %v2467 = vunpack.c.l.b16 %v2392
    %v2468 = vunpack.c.h.b16 %v2392
    %v2469 = vunpack.c.l.b16 %v2393
    %v2470 = vunpack.c.h.b16 %v2393
    %v2471 = vunpack.c.l.b16 %v2394
    %v2472 = vunpack.c.h.b16 %v2394
    %v2473 = vunpack.c.l.b16 %v2395
    %v2474 = vunpack.c.h.b16 %v2395
    %v2475 = vunpack.c.l.b16 %v2396
    %v2476 = vunpack.c.h.b16 %v2396
    %v2477 = vunpack.c.l.b16 %v2397
    %v2478 = vunpack.c.h.b16 %v2397
    %v2479 = vunpack.c.l.b16 %v2398
    %v2480 = vunpack.c.h.b16 %v2398
    %v2481 = vunpack.c.l.b16 %v2399
    %v2482 = vunpack.c.h.b16 %v2399
    %v2483 = vunpack.c.l.b16 %v2400
    %v2484 = vunpack.c.h.b16 %v2400
    %v2485 = vunpack.c.l.b16 %v2401
    %v2486 = vunpack.c.h.b16 %v2401
    %v2487 = vunpack.c.l.b16 %v2402
    %v2488 = vunpack.c.h.b16 %v2402
    %v2489 = vunpack.c.l.b16 %v2403
    %v2490 = vunpack.c.h.b16 %v2403
    %v2491 = vunpack.c.l.b16 %v2404
    %v2492 = vunpack.c.h.b16 %v2404
    %v2493 = vunpack.c.l.b16 %v2405
    %v2494 = vunpack.c.h.b16 %v2405
    %v2495 = vunpack.c.l.b16 %v2406
    %v2496 = vunpack.c.h.b16 %v2406
    %v2497 = vunpack.c.l.b16 %v2407
    %v2498 = vunpack.c.h.b16 %v2407
    %v2499 = vunpack.c.l.b16 %v2408
    %v2500 = vunpack.c.h.b16 %v2408
    %v2501 = vunpack.c.l.b16 %v2409
    %v2502 = vunpack.c.h.b16 %v2409
    %v2503 = vunpack.c.l.b16 %v2410
    %v2504 = vunpack.c.h.b16 %v2410
    %v2505 = vunpack.c.l.b16 %v2411
    %v2506 = vunpack.c.h.b16 %v2411
    %v2507 = vunpack.c.l.b16 %v2412
    %v2508 = vunpack.c.h.b16 %v2412
    %v2509 = vunpack.c.l.b16 %v2413
    %v2510 = vunpack.c.h.b16 %v2413
    %v2511 = vunpack.c.l.b16 %v2414
    %v2512 = vunpack.c.h.b16 %v2414
    %v2513 = vunpack.c.l.b16 %v2415
    %v2514 = vunpack.c.h.b16 %v2415
    %v2515 = vunpack.c.l.b16 %v2416
    %v2516 = vunpack.c.h.b16 %v2416
    %v2517 = vunpack.c.l.b16 %v2417
    %v2518 = vunpack.c.h.b16 %v2417
    %v2519 = vunpack.c.l.b16 %v2418
    %v2520 = vunpack.c.h.b16 %v2418
    %v2521 = vpack.c.b16 %v2459, %v2457
    %v2522 = vpack.c.b16 %v2460, %v2458
    %v2523 = vpack.c.b16 %v2463, %v2461
    %v2524 = vpack.c.b16 %v2464, %v2462
    %v2525 = vpack.c.b16 %v2467, %v2465
    %v2526 = vpack.c.b16 %v2468, %v2466
    %v2527 = vpack.c.b16 %v2471, %v2469
    %v2528 = vpack.c.b16 %v2472, %v2470
    %v2529 = vpack.c.b16 %v2475, %v2473
    %v2530 = vpack.c.b16 %v2476, %v2474
    %v2531 = vpack.c.b16 %v2479, %v2477
    %v2532 = vpack.c.b16 %v2480, %v2478
    %v2533 = vpack.c.b16 %v2483, %v2481
    %v2534 = vpack.c.b16 %v2484, %v2482
    %v2535 = vpack.c.b16 %v2487, %v2485
    %v2536 = vpack.c.b16 %v2488, %v2486
    %v2537 = vpack.c.b16 %v2491, %v2489
    %v2538 = vpack.c.b16 %v2492, %v2490
    %v2539 = vpack.c.b16 %v2495, %v2493
    %v2540 = vpack.c.b16 %v2496, %v2494
    %v2541 = vpack.c.b16 %v2499, %v2497
    %v2542 = vpack.c.b16 %v2500, %v2498
    %v2543 = vpack.c.b16 %v2503, %v2501
    %v2544 = vpack.c.b16 %v2504, %v2502
    %v2545 = vpack.c.b16 %v2507, %v2505
    %v2546 = vpack.c.b16 %v2508, %v2506
    %v2547 = vpack.c.b16 %v2511, %v2509
    %v2548 = vpack.c.b16 %v2512, %v2510
    %v2549 = vpack.c.b16 %v2515, %v2513
    %v2550 = vpack.c.b16 %v2516, %v2514
    %v2551 = vpack.c.b16 %v2519, %v2517
    %v2552 = vpack.c.b16 %v2520, %v2518
    %2585 = vmatpush.bf16.msra.mxu0 %v2535
    %2586 = vmatpush.bf16.msra.mxu0 %v2533
    %2587 = vmatpush.bf16.msra.mxu0 %v2531
    %2588 = vmatpush.bf16.msra.mxu0 %v2529
    %2589 = vmatpush.bf16.msra.mxu0 %v2527
    %2590 = vmatpush.bf16.msra.mxu0 %v2525
    %2591 = vmatpush.bf16.msra.mxu0 %v2523
    %2592 = vmatpush.bf16.msra.mxu0 %v2521
    %2593 = vmatmul.bf16.gmra.mxu0 %v2384
    %v2594 = vpop.f32.mrf.mxu0
    %v2595 = vadd.f32 %v2423, %v2594
    %v2596 = vpop.f32.mrf.mxu0
    %2597 = vdwg.mxu0
    %2598 = vmatpush.bf16.msra.mxu0 %v2551
    %2599 = vmatpush.bf16.msra.mxu0 %v2549
    %2600 = vmatpush.bf16.msra.mxu0 %v2547
    %2601 = vmatpush.bf16.msra.mxu0 %v2545
    %2602 = vmatpush.bf16.msra.mxu0 %v2543
    %2603 = vmatpush.bf16.msra.mxu0 %v2541
    %2604 = vmatpush.bf16.msra.mxu0 %v2539
    %2605 = vmatpush.bf16.msra.mxu0 %v2537
    %2606 = vmatmul.bf16.gmra.mxu0 %v2385
    %v2607 = vpop.f32.mrf.mxu0
    %v2608 = vadd.f32 %v2595, %v2607
    %v2609 = vpop.f32.mrf.mxu0
    %2610 = vdwg.mxu0
    %2611 = vmatpush.bf16.msra.mxu0 %v2536
    %2612 = vmatpush.bf16.msra.mxu0 %v2534
    %2613 = vmatpush.bf16.msra.mxu0 %v2532
    %2614 = vmatpush.bf16.msra.mxu0 %v2530
    %2615 = vmatpush.bf16.msra.mxu0 %v2528
    %2616 = vmatpush.bf16.msra.mxu0 %v2526
    %2617 = vmatpush.bf16.msra.mxu0 %v2524
    %2618 = vmatpush.bf16.msra.mxu0 %v2522
    %2619 = vmatmul.bf16.gmra.mxu0 %v2384
    %v2620 = vpop.f32.mrf.mxu0
    %v2621 = vadd.f32 %v2424, %v2620
    %v2622 = vpop.f32.mrf.mxu0
    %2623 = vdwg.mxu0
    %2624 = vmatpush.bf16.msra.mxu0 %v2552
    %2625 = vmatpush.bf16.msra.mxu0 %v2550
    %2626 = vmatpush.bf16.msra.mxu0 %v2548
    %2627 = vmatpush.bf16.msra.mxu0 %v2546
    %2628 = vmatpush.bf16.msra.mxu0 %v2544
    %2629 = vmatpush.bf16.msra.mxu0 %v2542
    %2630 = vmatpush.bf16.msra.mxu0 %v2540
    %2631 = vmatpush.bf16.msra.mxu0 %v2538
    %2632 = vmatmul.bf16.gmra.mxu0 %v2385
    %v2633 = vpop.f32.mrf.mxu0
    %v2634 = vadd.f32 %v2621, %v2633
    %v2635 = vpop.f32.mrf.mxu0
    %2636 = vdwg.mxu0
    %v2637 = vmax.f32 %v2608, 0.0
    %v2638 = vmax.f32 %v2634, 0.0
    %v2639 = vpack.c.bf16 %v2637, %v2637
    %v2640 = vpack.c.bf16 %v2638, %v2638
    %s2641 = scalar_lea.vmem [#allocation7], 512
    %v2642 = vld [vmem:[%s2641] sm:$0xff]
    %v2643 = vld [vmem:[%s2641 + $0x8] sm:$0xff]
    %v2644 = vld [vmem:[%s2641 + $0x10] sm:$0xff]
    %v2645 = vld [vmem:[%s2641 + $0x18] sm:$0xff]
    %v2646 = vld [vmem:[%s2641 + $0x20] sm:$0xff]
    %v2647 = vld [vmem:[%s2641 + $0x28] sm:$0xff]
    %v2648 = vld [vmem:[%s2641 + $0x30] sm:$0xff]
    %v2649 = vld [vmem:[%s2641 + $0x38] sm:$0xff]
    %v2650 = vld [vmem:[%s2641 + $0x40] sm:$0xff]
    %v2651 = vld [vmem:[%s2641 + $0x48] sm:$0xff]
    %v2652 = vld [vmem:[%s2641 + $0x50] sm:$0xff]
    %v2653 = vld [vmem:[%s2641 + $0x58] sm:$0xff]
    %v2654 = vld [vmem:[%s2641 + $0x60] sm:$0xff]
    %v2655 = vld [vmem:[%s2641 + $0x68] sm:$0xff]
    %v2656 = vld [vmem:[%s2641 + $0x70] sm:$0xff]
    %v2657 = vld [vmem:[%s2641 + $0x78] sm:$0xff]
    %v2658 = vld [vmem:[%s2641 + $0x80] sm:$0xff]
    %v2659 = vld [vmem:[%s2641 + $0x88] sm:$0xff]
    %v2660 = vld [vmem:[%s2641 + $0x90] sm:$0xff]
    %v2661 = vld [vmem:[%s2641 + $0x98] sm:$0xff]
    %v2662 = vld [vmem:[%s2641 + $0xa0] sm:$0xff]
    %v2663 = vld [vmem:[%s2641 + $0xa8] sm:$0xff]
    %v2664 = vld [vmem:[%s2641 + $0xb0] sm:$0xff]
    %v2665 = vld [vmem:[%s2641 + $0xb8] sm:$0xff]
    %v2666 = vld [vmem:[%s2641 + $0xc0] sm:$0xff]
    %v2667 = vld [vmem:[%s2641 + $0xc8] sm:$0xff]
    %v2668 = vld [vmem:[%s2641 + $0xd0] sm:$0xff]
    %v2669 = vld [vmem:[%s2641 + $0xd8] sm:$0xff]
    %v2670 = vld [vmem:[%s2641 + $0xe0] sm:$0xff]
    %v2671 = vld [vmem:[%s2641 + $0xe8] sm:$0xff]
    %v2672 = vld [vmem:[%s2641 + $0xf0] sm:$0xff]
    %v2673 = vld [vmem:[%s2641 + $0xf8] sm:$0xff]
    %v2674 = vperm.slane %v2065, 3
    %v2675 = vperm.slane %v2065, 7
    %v2678 = vperm.slane %v2674, 3
    %v2679 = vperm.slane %v2675, 3
    %v2712 = vunpack.c.l.b16 %v2642
    %v2713 = vunpack.c.h.b16 %v2642
    %v2714 = vunpack.c.l.b16 %v2643
    %v2715 = vunpack.c.h.b16 %v2643
    %v2716 = vunpack.c.l.b16 %v2644
    %v2717 = vunpack.c.h.b16 %v2644
    %v2718 = vunpack.c.l.b16 %v2645
    %v2719 = vunpack.c.h.b16 %v2645
    %v2720 = vunpack.c.l.b16 %v2646
    %v2721 = vunpack.c.h.b16 %v2646
    %v2722 = vunpack.c.l.b16 %v2647
    %v2723 = vunpack.c.h.b16 %v2647
    %v2724 = vunpack.c.l.b16 %v2648
    %v2725 = vunpack.c.h.b16 %v2648
    %v2726 = vunpack.c.l.b16 %v2649
    %v2727 = vunpack.c.h.b16 %v2649
    %v2728 = vunpack.c.l.b16 %v2650
    %v2729 = vunpack.c.h.b16 %v2650
    %v2730 = vunpack.c.l.b16 %v2651
    %v2731 = vunpack.c.h.b16 %v2651
    %v2732 = vunpack.c.l.b16 %v2652
    %v2733 = vunpack.c.h.b16 %v2652
    %v2734 = vunpack.c.l.b16 %v2653
    %v2735 = vunpack.c.h.b16 %v2653
    %v2736 = vunpack.c.l.b16 %v2654
    %v2737 = vunpack.c.h.b16 %v2654
    %v2738 = vunpack.c.l.b16 %v2655
    %v2739 = vunpack.c.h.b16 %v2655
    %v2740 = vunpack.c.l.b16 %v2656
    %v2741 = vunpack.c.h.b16 %v2656
    %v2742 = vunpack.c.l.b16 %v2657
    %v2743 = vunpack.c.h.b16 %v2657
    %v2744 = vunpack.c.l.b16 %v2658
    %v2745 = vunpack.c.h.b16 %v2658
    %v2746 = vunpack.c.l.b16 %v2659
    %v2747 = vunpack.c.h.b16 %v2659
    %v2748 = vunpack.c.l.b16 %v2660
    %v2749 = vunpack.c.h.b16 %v2660
    %v2750 = vunpack.c.l.b16 %v2661
    %v2751 = vunpack.c.h.b16 %v2661
    %v2752 = vunpack.c.l.b16 %v2662
    %v2753 = vunpack.c.h.b16 %v2662
    %v2754 = vunpack.c.l.b16 %v2663
    %v2755 = vunpack.c.h.b16 %v2663
    %v2756 = vunpack.c.l.b16 %v2664
    %v2757 = vunpack.c.h.b16 %v2664
    %v2758 = vunpack.c.l.b16 %v2665
    %v2759 = vunpack.c.h.b16 %v2665
    %v2760 = vunpack.c.l.b16 %v2666
    %v2761 = vunpack.c.h.b16 %v2666
    %v2762 = vunpack.c.l.b16 %v2667
    %v2763 = vunpack.c.h.b16 %v2667
    %v2764 = vunpack.c.l.b16 %v2668
    %v2765 = vunpack.c.h.b16 %v2668
    %v2766 = vunpack.c.l.b16 %v2669
    %v2767 = vunpack.c.h.b16 %v2669
    %v2768 = vunpack.c.l.b16 %v2670
    %v2769 = vunpack.c.h.b16 %v2670
    %v2770 = vunpack.c.l.b16 %v2671
    %v2771 = vunpack.c.h.b16 %v2671
    %v2772 = vunpack.c.l.b16 %v2672
    %v2773 = vunpack.c.h.b16 %v2672
    %v2774 = vunpack.c.l.b16 %v2673
    %v2775 = vunpack.c.h.b16 %v2673
    %v2776 = vpack.c.b16 %v2714, %v2712
    %v2777 = vpack.c.b16 %v2715, %v2713
    %v2778 = vpack.c.b16 %v2718, %v2716
    %v2779 = vpack.c.b16 %v2719, %v2717
    %v2780 = vpack.c.b16 %v2722, %v2720
    %v2781 = vpack.c.b16 %v2723, %v2721
    %v2782 = vpack.c.b16 %v2726, %v2724
    %v2783 = vpack.c.b16 %v2727, %v2725
    %v2784 = vpack.c.b16 %v2730, %v2728
    %v2785 = vpack.c.b16 %v2731, %v2729
    %v2786 = vpack.c.b16 %v2734, %v2732
    %v2787 = vpack.c.b16 %v2735, %v2733
    %v2788 = vpack.c.b16 %v2738, %v2736
    %v2789 = vpack.c.b16 %v2739, %v2737
    %v2790 = vpack.c.b16 %v2742, %v2740
    %v2791 = vpack.c.b16 %v2743, %v2741
    %v2792 = vpack.c.b16 %v2746, %v2744
    %v2793 = vpack.c.b16 %v2747, %v2745
    %v2794 = vpack.c.b16 %v2750, %v2748
    %v2795 = vpack.c.b16 %v2751, %v2749
    %v2796 = vpack.c.b16 %v2754, %v2752
    %v2797 = vpack.c.b16 %v2755, %v2753
    %v2798 = vpack.c.b16 %v2758, %v2756
    %v2799 = vpack.c.b16 %v2759, %v2757
    %v2800 = vpack.c.b16 %v2762, %v2760
    %v2801 = vpack.c.b16 %v2763, %v2761
    %v2802 = vpack.c.b16 %v2766, %v2764
    %v2803 = vpack.c.b16 %v2767, %v2765
    %v2804 = vpack.c.b16 %v2770, %v2768
    %v2805 = vpack.c.b16 %v2771, %v2769
    %v2806 = vpack.c.b16 %v2774, %v2772
    %v2807 = vpack.c.b16 %v2775, %v2773
    %2840 = vmatpush.bf16.msra.mxu0 %v2790
    %2841 = vmatpush.bf16.msra.mxu0 %v2788
    %2842 = vmatpush.bf16.msra.mxu0 %v2786
    %2843 = vmatpush.bf16.msra.mxu0 %v2784
    %2844 = vmatpush.bf16.msra.mxu0 %v2782
    %2845 = vmatpush.bf16.msra.mxu0 %v2780
    %2846 = vmatpush.bf16.msra.mxu0 %v2778
    %2847 = vmatpush.bf16.msra.mxu0 %v2776
    %2848 = vmatmul.bf16.gmra.mxu0 %v2639
    %v2849 = vpop.f32.mrf.mxu0
    %v2850 = vadd.f32 %v2678, %v2849
    %v2851 = vpop.f32.mrf.mxu0
    %2852 = vdwg.mxu0
    %2853 = vmatpush.bf16.msra.mxu0 %v2806
    %2854 = vmatpush.bf16.msra.mxu0 %v2804
    %2855 = vmatpush.bf16.msra.mxu0 %v2802
    %2856 = vmatpush.bf16.msra.mxu0 %v2800
    %2857 = vmatpush.bf16.msra.mxu0 %v2798
    %2858 = vmatpush.bf16.msra.mxu0 %v2796
    %2859 = vmatpush.bf16.msra.mxu0 %v2794
    %2860 = vmatpush.bf16.msra.mxu0 %v2792
    %2861 = vmatmul.bf16.gmra.mxu0 %v2640
    %v2862 = vpop.f32.mrf.mxu0
    %v2863 = vadd.f32 %v2850, %v2862
    %v2864 = vpop.f32.mrf.mxu0
    %2865 = vdwg.mxu0
    %2866 = vmatpush.bf16.msra.mxu0 %v2791
    %2867 = vmatpush.bf16.msra.mxu0 %v2789
    %2868 = vmatpush.bf16.msra.mxu0 %v2787
    %2869 = vmatpush.bf16.msra.mxu0 %v2785
    %2870 = vmatpush.bf16.msra.mxu0 %v2783
    %2871 = vmatpush.bf16.msra.mxu0 %v2781
    %2872 = vmatpush.bf16.msra.mxu0 %v2779
    %2873 = vmatpush.bf16.msra.mxu0 %v2777
    %2874 = vmatmul.bf16.gmra.mxu0 %v2639
    %v2875 = vpop.f32.mrf.mxu0
    %v2876 = vadd.f32 %v2679, %v2875
    %v2877 = vpop.f32.mrf.mxu0
    %2878 = vdwg.mxu0
    %2879 = vmatpush.bf16.msra.mxu0 %v2807
    %2880 = vmatpush.bf16.msra.mxu0 %v2805
    %2881 = vmatpush.bf16.msra.mxu0 %v2803
    %2882 = vmatpush.bf16.msra.mxu0 %v2801
    %2883 = vmatpush.bf16.msra.mxu0 %v2799
    %2884 = vmatpush.bf16.msra.mxu0 %v2797
    %2885 = vmatpush.bf16.msra.mxu0 %v2795
    %2886 = vmatpush.bf16.msra.mxu0 %v2793
    %2887 = vmatmul.bf16.gmra.mxu0 %v2640
    %v2888 = vpop.f32.mrf.mxu0
    %v2889 = vadd.f32 %v2876, %v2888
    %v2890 = vpop.f32.mrf.mxu0
    %2891 = vdwg.mxu0
    %v2892 = vmax.f32 %v2863, 0.0
    %v2893 = vmax.f32 %v2889, 0.0
    %v2894 = vpack.c.bf16 %v2892, %v2892
    %v2895 = vpack.c.bf16 %v2893, %v2893
    %s2896 = scalar_lea.vmem %s6, 256
    %v2897 = vld [vmem:[%s2896] sm:$0xf]
    %v2898 = vld [vmem:[%s2896 + $0x4] sm:$0xf]
    %v2899 = vld [vmem:[%s2896 + $0x8] sm:$0xf]
    %v2900 = vld [vmem:[%s2896 + $0xc] sm:$0xf]
    %v2901 = vld [vmem:[%s2896 + $0x10] sm:$0xf]
    %v2902 = vld [vmem:[%s2896 + $0x14] sm:$0xf]
    %v2903 = vld [vmem:[%s2896 + $0x18] sm:$0xf]
    %v2904 = vld [vmem:[%s2896 + $0x1c] sm:$0xf]
    %v2905 = vld [vmem:[%s2896 + $0x20] sm:$0xf]
    %v2906 = vld [vmem:[%s2896 + $0x24] sm:$0xf]
    %v2907 = vld [vmem:[%s2896 + $0x28] sm:$0xf]
    %v2908 = vld [vmem:[%s2896 + $0x2c] sm:$0xf]
    %v2909 = vld [vmem:[%s2896 + $0x30] sm:$0xf]
    %v2910 = vld [vmem:[%s2896 + $0x34] sm:$0xf]
    %v2911 = vld [vmem:[%s2896 + $0x38] sm:$0xf]
    %v2912 = vld [vmem:[%s2896 + $0x3c] sm:$0xf]
    %v2913 = vld [vmem:[%s2896 + $0x40] sm:$0xf]
    %v2914 = vld [vmem:[%s2896 + $0x44] sm:$0xf]
    %v2915 = vld [vmem:[%s2896 + $0x48] sm:$0xf]
    %v2916 = vld [vmem:[%s2896 + $0x4c] sm:$0xf]
    %v2917 = vld [vmem:[%s2896 + $0x50] sm:$0xf]
    %v2918 = vld [vmem:[%s2896 + $0x54] sm:$0xf]
    %v2919 = vld [vmem:[%s2896 + $0x58] sm:$0xf]
    %v2920 = vld [vmem:[%s2896 + $0x5c] sm:$0xf]
    %v2921 = vld [vmem:[%s2896 + $0x60] sm:$0xf]
    %v2922 = vld [vmem:[%s2896 + $0x64] sm:$0xf]
    %v2923 = vld [vmem:[%s2896 + $0x68] sm:$0xf]
    %v2924 = vld [vmem:[%s2896 + $0x6c] sm:$0xf]
    %v2925 = vld [vmem:[%s2896 + $0x70] sm:$0xf]
    %v2926 = vld [vmem:[%s2896 + $0x74] sm:$0xf]
    %v2927 = vld [vmem:[%s2896 + $0x78] sm:$0xf]
    %v2928 = vld [vmem:[%s2896 + $0x7c] sm:$0xf]
    %s2929 = scalar_lea.vmem %s7, 2
    %v2930 = vld [vmem:[%s2929] sm:$0x1]
    %v2932 = vperm.slane %v2930, 0
    %v2966 = vunpack.c.l.b16 %v2897
    %v2967 = vunpack.c.l.b16 %v2898
    %v2968 = vunpack.c.l.b16 %v2899
    %v2969 = vunpack.c.l.b16 %v2900
    %v2970 = vunpack.c.l.b16 %v2901
    %v2971 = vunpack.c.l.b16 %v2902
    %v2972 = vunpack.c.l.b16 %v2903
    %v2973 = vunpack.c.l.b16 %v2904
    %v2974 = vunpack.c.l.b16 %v2905
    %v2975 = vunpack.c.l.b16 %v2906
    %v2976 = vunpack.c.l.b16 %v2907
    %v2977 = vunpack.c.l.b16 %v2908
    %v2978 = vunpack.c.l.b16 %v2909
    %v2979 = vunpack.c.l.b16 %v2910
    %v2980 = vunpack.c.l.b16 %v2911
    %v2981 = vunpack.c.l.b16 %v2912
    %v2982 = vunpack.c.l.b16 %v2913
    %v2983 = vunpack.c.l.b16 %v2914
    %v2984 = vunpack.c.l.b16 %v2915
    %v2985 = vunpack.c.l.b16 %v2916
    %v2986 = vunpack.c.l.b16 %v2917
    %v2987 = vunpack.c.l.b16 %v2918
    %v2988 = vunpack.c.l.b16 %v2919
    %v2989 = vunpack.c.l.b16 %v2920
    %v2990 = vunpack.c.l.b16 %v2921
    %v2991 = vunpack.c.l.b16 %v2922
    %v2992 = vunpack.c.l.b16 %v2923
    %v2993 = vunpack.c.l.b16 %v2924
    %v2994 = vunpack.c.l.b16 %v2925
    %v2995 = vunpack.c.l.b16 %v2926
    %v2996 = vunpack.c.l.b16 %v2927
    %v2997 = vunpack.c.l.b16 %v2928
    %v2998 = vpack.c.b16 %v2967, %v2966
    %v2999 = vpack.c.b16 %v2969, %v2968
    %v3000 = vpack.c.b16 %v2971, %v2970
    %v3001 = vpack.c.b16 %v2973, %v2972
    %v3002 = vpack.c.b16 %v2975, %v2974
    %v3003 = vpack.c.b16 %v2977, %v2976
    %v3004 = vpack.c.b16 %v2979, %v2978
    %v3005 = vpack.c.b16 %v2981, %v2980
    %v3006 = vpack.c.b16 %v2983, %v2982
    %v3007 = vpack.c.b16 %v2985, %v2984
    %v3008 = vpack.c.b16 %v2987, %v2986
    %v3009 = vpack.c.b16 %v2989, %v2988
    %v3010 = vpack.c.b16 %v2991, %v2990
    %v3011 = vpack.c.b16 %v2993, %v2992
    %v3012 = vpack.c.b16 %v2995, %v2994
    %v3013 = vpack.c.b16 %v2997, %v2996
    %3030 = vmatpush.bf16.msra.mxu0 %v3005
    %3031 = vmatpush.bf16.msra.mxu0 %v3004
    %3032 = vmatpush.bf16.msra.mxu0 %v3003
    %3033 = vmatpush.bf16.msra.mxu0 %v3002
    %3034 = vmatpush.bf16.msra.mxu0 %v3001
    %3035 = vmatpush.bf16.msra.mxu0 %v3000
    %3036 = vmatpush.bf16.msra.mxu0 %v2999
    %3037 = vmatpush.bf16.msra.mxu0 %v2998
    %3038 = vmatmul.bf16.gmra.mxu0 %v2894
    %v3039 = vpop.f32.mrf.mxu0
    %v3040 = vadd.f32 %v2932, %v3039
    %v3041 = vpop.f32.mrf.mxu0
    %3042 = vdwg.mxu0
    %3043 = vmatpush.bf16.msra.mxu0 %v3013
    %3044 = vmatpush.bf16.msra.mxu0 %v3012
    %3045 = vmatpush.bf16.msra.mxu0 %v3011
    %3046 = vmatpush.bf16.msra.mxu0 %v3010
    %3047 = vmatpush.bf16.msra.mxu0 %v3009
    %3048 = vmatpush.bf16.msra.mxu0 %v3008
    %3049 = vmatpush.bf16.msra.mxu0 %v3007
    %3050 = vmatpush.bf16.msra.mxu0 %v3006
    %3051 = vmatmul.bf16.gmra.mxu0 %v2895
    %v3052 = vpop.f32.mrf.mxu0
    %v3053 = vadd.f32 %v3040, %v3052
    %v3054 = vpop.f32.mrf.mxu0
    %3055 = vdwg.mxu0
    %v3056 = vsub.f32 %v2062, %v3053
    %v3057 = vadd.f32 %v2063, %v3053
    %s3058 = scalar_lea.vmem %s5, 24
    %v3059 = vld [vmem:[%s3058] sm:$0xff]
    %s3060 = scalar_lea.vmem %s1, 96
    %v3061 = vld [vmem:[%s3060] sm:$0xff]
    %v3062 = vld [vmem:[%s3060 + $0x8] sm:$0xff]
    %v3063 = vld [vmem:[%s3060 + $0x10] sm:$0x3]
    %v3064 = vld [vmem:[%s3060 + $0x18] sm:$0x3]
    %v3066 = vperm.slane %v3059, 0
    %v3067 = vperm.slane %v3059, 4
    %v3070 = vperm.slane %v3066, 0
    %v3071 = vperm.slane %v3067, 0
    %v3073 = vsel %vm93, %v3056, 0
    %v3076 = vsel %vm97, %v3063, 0
    %v3079 = vsel %vm97, %v3064, 0
    %3081 = vmatpush.msra.mxu0 0.0
    %3082 = vmatpush.msra.mxu0 0.0
    %3083 = vmatpush.msra.mxu0 0.0
    %3084 = vmatpush.msra.mxu0 0.0
    %3085 = vmatpush.msra.mxu0 0.0
    %3086 = vmatpush.msra.mxu0 0.0
    %3087 = vmatpush.msra.mxu0 0.0
    %3088 = vmatpush.msra.mxu0 0.0
    %3089 = vmatpush.msra.mxu0 0.0
    %3090 = vmatpush.msra.mxu0 0.0
    %3091 = vmatpush.msra.mxu0 0.0
    %3092 = vmatpush.msra.mxu0 0.0
    %3093 = vmatpush.msra.mxu0 0.0
    %3094 = vmatpush.msra.mxu0 0.0
    %3095 = vmatpush.msra.mxu0 %v3076
    %3096 = vmatpush.msra.mxu0 %v3061
    %3097 = vmatmul.f32.gmra.mxu0 %v3073
    %v3098 = vpop.f32.mrf.mxu0
    %v3099 = vadd.f32 %v3070, %v3098
    %3100 = vdwg.mxu0
    %3101 = vmatpush.msra.mxu0 0.0
    %3102 = vmatpush.msra.mxu0 0.0
    %3103 = vmatpush.msra.mxu0 0.0
    %3104 = vmatpush.msra.mxu0 0.0
    %3105 = vmatpush.msra.mxu0 0.0
    %3106 = vmatpush.msra.mxu0 0.0
    %3107 = vmatpush.msra.mxu0 0.0
    %3108 = vmatpush.msra.mxu0 0.0
    %3109 = vmatpush.msra.mxu0 0.0
    %3110 = vmatpush.msra.mxu0 0.0
    %3111 = vmatpush.msra.mxu0 0.0
    %3112 = vmatpush.msra.mxu0 0.0
    %3113 = vmatpush.msra.mxu0 0.0
    %3114 = vmatpush.msra.mxu0 0.0
    %3115 = vmatpush.msra.mxu0 %v3079
    %3116 = vmatpush.msra.mxu0 %v3062
    %3117 = vmatmul.f32.gmra.mxu0 %v3073
    %v3118 = vpop.f32.mrf.mxu0
    %v3119 = vadd.f32 %v3071, %v3118
    %3120 = vdwg.mxu0
    %v3121 = vmax.f32 %v3099, 0.0
    %v3122 = vmax.f32 %v3119, 0.0
    %v3123 = vpack.c.bf16 %v3121, %v3121
    %v3124 = vpack.c.bf16 %v3122, %v3122
    %s3125 = scalar_lea.vmem [#allocation2], 768
    %v3126 = vld [vmem:[%s3125] sm:$0xff]
    %v3127 = vld [vmem:[%s3125 + $0x8] sm:$0xff]
    %v3128 = vld [vmem:[%s3125 + $0x10] sm:$0xff]
    %v3129 = vld [vmem:[%s3125 + $0x18] sm:$0xff]
    %v3130 = vld [vmem:[%s3125 + $0x20] sm:$0xff]
    %v3131 = vld [vmem:[%s3125 + $0x28] sm:$0xff]
    %v3132 = vld [vmem:[%s3125 + $0x30] sm:$0xff]
    %v3133 = vld [vmem:[%s3125 + $0x38] sm:$0xff]
    %v3134 = vld [vmem:[%s3125 + $0x40] sm:$0xff]
    %v3135 = vld [vmem:[%s3125 + $0x48] sm:$0xff]
    %v3136 = vld [vmem:[%s3125 + $0x50] sm:$0xff]
    %v3137 = vld [vmem:[%s3125 + $0x58] sm:$0xff]
    %v3138 = vld [vmem:[%s3125 + $0x60] sm:$0xff]
    %v3139 = vld [vmem:[%s3125 + $0x68] sm:$0xff]
    %v3140 = vld [vmem:[%s3125 + $0x70] sm:$0xff]
    %v3141 = vld [vmem:[%s3125 + $0x78] sm:$0xff]
    %v3142 = vld [vmem:[%s3125 + $0x80] sm:$0xff]
    %v3143 = vld [vmem:[%s3125 + $0x88] sm:$0xff]
    %v3144 = vld [vmem:[%s3125 + $0x90] sm:$0xff]
    %v3145 = vld [vmem:[%s3125 + $0x98] sm:$0xff]
    %v3146 = vld [vmem:[%s3125 + $0xa0] sm:$0xff]
    %v3147 = vld [vmem:[%s3125 + $0xa8] sm:$0xff]
    %v3148 = vld [vmem:[%s3125 + $0xb0] sm:$0xff]
    %v3149 = vld [vmem:[%s3125 + $0xb8] sm:$0xff]
    %v3150 = vld [vmem:[%s3125 + $0xc0] sm:$0xff]
    %v3151 = vld [vmem:[%s3125 + $0xc8] sm:$0xff]
    %v3152 = vld [vmem:[%s3125 + $0xd0] sm:$0xff]
    %v3153 = vld [vmem:[%s3125 + $0xd8] sm:$0xff]
    %v3154 = vld [vmem:[%s3125 + $0xe0] sm:$0xff]
    %v3155 = vld [vmem:[%s3125 + $0xe8] sm:$0xff]
    %v3156 = vld [vmem:[%s3125 + $0xf0] sm:$0xff]
    %v3157 = vld [vmem:[%s3125 + $0xf8] sm:$0xff]
    %v3158 = vperm.slane %v3059, 1
    %v3159 = vperm.slane %v3059, 5
    %v3162 = vperm.slane %v3158, 1
    %v3163 = vperm.slane %v3159, 1
    %v3196 = vunpack.c.l.b16 %v3126
    %v3197 = vunpack.c.h.b16 %v3126
    %v3198 = vunpack.c.l.b16 %v3127
    %v3199 = vunpack.c.h.b16 %v3127
    %v3200 = vunpack.c.l.b16 %v3128
    %v3201 = vunpack.c.h.b16 %v3128
    %v3202 = vunpack.c.l.b16 %v3129
    %v3203 = vunpack.c.h.b16 %v3129
    %v3204 = vunpack.c.l.b16 %v3130
    %v3205 = vunpack.c.h.b16 %v3130
    %v3206 = vunpack.c.l.b16 %v3131
    %v3207 = vunpack.c.h.b16 %v3131
    %v3208 = vunpack.c.l.b16 %v3132
    %v3209 = vunpack.c.h.b16 %v3132
    %v3210 = vunpack.c.l.b16 %v3133
    %v3211 = vunpack.c.h.b16 %v3133
    %v3212 = vunpack.c.l.b16 %v3134
    %v3213 = vunpack.c.h.b16 %v3134
    %v3214 = vunpack.c.l.b16 %v3135
    %v3215 = vunpack.c.h.b16 %v3135
    %v3216 = vunpack.c.l.b16 %v3136
    %v3217 = vunpack.c.h.b16 %v3136
    %v3218 = vunpack.c.l.b16 %v3137
    %v3219 = vunpack.c.h.b16 %v3137
    %v3220 = vunpack.c.l.b16 %v3138
    %v3221 = vunpack.c.h.b16 %v3138
    %v3222 = vunpack.c.l.b16 %v3139
    %v3223 = vunpack.c.h.b16 %v3139
    %v3224 = vunpack.c.l.b16 %v3140
    %v3225 = vunpack.c.h.b16 %v3140
    %v3226 = vunpack.c.l.b16 %v3141
    %v3227 = vunpack.c.h.b16 %v3141
    %v3228 = vunpack.c.l.b16 %v3142
    %v3229 = vunpack.c.h.b16 %v3142
    %v3230 = vunpack.c.l.b16 %v3143
    %v3231 = vunpack.c.h.b16 %v3143
    %v3232 = vunpack.c.l.b16 %v3144
    %v3233 = vunpack.c.h.b16 %v3144
    %v3234 = vunpack.c.l.b16 %v3145
    %v3235 = vunpack.c.h.b16 %v3145
    %v3236 = vunpack.c.l.b16 %v3146
    %v3237 = vunpack.c.h.b16 %v3146
    %v3238 = vunpack.c.l.b16 %v3147
    %v3239 = vunpack.c.h.b16 %v3147
    %v3240 = vunpack.c.l.b16 %v3148
    %v3241 = vunpack.c.h.b16 %v3148
    %v3242 = vunpack.c.l.b16 %v3149
    %v3243 = vunpack.c.h.b16 %v3149
    %v3244 = vunpack.c.l.b16 %v3150
    %v3245 = vunpack.c.h.b16 %v3150
    %v3246 = vunpack.c.l.b16 %v3151
    %v3247 = vunpack.c.h.b16 %v3151
    %v3248 = vunpack.c.l.b16 %v3152
    %v3249 = vunpack.c.h.b16 %v3152
    %v3250 = vunpack.c.l.b16 %v3153
    %v3251 = vunpack.c.h.b16 %v3153
    %v3252 = vunpack.c.l.b16 %v3154
    %v3253 = vunpack.c.h.b16 %v3154
    %v3254 = vunpack.c.l.b16 %v3155
    %v3255 = vunpack.c.h.b16 %v3155
    %v3256 = vunpack.c.l.b16 %v3156
    %v3257 = vunpack.c.h.b16 %v3156
    %v3258 = vunpack.c.l.b16 %v3157
    %v3259 = vunpack.c.h.b16 %v3157
    %v3260 = vpack.c.b16 %v3198, %v3196
    %v3261 = vpack.c.b16 %v3199, %v3197
    %v3262 = vpack.c.b16 %v3202, %v3200
    %v3263 = vpack.c.b16 %v3203, %v3201
    %v3264 = vpack.c.b16 %v3206, %v3204
    %v3265 = vpack.c.b16 %v3207, %v3205
    %v3266 = vpack.c.b16 %v3210, %v3208
    %v3267 = vpack.c.b16 %v3211, %v3209
    %v3268 = vpack.c.b16 %v3214, %v3212
    %v3269 = vpack.c.b16 %v3215, %v3213
    %v3270 = vpack.c.b16 %v3218, %v3216
    %v3271 = vpack.c.b16 %v3219, %v3217
    %v3272 = vpack.c.b16 %v3222, %v3220
    %v3273 = vpack.c.b16 %v3223, %v3221
    %v3274 = vpack.c.b16 %v3226, %v3224
    %v3275 = vpack.c.b16 %v3227, %v3225
    %v3276 = vpack.c.b16 %v3230, %v3228
    %v3277 = vpack.c.b16 %v3231, %v3229
    %v3278 = vpack.c.b16 %v3234, %v3232
    %v3279 = vpack.c.b16 %v3235, %v3233
    %v3280 = vpack.c.b16 %v3238, %v3236
    %v3281 = vpack.c.b16 %v3239, %v3237
    %v3282 = vpack.c.b16 %v3242, %v3240
    %v3283 = vpack.c.b16 %v3243, %v3241
    %v3284 = vpack.c.b16 %v3246, %v3244
    %v3285 = vpack.c.b16 %v3247, %v3245
    %v3286 = vpack.c.b16 %v3250, %v3248
    %v3287 = vpack.c.b16 %v3251, %v3249
    %v3288 = vpack.c.b16 %v3254, %v3252
    %v3289 = vpack.c.b16 %v3255, %v3253
    %v3290 = vpack.c.b16 %v3258, %v3256
    %v3291 = vpack.c.b16 %v3259, %v3257
    %3324 = vmatpush.bf16.msra.mxu0 %v3274
    %3325 = vmatpush.bf16.msra.mxu0 %v3272
    %3326 = vmatpush.bf16.msra.mxu0 %v3270
    %3327 = vmatpush.bf16.msra.mxu0 %v3268
    %3328 = vmatpush.bf16.msra.mxu0 %v3266
    %3329 = vmatpush.bf16.msra.mxu0 %v3264
    %3330 = vmatpush.bf16.msra.mxu0 %v3262
    %3331 = vmatpush.bf16.msra.mxu0 %v3260
    %3332 = vmatmul.bf16.gmra.mxu0 %v3123
    %v3333 = vpop.f32.mrf.mxu0
    %v3334 = vadd.f32 %v3162, %v3333
    %v3335 = vpop.f32.mrf.mxu0
    %3336 = vdwg.mxu0
    %3337 = vmatpush.bf16.msra.mxu0 %v3290
    %3338 = vmatpush.bf16.msra.mxu0 %v3288
    %3339 = vmatpush.bf16.msra.mxu0 %v3286
    %3340 = vmatpush.bf16.msra.mxu0 %v3284
    %3341 = vmatpush.bf16.msra.mxu0 %v3282
    %3342 = vmatpush.bf16.msra.mxu0 %v3280
    %3343 = vmatpush.bf16.msra.mxu0 %v3278
    %3344 = vmatpush.bf16.msra.mxu0 %v3276
    %3345 = vmatmul.bf16.gmra.mxu0 %v3124
    %v3346 = vpop.f32.mrf.mxu0
    %v3347 = vadd.f32 %v3334, %v3346
    %v3348 = vpop.f32.mrf.mxu0
    %3349 = vdwg.mxu0
    %3350 = vmatpush.bf16.msra.mxu0 %v3275
    %3351 = vmatpush.bf16.msra.mxu0 %v3273
    %3352 = vmatpush.bf16.msra.mxu0 %v3271
    %3353 = vmatpush.bf16.msra.mxu0 %v3269
    %3354 = vmatpush.bf16.msra.mxu0 %v3267
    %3355 = vmatpush.bf16.msra.mxu0 %v3265
    %3356 = vmatpush.bf16.msra.mxu0 %v3263
    %3357 = vmatpush.bf16.msra.mxu0 %v3261
    %3358 = vmatmul.bf16.gmra.mxu0 %v3123
    %v3359 = vpop.f32.mrf.mxu0
    %v3360 = vadd.f32 %v3163, %v3359
    %v3361 = vpop.f32.mrf.mxu0
    %3362 = vdwg.mxu0
    %3363 = vmatpush.bf16.msra.mxu0 %v3291
    %3364 = vmatpush.bf16.msra.mxu0 %v3289
    %3365 = vmatpush.bf16.msra.mxu0 %v3287
    %3366 = vmatpush.bf16.msra.mxu0 %v3285
    %3367 = vmatpush.bf16.msra.mxu0 %v3283
    %3368 = vmatpush.bf16.msra.mxu0 %v3281
    %3369 = vmatpush.bf16.msra.mxu0 %v3279
    %3370 = vmatpush.bf16.msra.mxu0 %v3277
    %3371 = vmatmul.bf16.gmra.mxu0 %v3124
    %v3372 = vpop.f32.mrf.mxu0
    %v3373 = vadd.f32 %v3360, %v3372
    %v3374 = vpop.f32.mrf.mxu0
    %3375 = vdwg.mxu0
    %v3376 = vmax.f32 %v3347, 0.0
    %v3377 = vmax.f32 %v3373, 0.0
    %v3378 = vpack.c.bf16 %v3376, %v3376
    %v3379 = vpack.c.bf16 %v3377, %v3377
    %s3380 = scalar_lea.vmem [#allocation5], 768
    %v3381 = vld [vmem:[%s3380] sm:$0xff]
    %v3382 = vld [vmem:[%s3380 + $0x8] sm:$0xff]
    %v3383 = vld [vmem:[%s3380 + $0x10] sm:$0xff]
    %v3384 = vld [vmem:[%s3380 + $0x18] sm:$0xff]
    %v3385 = vld [vmem:[%s3380 + $0x20] sm:$0xff]
    %v3386 = vld [vmem:[%s3380 + $0x28] sm:$0xff]
    %v3387 = vld [vmem:[%s3380 + $0x30] sm:$0xff]
    %v3388 = vld [vmem:[%s3380 + $0x38] sm:$0xff]
    %v3389 = vld [vmem:[%s3380 + $0x40] sm:$0xff]
    %v3390 = vld [vmem:[%s3380 + $0x48] sm:$0xff]
    %v3391 = vld [vmem:[%s3380 + $0x50] sm:$0xff]
    %v3392 = vld [vmem:[%s3380 + $0x58] sm:$0xff]
    %v3393 = vld [vmem:[%s3380 + $0x60] sm:$0xff]
    %v3394 = vld [vmem:[%s3380 + $0x68] sm:$0xff]
    %v3395 = vld [vmem:[%s3380 + $0x70] sm:$0xff]
    %v3396 = vld [vmem:[%s3380 + $0x78] sm:$0xff]
    %v3397 = vld [vmem:[%s3380 + $0x80] sm:$0xff]
    %v3398 = vld [vmem:[%s3380 + $0x88] sm:$0xff]
    %v3399 = vld [vmem:[%s3380 + $0x90] sm:$0xff]
    %v3400 = vld [vmem:[%s3380 + $0x98] sm:$0xff]
    %v3401 = vld [vmem:[%s3380 + $0xa0] sm:$0xff]
    %v3402 = vld [vmem:[%s3380 + $0xa8] sm:$0xff]
    %v3403 = vld [vmem:[%s3380 + $0xb0] sm:$0xff]
    %v3404 = vld [vmem:[%s3380 + $0xb8] sm:$0xff]
    %v3405 = vld [vmem:[%s3380 + $0xc0] sm:$0xff]
    %v3406 = vld [vmem:[%s3380 + $0xc8] sm:$0xff]
    %v3407 = vld [vmem:[%s3380 + $0xd0] sm:$0xff]
    %v3408 = vld [vmem:[%s3380 + $0xd8] sm:$0xff]
    %v3409 = vld [vmem:[%s3380 + $0xe0] sm:$0xff]
    %v3410 = vld [vmem:[%s3380 + $0xe8] sm:$0xff]
    %v3411 = vld [vmem:[%s3380 + $0xf0] sm:$0xff]
    %v3412 = vld [vmem:[%s3380 + $0xf8] sm:$0xff]
    %v3413 = vperm.slane %v3059, 2
    %v3414 = vperm.slane %v3059, 6
    %v3417 = vperm.slane %v3413, 2
    %v3418 = vperm.slane %v3414, 2
    %v3451 = vunpack.c.l.b16 %v3381
    %v3452 = vunpack.c.h.b16 %v3381
    %v3453 = vunpack.c.l.b16 %v3382
    %v3454 = vunpack.c.h.b16 %v3382
    %v3455 = vunpack.c.l.b16 %v3383
    %v3456 = vunpack.c.h.b16 %v3383
    %v3457 = vunpack.c.l.b16 %v3384
    %v3458 = vunpack.c.h.b16 %v3384
    %v3459 = vunpack.c.l.b16 %v3385
    %v3460 = vunpack.c.h.b16 %v3385
    %v3461 = vunpack.c.l.b16 %v3386
    %v3462 = vunpack.c.h.b16 %v3386
    %v3463 = vunpack.c.l.b16 %v3387
    %v3464 = vunpack.c.h.b16 %v3387
    %v3465 = vunpack.c.l.b16 %v3388
    %v3466 = vunpack.c.h.b16 %v3388
    %v3467 = vunpack.c.l.b16 %v3389
    %v3468 = vunpack.c.h.b16 %v3389
    %v3469 = vunpack.c.l.b16 %v3390
    %v3470 = vunpack.c.h.b16 %v3390
    %v3471 = vunpack.c.l.b16 %v3391
    %v3472 = vunpack.c.h.b16 %v3391
    %v3473 = vunpack.c.l.b16 %v3392
    %v3474 = vunpack.c.h.b16 %v3392
    %v3475 = vunpack.c.l.b16 %v3393
    %v3476 = vunpack.c.h.b16 %v3393
    %v3477 = vunpack.c.l.b16 %v3394
    %v3478 = vunpack.c.h.b16 %v3394
    %v3479 = vunpack.c.l.b16 %v3395
    %v3480 = vunpack.c.h.b16 %v3395
    %v3481 = vunpack.c.l.b16 %v3396
    %v3482 = vunpack.c.h.b16 %v3396
    %v3483 = vunpack.c.l.b16 %v3397
    %v3484 = vunpack.c.h.b16 %v3397
    %v3485 = vunpack.c.l.b16 %v3398
    %v3486 = vunpack.c.h.b16 %v3398
    %v3487 = vunpack.c.l.b16 %v3399
    %v3488 = vunpack.c.h.b16 %v3399
    %v3489 = vunpack.c.l.b16 %v3400
    %v3490 = vunpack.c.h.b16 %v3400
    %v3491 = vunpack.c.l.b16 %v3401
    %v3492 = vunpack.c.h.b16 %v3401
    %v3493 = vunpack.c.l.b16 %v3402
    %v3494 = vunpack.c.h.b16 %v3402
    %v3495 = vunpack.c.l.b16 %v3403
    %v3496 = vunpack.c.h.b16 %v3403
    %v3497 = vunpack.c.l.b16 %v3404
    %v3498 = vunpack.c.h.b16 %v3404
    %v3499 = vunpack.c.l.b16 %v3405
    %v3500 = vunpack.c.h.b16 %v3405
    %v3501 = vunpack.c.l.b16 %v3406
    %v3502 = vunpack.c.h.b16 %v3406
    %v3503 = vunpack.c.l.b16 %v3407
    %v3504 = vunpack.c.h.b16 %v3407
    %v3505 = vunpack.c.l.b16 %v3408
    %v3506 = vunpack.c.h.b16 %v3408
    %v3507 = vunpack.c.l.b16 %v3409
    %v3508 = vunpack.c.h.b16 %v3409
    %v3509 = vunpack.c.l.b16 %v3410
    %v3510 = vunpack.c.h.b16 %v3410
    %v3511 = vunpack.c.l.b16 %v3411
    %v3512 = vunpack.c.h.b16 %v3411
    %v3513 = vunpack.c.l.b16 %v3412
    %v3514 = vunpack.c.h.b16 %v3412
    %v3515 = vpack.c.b16 %v3453, %v3451
    %v3516 = vpack.c.b16 %v3454, %v3452
    %v3517 = vpack.c.b16 %v3457, %v3455
    %v3518 = vpack.c.b16 %v3458, %v3456
    %v3519 = vpack.c.b16 %v3461, %v3459
    %v3520 = vpack.c.b16 %v3462, %v3460
    %v3521 = vpack.c.b16 %v3465, %v3463
    %v3522 = vpack.c.b16 %v3466, %v3464
    %v3523 = vpack.c.b16 %v3469, %v3467
    %v3524 = vpack.c.b16 %v3470, %v3468
    %v3525 = vpack.c.b16 %v3473, %v3471
    %v3526 = vpack.c.b16 %v3474, %v3472
    %v3527 = vpack.c.b16 %v3477, %v3475
    %v3528 = vpack.c.b16 %v3478, %v3476
    %v3529 = vpack.c.b16 %v3481, %v3479
    %v3530 = vpack.c.b16 %v3482, %v3480
    %v3531 = vpack.c.b16 %v3485, %v3483
    %v3532 = vpack.c.b16 %v3486, %v3484
    %v3533 = vpack.c.b16 %v3489, %v3487
    %v3534 = vpack.c.b16 %v3490, %v3488
    %v3535 = vpack.c.b16 %v3493, %v3491
    %v3536 = vpack.c.b16 %v3494, %v3492
    %v3537 = vpack.c.b16 %v3497, %v3495
    %v3538 = vpack.c.b16 %v3498, %v3496
    %v3539 = vpack.c.b16 %v3501, %v3499
    %v3540 = vpack.c.b16 %v3502, %v3500
    %v3541 = vpack.c.b16 %v3505, %v3503
    %v3542 = vpack.c.b16 %v3506, %v3504
    %v3543 = vpack.c.b16 %v3509, %v3507
    %v3544 = vpack.c.b16 %v3510, %v3508
    %v3545 = vpack.c.b16 %v3513, %v3511
    %v3546 = vpack.c.b16 %v3514, %v3512
    %3579 = vmatpush.bf16.msra.mxu0 %v3529
    %3580 = vmatpush.bf16.msra.mxu0 %v3527
    %3581 = vmatpush.bf16.msra.mxu0 %v3525
    %3582 = vmatpush.bf16.msra.mxu0 %v3523
    %3583 = vmatpush.bf16.msra.mxu0 %v3521
    %3584 = vmatpush.bf16.msra.mxu0 %v3519
    %3585 = vmatpush.bf16.msra.mxu0 %v3517
    %3586 = vmatpush.bf16.msra.mxu0 %v3515
    %3587 = vmatmul.bf16.gmra.mxu0 %v3378
    %v3588 = vpop.f32.mrf.mxu0
    %v3589 = vadd.f32 %v3417, %v3588
    %v3590 = vpop.f32.mrf.mxu0
    %3591 = vdwg.mxu0
    %3592 = vmatpush.bf16.msra.mxu0 %v3545
    %3593 = vmatpush.bf16.msra.mxu0 %v3543
    %3594 = vmatpush.bf16.msra.mxu0 %v3541
    %3595 = vmatpush.bf16.msra.mxu0 %v3539
    %3596 = vmatpush.bf16.msra.mxu0 %v3537
    %3597 = vmatpush.bf16.msra.mxu0 %v3535
    %3598 = vmatpush.bf16.msra.mxu0 %v3533
    %3599 = vmatpush.bf16.msra.mxu0 %v3531
    %3600 = vmatmul.bf16.gmra.mxu0 %v3379
    %v3601 = vpop.f32.mrf.mxu0
    %v3602 = vadd.f32 %v3589, %v3601
    %v3603 = vpop.f32.mrf.mxu0
    %3604 = vdwg.mxu0
    %3605 = vmatpush.bf16.msra.mxu0 %v3530
    %3606 = vmatpush.bf16.msra.mxu0 %v3528
    %3607 = vmatpush.bf16.msra.mxu0 %v3526
    %3608 = vmatpush.bf16.msra.mxu0 %v3524
    %3609 = vmatpush.bf16.msra.mxu0 %v3522
    %3610 = vmatpush.bf16.msra.mxu0 %v3520
    %3611 = vmatpush.bf16.msra.mxu0 %v3518
    %3612 = vmatpush.bf16.msra.mxu0 %v3516
    %3613 = vmatmul.bf16.gmra.mxu0 %v3378
    %v3614 = vpop.f32.mrf.mxu0
    %v3615 = vadd.f32 %v3418, %v3614
    %v3616 = vpop.f32.mrf.mxu0
    %3617 = vdwg.mxu0
    %3618 = vmatpush.bf16.msra.mxu0 %v3546
    %3619 = vmatpush.bf16.msra.mxu0 %v3544
    %3620 = vmatpush.bf16.msra.mxu0 %v3542
    %3621 = vmatpush.bf16.msra.mxu0 %v3540
    %3622 = vmatpush.bf16.msra.mxu0 %v3538
    %3623 = vmatpush.bf16.msra.mxu0 %v3536
    %3624 = vmatpush.bf16.msra.mxu0 %v3534
    %3625 = vmatpush.bf16.msra.mxu0 %v3532
    %3626 = vmatmul.bf16.gmra.mxu0 %v3379
    %v3627 = vpop.f32.mrf.mxu0
    %v3628 = vadd.f32 %v3615, %v3627
    %v3629 = vpop.f32.mrf.mxu0
    %3630 = vdwg.mxu0
    %v3631 = vmax.f32 %v3602, 0.0
    %v3632 = vmax.f32 %v3628, 0.0
    %v3633 = vpack.c.bf16 %v3631, %v3631
    %v3634 = vpack.c.bf16 %v3632, %v3632
    %s3635 = scalar_lea.vmem [#allocation7], 768
    %v3636 = vld [vmem:[%s3635] sm:$0xff]
    %v3637 = vld [vmem:[%s3635 + $0x8] sm:$0xff]
    %v3638 = vld [vmem:[%s3635 + $0x10] sm:$0xff]
    %v3639 = vld [vmem:[%s3635 + $0x18] sm:$0xff]
    %v3640 = vld [vmem:[%s3635 + $0x20] sm:$0xff]
    %v3641 = vld [vmem:[%s3635 + $0x28] sm:$0xff]
    %v3642 = vld [vmem:[%s3635 + $0x30] sm:$0xff]
    %v3643 = vld [vmem:[%s3635 + $0x38] sm:$0xff]
    %v3644 = vld [vmem:[%s3635 + $0x40] sm:$0xff]
    %v3645 = vld [vmem:[%s3635 + $0x48] sm:$0xff]
    %v3646 = vld [vmem:[%s3635 + $0x50] sm:$0xff]
    %v3647 = vld [vmem:[%s3635 + $0x58] sm:$0xff]
    %v3648 = vld [vmem:[%s3635 + $0x60] sm:$0xff]
    %v3649 = vld [vmem:[%s3635 + $0x68] sm:$0xff]
    %v3650 = vld [vmem:[%s3635 + $0x70] sm:$0xff]
    %v3651 = vld [vmem:[%s3635 + $0x78] sm:$0xff]
    %v3652 = vld [vmem:[%s3635 + $0x80] sm:$0xff]
    %v3653 = vld [vmem:[%s3635 + $0x88] sm:$0xff]
    %v3654 = vld [vmem:[%s3635 + $0x90] sm:$0xff]
    %v3655 = vld [vmem:[%s3635 + $0x98] sm:$0xff]
    %v3656 = vld [vmem:[%s3635 + $0xa0] sm:$0xff]
    %v3657 = vld [vmem:[%s3635 + $0xa8] sm:$0xff]
    %v3658 = vld [vmem:[%s3635 + $0xb0] sm:$0xff]
    %v3659 = vld [vmem:[%s3635 + $0xb8] sm:$0xff]
    %v3660 = vld [vmem:[%s3635 + $0xc0] sm:$0xff]
    %v3661 = vld [vmem:[%s3635 + $0xc8] sm:$0xff]
    %v3662 = vld [vmem:[%s3635 + $0xd0] sm:$0xff]
    %v3663 = vld [vmem:[%s3635 + $0xd8] sm:$0xff]
    %v3664 = vld [vmem:[%s3635 + $0xe0] sm:$0xff]
    %v3665 = vld [vmem:[%s3635 + $0xe8] sm:$0xff]
    %v3666 = vld [vmem:[%s3635 + $0xf0] sm:$0xff]
    %v3667 = vld [vmem:[%s3635 + $0xf8] sm:$0xff]
    %v3668 = vperm.slane %v3059, 3
    %v3669 = vperm.slane %v3059, 7
    %v3672 = vperm.slane %v3668, 3
    %v3673 = vperm.slane %v3669, 3
    %v3706 = vunpack.c.l.b16 %v3636
    %v3707 = vunpack.c.h.b16 %v3636
    %v3708 = vunpack.c.l.b16 %v3637
    %v3709 = vunpack.c.h.b16 %v3637
    %v3710 = vunpack.c.l.b16 %v3638
    %v3711 = vunpack.c.h.b16 %v3638
    %v3712 = vunpack.c.l.b16 %v3639
    %v3713 = vunpack.c.h.b16 %v3639
    %v3714 = vunpack.c.l.b16 %v3640
    %v3715 = vunpack.c.h.b16 %v3640
    %v3716 = vunpack.c.l.b16 %v3641
    %v3717 = vunpack.c.h.b16 %v3641
    %v3718 = vunpack.c.l.b16 %v3642
    %v3719 = vunpack.c.h.b16 %v3642
    %v3720 = vunpack.c.l.b16 %v3643
    %v3721 = vunpack.c.h.b16 %v3643
    %v3722 = vunpack.c.l.b16 %v3644
    %v3723 = vunpack.c.h.b16 %v3644
    %v3724 = vunpack.c.l.b16 %v3645
    %v3725 = vunpack.c.h.b16 %v3645
    %v3726 = vunpack.c.l.b16 %v3646
    %v3727 = vunpack.c.h.b16 %v3646
    %v3728 = vunpack.c.l.b16 %v3647
    %v3729 = vunpack.c.h.b16 %v3647
    %v3730 = vunpack.c.l.b16 %v3648
    %v3731 = vunpack.c.h.b16 %v3648
    %v3732 = vunpack.c.l.b16 %v3649
    %v3733 = vunpack.c.h.b16 %v3649
    %v3734 = vunpack.c.l.b16 %v3650
    %v3735 = vunpack.c.h.b16 %v3650
    %v3736 = vunpack.c.l.b16 %v3651
    %v3737 = vunpack.c.h.b16 %v3651
    %v3738 = vunpack.c.l.b16 %v3652
    %v3739 = vunpack.c.h.b16 %v3652
    %v3740 = vunpack.c.l.b16 %v3653
    %v3741 = vunpack.c.h.b16 %v3653
    %v3742 = vunpack.c.l.b16 %v3654
    %v3743 = vunpack.c.h.b16 %v3654
    %v3744 = vunpack.c.l.b16 %v3655
    %v3745 = vunpack.c.h.b16 %v3655
    %v3746 = vunpack.c.l.b16 %v3656
    %v3747 = vunpack.c.h.b16 %v3656
    %v3748 = vunpack.c.l.b16 %v3657
    %v3749 = vunpack.c.h.b16 %v3657
    %v3750 = vunpack.c.l.b16 %v3658
    %v3751 = vunpack.c.h.b16 %v3658
    %v3752 = vunpack.c.l.b16 %v3659
    %v3753 = vunpack.c.h.b16 %v3659
    %v3754 = vunpack.c.l.b16 %v3660
    %v3755 = vunpack.c.h.b16 %v3660
    %v3756 = vunpack.c.l.b16 %v3661
    %v3757 = vunpack.c.h.b16 %v3661
    %v3758 = vunpack.c.l.b16 %v3662
    %v3759 = vunpack.c.h.b16 %v3662
    %v3760 = vunpack.c.l.b16 %v3663
    %v3761 = vunpack.c.h.b16 %v3663
    %v3762 = vunpack.c.l.b16 %v3664
    %v3763 = vunpack.c.h.b16 %v3664
    %v3764 = vunpack.c.l.b16 %v3665
    %v3765 = vunpack.c.h.b16 %v3665
    %v3766 = vunpack.c.l.b16 %v3666
    %v3767 = vunpack.c.h.b16 %v3666
    %v3768 = vunpack.c.l.b16 %v3667
    %v3769 = vunpack.c.h.b16 %v3667
    %v3770 = vpack.c.b16 %v3708, %v3706
    %v3771 = vpack.c.b16 %v3709, %v3707
    %v3772 = vpack.c.b16 %v3712, %v3710
    %v3773 = vpack.c.b16 %v3713, %v3711
    %v3774 = vpack.c.b16 %v3716, %v3714
    %v3775 = vpack.c.b16 %v3717, %v3715
    %v3776 = vpack.c.b16 %v3720, %v3718
    %v3777 = vpack.c.b16 %v3721, %v3719
    %v3778 = vpack.c.b16 %v3724, %v3722
    %v3779 = vpack.c.b16 %v3725, %v3723
    %v3780 = vpack.c.b16 %v3728, %v3726
    %v3781 = vpack.c.b16 %v3729, %v3727
    %v3782 = vpack.c.b16 %v3732, %v3730
    %v3783 = vpack.c.b16 %v3733, %v3731
    %v3784 = vpack.c.b16 %v3736, %v3734
    %v3785 = vpack.c.b16 %v3737, %v3735
    %v3786 = vpack.c.b16 %v3740, %v3738
    %v3787 = vpack.c.b16 %v3741, %v3739
    %v3788 = vpack.c.b16 %v3744, %v3742
    %v3789 = vpack.c.b16 %v3745, %v3743
    %v3790 = vpack.c.b16 %v3748, %v3746
    %v3791 = vpack.c.b16 %v3749, %v3747
    %v3792 = vpack.c.b16 %v3752, %v3750
    %v3793 = vpack.c.b16 %v3753, %v3751
    %v3794 = vpack.c.b16 %v3756, %v3754
    %v3795 = vpack.c.b16 %v3757, %v3755
    %v3796 = vpack.c.b16 %v3760, %v3758
    %v3797 = vpack.c.b16 %v3761, %v3759
    %v3798 = vpack.c.b16 %v3764, %v3762
    %v3799 = vpack.c.b16 %v3765, %v3763
    %v3800 = vpack.c.b16 %v3768, %v3766
    %v3801 = vpack.c.b16 %v3769, %v3767
    %3834 = vmatpush.bf16.msra.mxu0 %v3784
    %3835 = vmatpush.bf16.msra.mxu0 %v3782
    %3836 = vmatpush.bf16.msra.mxu0 %v3780
    %3837 = vmatpush.bf16.msra.mxu0 %v3778
    %3838 = vmatpush.bf16.msra.mxu0 %v3776
    %3839 = vmatpush.bf16.msra.mxu0 %v3774
    %3840 = vmatpush.bf16.msra.mxu0 %v3772
    %3841 = vmatpush.bf16.msra.mxu0 %v3770
    %3842 = vmatmul.bf16.gmra.mxu0 %v3633
    %v3843 = vpop.f32.mrf.mxu0
    %v3844 = vadd.f32 %v3672, %v3843
    %v3845 = vpop.f32.mrf.mxu0
    %3846 = vdwg.mxu0
    %3847 = vmatpush.bf16.msra.mxu0 %v3800
    %3848 = vmatpush.bf16.msra.mxu0 %v3798
    %3849 = vmatpush.bf16.msra.mxu0 %v3796
    %3850 = vmatpush.bf16.msra.mxu0 %v3794
    %3851 = vmatpush.bf16.msra.mxu0 %v3792
    %3852 = vmatpush.bf16.msra.mxu0 %v3790
    %3853 = vmatpush.bf16.msra.mxu0 %v3788
    %3854 = vmatpush.bf16.msra.mxu0 %v3786
    %3855 = vmatmul.bf16.gmra.mxu0 %v3634
    %v3856 = vpop.f32.mrf.mxu0
    %v3857 = vadd.f32 %v3844, %v3856
    %v3858 = vpop.f32.mrf.mxu0
    %3859 = vdwg.mxu0
    %3860 = vmatpush.bf16.msra.mxu0 %v3785
    %3861 = vmatpush.bf16.msra.mxu0 %v3783
    %3862 = vmatpush.bf16.msra.mxu0 %v3781
    %3863 = vmatpush.bf16.msra.mxu0 %v3779
    %3864 = vmatpush.bf16.msra.mxu0 %v3777
    %3865 = vmatpush.bf16.msra.mxu0 %v3775
    %3866 = vmatpush.bf16.msra.mxu0 %v3773
    %3867 = vmatpush.bf16.msra.mxu0 %v3771
    %3868 = vmatmul.bf16.gmra.mxu0 %v3633
    %v3869 = vpop.f32.mrf.mxu0
    %v3870 = vadd.f32 %v3673, %v3869
    %v3871 = vpop.f32.mrf.mxu0
    %3872 = vdwg.mxu0
    %3873 = vmatpush.bf16.msra.mxu0 %v3801
    %3874 = vmatpush.bf16.msra.mxu0 %v3799
    %3875 = vmatpush.bf16.msra.mxu0 %v3797
    %3876 = vmatpush.bf16.msra.mxu0 %v3795
    %3877 = vmatpush.bf16.msra.mxu0 %v3793
    %3878 = vmatpush.bf16.msra.mxu0 %v3791
    %3879 = vmatpush.bf16.msra.mxu0 %v3789
    %3880 = vmatpush.bf16.msra.mxu0 %v3787
    %3881 = vmatmul.bf16.gmra.mxu0 %v3634
    %v3882 = vpop.f32.mrf.mxu0
    %v3883 = vadd.f32 %v3870, %v3882
    %v3884 = vpop.f32.mrf.mxu0
    %3885 = vdwg.mxu0
    %v3886 = vmax.f32 %v3857, 0.0
    %v3887 = vmax.f32 %v3883, 0.0
    %v3888 = vpack.c.bf16 %v3886, %v3886
    %v3889 = vpack.c.bf16 %v3887, %v3887
    %s3890 = scalar_lea.vmem %s6, 384
    %v3891 = vld [vmem:[%s3890] sm:$0xf]
    %v3892 = vld [vmem:[%s3890 + $0x4] sm:$0xf]
    %v3893 = vld [vmem:[%s3890 + $0x8] sm:$0xf]
    %v3894 = vld [vmem:[%s3890 + $0xc] sm:$0xf]
    %v3895 = vld [vmem:[%s3890 + $0x10] sm:$0xf]
    %v3896 = vld [vmem:[%s3890 + $0x14] sm:$0xf]
    %v3897 = vld [vmem:[%s3890 + $0x18] sm:$0xf]
    %v3898 = vld [vmem:[%s3890 + $0x1c] sm:$0xf]
    %v3899 = vld [vmem:[%s3890 + $0x20] sm:$0xf]
    %v3900 = vld [vmem:[%s3890 + $0x24] sm:$0xf]
    %v3901 = vld [vmem:[%s3890 + $0x28] sm:$0xf]
    %v3902 = vld [vmem:[%s3890 + $0x2c] sm:$0xf]
    %v3903 = vld [vmem:[%s3890 + $0x30] sm:$0xf]
    %v3904 = vld [vmem:[%s3890 + $0x34] sm:$0xf]
    %v3905 = vld [vmem:[%s3890 + $0x38] sm:$0xf]
    %v3906 = vld [vmem:[%s3890 + $0x3c] sm:$0xf]
    %v3907 = vld [vmem:[%s3890 + $0x40] sm:$0xf]
    %v3908 = vld [vmem:[%s3890 + $0x44] sm:$0xf]
    %v3909 = vld [vmem:[%s3890 + $0x48] sm:$0xf]
    %v3910 = vld [vmem:[%s3890 + $0x4c] sm:$0xf]
    %v3911 = vld [vmem:[%s3890 + $0x50] sm:$0xf]
    %v3912 = vld [vmem:[%s3890 + $0x54] sm:$0xf]
    %v3913 = vld [vmem:[%s3890 + $0x58] sm:$0xf]
    %v3914 = vld [vmem:[%s3890 + $0x5c] sm:$0xf]
    %v3915 = vld [vmem:[%s3890 + $0x60] sm:$0xf]
    %v3916 = vld [vmem:[%s3890 + $0x64] sm:$0xf]
    %v3917 = vld [vmem:[%s3890 + $0x68] sm:$0xf]
    %v3918 = vld [vmem:[%s3890 + $0x6c] sm:$0xf]
    %v3919 = vld [vmem:[%s3890 + $0x70] sm:$0xf]
    %v3920 = vld [vmem:[%s3890 + $0x74] sm:$0xf]
    %v3921 = vld [vmem:[%s3890 + $0x78] sm:$0xf]
    %v3922 = vld [vmem:[%s3890 + $0x7c] sm:$0xf]
    %s3923 = scalar_lea.vmem %s7, 3
    %v3924 = vld [vmem:[%s3923] sm:$0x1]
    %v3926 = vperm.slane %v3924, 0
    %v3960 = vunpack.c.l.b16 %v3891
    %v3961 = vunpack.c.l.b16 %v3892
    %v3962 = vunpack.c.l.b16 %v3893
    %v3963 = vunpack.c.l.b16 %v3894
    %v3964 = vunpack.c.l.b16 %v3895
    %v3965 = vunpack.c.l.b16 %v3896
    %v3966 = vunpack.c.l.b16 %v3897
    %v3967 = vunpack.c.l.b16 %v3898
    %v3968 = vunpack.c.l.b16 %v3899
    %v3969 = vunpack.c.l.b16 %v3900
    %v3970 = vunpack.c.l.b16 %v3901
    %v3971 = vunpack.c.l.b16 %v3902
    %v3972 = vunpack.c.l.b16 %v3903
    %v3973 = vunpack.c.l.b16 %v3904
    %v3974 = vunpack.c.l.b16 %v3905
    %v3975 = vunpack.c.l.b16 %v3906
    %v3976 = vunpack.c.l.b16 %v3907
    %v3977 = vunpack.c.l.b16 %v3908
    %v3978 = vunpack.c.l.b16 %v3909
    %v3979 = vunpack.c.l.b16 %v3910
    %v3980 = vunpack.c.l.b16 %v3911
    %v3981 = vunpack.c.l.b16 %v3912
    %v3982 = vunpack.c.l.b16 %v3913
    %v3983 = vunpack.c.l.b16 %v3914
    %v3984 = vunpack.c.l.b16 %v3915
    %v3985 = vunpack.c.l.b16 %v3916
    %v3986 = vunpack.c.l.b16 %v3917
    %v3987 = vunpack.c.l.b16 %v3918
    %v3988 = vunpack.c.l.b16 %v3919
    %v3989 = vunpack.c.l.b16 %v3920
    %v3990 = vunpack.c.l.b16 %v3921
    %v3991 = vunpack.c.l.b16 %v3922
    %v3992 = vpack.c.b16 %v3961, %v3960
    %v3993 = vpack.c.b16 %v3963, %v3962
    %v3994 = vpack.c.b16 %v3965, %v3964
    %v3995 = vpack.c.b16 %v3967, %v3966
    %v3996 = vpack.c.b16 %v3969, %v3968
    %v3997 = vpack.c.b16 %v3971, %v3970
    %v3998 = vpack.c.b16 %v3973, %v3972
    %v3999 = vpack.c.b16 %v3975, %v3974
    %v4000 = vpack.c.b16 %v3977, %v3976
    %v4001 = vpack.c.b16 %v3979, %v3978
    %v4002 = vpack.c.b16 %v3981, %v3980
    %v4003 = vpack.c.b16 %v3983, %v3982
    %v4004 = vpack.c.b16 %v3985, %v3984
    %v4005 = vpack.c.b16 %v3987, %v3986
    %v4006 = vpack.c.b16 %v3989, %v3988
    %v4007 = vpack.c.b16 %v3991, %v3990
    %4024 = vmatpush.bf16.msra.mxu0 %v3999
    %4025 = vmatpush.bf16.msra.mxu0 %v3998
    %4026 = vmatpush.bf16.msra.mxu0 %v3997
    %4027 = vmatpush.bf16.msra.mxu0 %v3996
    %4028 = vmatpush.bf16.msra.mxu0 %v3995
    %4029 = vmatpush.bf16.msra.mxu0 %v3994
    %4030 = vmatpush.bf16.msra.mxu0 %v3993
    %4031 = vmatpush.bf16.msra.mxu0 %v3992
    %4032 = vmatmul.bf16.gmra.mxu0 %v3888
    %v4033 = vpop.f32.mrf.mxu0
    %v4034 = vadd.f32 %v3926, %v4033
    %v4035 = vpop.f32.mrf.mxu0
    %4036 = vdwg.mxu0
    %4037 = vmatpush.bf16.msra.mxu0 %v4007
    %4038 = vmatpush.bf16.msra.mxu0 %v4006
    %4039 = vmatpush.bf16.msra.mxu0 %v4005
    %4040 = vmatpush.bf16.msra.mxu0 %v4004
    %4041 = vmatpush.bf16.msra.mxu0 %v4003
    %4042 = vmatpush.bf16.msra.mxu0 %v4002
    %4043 = vmatpush.bf16.msra.mxu0 %v4001
    %4044 = vmatpush.bf16.msra.mxu0 %v4000
    %4045 = vmatmul.bf16.gmra.mxu0 %v3889
    %v4046 = vpop.f32.mrf.mxu0
    %v4047 = vadd.f32 %v4034, %v4046
    %v4048 = vpop.f32.mrf.mxu0
    %4049 = vdwg.mxu0
    %v4050 = vsub.f32 %v3056, %v4047
    %v4051 = vadd.f32 %v3057, %v4047
    %s4052 = scalar_lea.vmem %s5, 32
    %v4053 = vld [vmem:[%s4052] sm:$0xff]
    %s4054 = scalar_lea.vmem %s1, 128
    %v4055 = vld [vmem:[%s4054] sm:$0xff]
    %v4056 = vld [vmem:[%s4054 + $0x8] sm:$0xff]
    %v4057 = vld [vmem:[%s4054 + $0x10] sm:$0x3]
    %v4058 = vld [vmem:[%s4054 + $0x18] sm:$0x3]
    %v4060 = vperm.slane %v4053, 0
    %v4061 = vperm.slane %v4053, 4
    %v4064 = vperm.slane %v4060, 0
    %v4065 = vperm.slane %v4061, 0
    %v4067 = vsel %vm93, %v4050, 0
    %v4070 = vsel %vm97, %v4057, 0
    %v4073 = vsel %vm97, %v4058, 0
    %4075 = vmatpush.msra.mxu0 0.0
    %4076 = vmatpush.msra.mxu0 0.0
    %4077 = vmatpush.msra.mxu0 0.0
    %4078 = vmatpush.msra.mxu0 0.0
    %4079 = vmatpush.msra.mxu0 0.0
    %4080 = vmatpush.msra.mxu0 0.0
    %4081 = vmatpush.msra.mxu0 0.0
    %4082 = vmatpush.msra.mxu0 0.0
    %4083 = vmatpush.msra.mxu0 0.0
    %4084 = vmatpush.msra.mxu0 0.0
    %4085 = vmatpush.msra.mxu0 0.0
    %4086 = vmatpush.msra.mxu0 0.0
    %4087 = vmatpush.msra.mxu0 0.0
    %4088 = vmatpush.msra.mxu0 0.0
    %4089 = vmatpush.msra.mxu0 %v4070
    %4090 = vmatpush.msra.mxu0 %v4055
    %4091 = vmatmul.f32.gmra.mxu0 %v4067
    %v4092 = vpop.f32.mrf.mxu0
    %v4093 = vadd.f32 %v4064, %v4092
    %4094 = vdwg.mxu0
    %4095 = vmatpush.msra.mxu0 0.0
    %4096 = vmatpush.msra.mxu0 0.0
    %4097 = vmatpush.msra.mxu0 0.0
    %4098 = vmatpush.msra.mxu0 0.0
    %4099 = vmatpush.msra.mxu0 0.0
    %4100 = vmatpush.msra.mxu0 0.0
    %4101 = vmatpush.msra.mxu0 0.0
    %4102 = vmatpush.msra.mxu0 0.0
    %4103 = vmatpush.msra.mxu0 0.0
    %4104 = vmatpush.msra.mxu0 0.0
    %4105 = vmatpush.msra.mxu0 0.0
    %4106 = vmatpush.msra.mxu0 0.0
    %4107 = vmatpush.msra.mxu0 0.0
    %4108 = vmatpush.msra.mxu0 0.0
    %4109 = vmatpush.msra.mxu0 %v4073
    %4110 = vmatpush.msra.mxu0 %v4056
    %4111 = vmatmul.f32.gmra.mxu0 %v4067
    %v4112 = vpop.f32.mrf.mxu0
    %v4113 = vadd.f32 %v4065, %v4112
    %4114 = vdwg.mxu0
    %v4115 = vmax.f32 %v4093, 0.0
    %v4116 = vmax.f32 %v4113, 0.0
    %v4117 = vpack.c.bf16 %v4115, %v4115
    %v4118 = vpack.c.bf16 %v4116, %v4116
    %s4119 = scalar_lea.vmem [#allocation2], 1024
    %v4120 = vld [vmem:[%s4119] sm:$0xff]
    %v4121 = vld [vmem:[%s4119 + $0x8] sm:$0xff]
    %v4122 = vld [vmem:[%s4119 + $0x10] sm:$0xff]
    %v4123 = vld [vmem:[%s4119 + $0x18] sm:$0xff]
    %v4124 = vld [vmem:[%s4119 + $0x20] sm:$0xff]
    %v4125 = vld [vmem:[%s4119 + $0x28] sm:$0xff]
    %v4126 = vld [vmem:[%s4119 + $0x30] sm:$0xff]
    %v4127 = vld [vmem:[%s4119 + $0x38] sm:$0xff]
    %v4128 = vld [vmem:[%s4119 + $0x40] sm:$0xff]
    %v4129 = vld [vmem:[%s4119 + $0x48] sm:$0xff]
    %v4130 = vld [vmem:[%s4119 + $0x50] sm:$0xff]
    %v4131 = vld [vmem:[%s4119 + $0x58] sm:$0xff]
    %v4132 = vld [vmem:[%s4119 + $0x60] sm:$0xff]
    %v4133 = vld [vmem:[%s4119 + $0x68] sm:$0xff]
    %v4134 = vld [vmem:[%s4119 + $0x70] sm:$0xff]
    %v4135 = vld [vmem:[%s4119 + $0x78] sm:$0xff]
    %v4136 = vld [vmem:[%s4119 + $0x80] sm:$0xff]
    %v4137 = vld [vmem:[%s4119 + $0x88] sm:$0xff]
    %v4138 = vld [vmem:[%s4119 + $0x90] sm:$0xff]
    %v4139 = vld [vmem:[%s4119 + $0x98] sm:$0xff]
    %v4140 = vld [vmem:[%s4119 + $0xa0] sm:$0xff]
    %v4141 = vld [vmem:[%s4119 + $0xa8] sm:$0xff]
    %v4142 = vld [vmem:[%s4119 + $0xb0] sm:$0xff]
    %v4143 = vld [vmem:[%s4119 + $0xb8] sm:$0xff]
    %v4144 = vld [vmem:[%s4119 + $0xc0] sm:$0xff]
    %v4145 = vld [vmem:[%s4119 + $0xc8] sm:$0xff]
    %v4146 = vld [vmem:[%s4119 + $0xd0] sm:$0xff]
    %v4147 = vld [vmem:[%s4119 + $0xd8] sm:$0xff]
    %v4148 = vld [vmem:[%s4119 + $0xe0] sm:$0xff]
    %v4149 = vld [vmem:[%s4119 + $0xe8] sm:$0xff]
    %v4150 = vld [vmem:[%s4119 + $0xf0] sm:$0xff]
    %v4151 = vld [vmem:[%s4119 + $0xf8] sm:$0xff]
    %v4152 = vperm.slane %v4053, 1
    %v4153 = vperm.slane %v4053, 5
    %v4156 = vperm.slane %v4152, 1
    %v4157 = vperm.slane %v4153, 1
    %v4190 = vunpack.c.l.b16 %v4120
    %v4191 = vunpack.c.h.b16 %v4120
    %v4192 = vunpack.c.l.b16 %v4121
    %v4193 = vunpack.c.h.b16 %v4121
    %v4194 = vunpack.c.l.b16 %v4122
    %v4195 = vunpack.c.h.b16 %v4122
    %v4196 = vunpack.c.l.b16 %v4123
    %v4197 = vunpack.c.h.b16 %v4123
    %v4198 = vunpack.c.l.b16 %v4124
    %v4199 = vunpack.c.h.b16 %v4124
    %v4200 = vunpack.c.l.b16 %v4125
    %v4201 = vunpack.c.h.b16 %v4125
    %v4202 = vunpack.c.l.b16 %v4126
    %v4203 = vunpack.c.h.b16 %v4126
    %v4204 = vunpack.c.l.b16 %v4127
    %v4205 = vunpack.c.h.b16 %v4127
    %v4206 = vunpack.c.l.b16 %v4128
    %v4207 = vunpack.c.h.b16 %v4128
    %v4208 = vunpack.c.l.b16 %v4129
    %v4209 = vunpack.c.h.b16 %v4129
    %v4210 = vunpack.c.l.b16 %v4130
    %v4211 = vunpack.c.h.b16 %v4130
    %v4212 = vunpack.c.l.b16 %v4131
    %v4213 = vunpack.c.h.b16 %v4131
    %v4214 = vunpack.c.l.b16 %v4132
    %v4215 = vunpack.c.h.b16 %v4132
    %v4216 = vunpack.c.l.b16 %v4133
    %v4217 = vunpack.c.h.b16 %v4133
    %v4218 = vunpack.c.l.b16 %v4134
    %v4219 = vunpack.c.h.b16 %v4134
    %v4220 = vunpack.c.l.b16 %v4135
    %v4221 = vunpack.c.h.b16 %v4135
    %v4222 = vunpack.c.l.b16 %v4136
    %v4223 = vunpack.c.h.b16 %v4136
    %v4224 = vunpack.c.l.b16 %v4137
    %v4225 = vunpack.c.h.b16 %v4137
    %v4226 = vunpack.c.l.b16 %v4138
    %v4227 = vunpack.c.h.b16 %v4138
    %v4228 = vunpack.c.l.b16 %v4139
    %v4229 = vunpack.c.h.b16 %v4139
    %v4230 = vunpack.c.l.b16 %v4140
    %v4231 = vunpack.c.h.b16 %v4140
    %v4232 = vunpack.c.l.b16 %v4141
    %v4233 = vunpack.c.h.b16 %v4141
    %v4234 = vunpack.c.l.b16 %v4142
    %v4235 = vunpack.c.h.b16 %v4142
    %v4236 = vunpack.c.l.b16 %v4143
    %v4237 = vunpack.c.h.b16 %v4143
    %v4238 = vunpack.c.l.b16 %v4144
    %v4239 = vunpack.c.h.b16 %v4144
    %v4240 = vunpack.c.l.b16 %v4145
    %v4241 = vunpack.c.h.b16 %v4145
    %v4242 = vunpack.c.l.b16 %v4146
    %v4243 = vunpack.c.h.b16 %v4146
    %v4244 = vunpack.c.l.b16 %v4147
    %v4245 = vunpack.c.h.b16 %v4147
    %v4246 = vunpack.c.l.b16 %v4148
    %v4247 = vunpack.c.h.b16 %v4148
    %v4248 = vunpack.c.l.b16 %v4149
    %v4249 = vunpack.c.h.b16 %v4149
    %v4250 = vunpack.c.l.b16 %v4150
    %v4251 = vunpack.c.h.b16 %v4150
    %v4252 = vunpack.c.l.b16 %v4151
    %v4253 = vunpack.c.h.b16 %v4151
    %v4254 = vpack.c.b16 %v4192, %v4190
    %v4255 = vpack.c.b16 %v4193, %v4191
    %v4256 = vpack.c.b16 %v4196, %v4194
    %v4257 = vpack.c.b16 %v4197, %v4195
    %v4258 = vpack.c.b16 %v4200, %v4198
    %v4259 = vpack.c.b16 %v4201, %v4199
    %v4260 = vpack.c.b16 %v4204, %v4202
    %v4261 = vpack.c.b16 %v4205, %v4203
    %v4262 = vpack.c.b16 %v4208, %v4206
    %v4263 = vpack.c.b16 %v4209, %v4207
    %v4264 = vpack.c.b16 %v4212, %v4210
    %v4265 = vpack.c.b16 %v4213, %v4211
    %v4266 = vpack.c.b16 %v4216, %v4214
    %v4267 = vpack.c.b16 %v4217, %v4215
    %v4268 = vpack.c.b16 %v4220, %v4218
    %v4269 = vpack.c.b16 %v4221, %v4219
    %v4270 = vpack.c.b16 %v4224, %v4222
    %v4271 = vpack.c.b16 %v4225, %v4223
    %v4272 = vpack.c.b16 %v4228, %v4226
    %v4273 = vpack.c.b16 %v4229, %v4227
    %v4274 = vpack.c.b16 %v4232, %v4230
    %v4275 = vpack.c.b16 %v4233, %v4231
    %v4276 = vpack.c.b16 %v4236, %v4234
    %v4277 = vpack.c.b16 %v4237, %v4235
    %v4278 = vpack.c.b16 %v4240, %v4238
    %v4279 = vpack.c.b16 %v4241, %v4239
    %v4280 = vpack.c.b16 %v4244, %v4242
    %v4281 = vpack.c.b16 %v4245, %v4243
    %v4282 = vpack.c.b16 %v4248, %v4246
    %v4283 = vpack.c.b16 %v4249, %v4247
    %v4284 = vpack.c.b16 %v4252, %v4250
    %v4285 = vpack.c.b16 %v4253, %v4251
    %4318 = vmatpush.bf16.msra.mxu0 %v4268
    %4319 = vmatpush.bf16.msra.mxu0 %v4266
    %4320 = vmatpush.bf16.msra.mxu0 %v4264
    %4321 = vmatpush.bf16.msra.mxu0 %v4262
    %4322 = vmatpush.bf16.msra.mxu0 %v4260
    %4323 = vmatpush.bf16.msra.mxu0 %v4258
    %4324 = vmatpush.bf16.msra.mxu0 %v4256
    %4325 = vmatpush.bf16.msra.mxu0 %v4254
    %4326 = vmatmul.bf16.gmra.mxu0 %v4117
    %v4327 = vpop.f32.mrf.mxu0
    %v4328 = vadd.f32 %v4156, %v4327
    %v4329 = vpop.f32.mrf.mxu0
    %4330 = vdwg.mxu0
    %4331 = vmatpush.bf16.msra.mxu0 %v4284
    %4332 = vmatpush.bf16.msra.mxu0 %v4282
    %4333 = vmatpush.bf16.msra.mxu0 %v4280
    %4334 = vmatpush.bf16.msra.mxu0 %v4278
    %4335 = vmatpush.bf16.msra.mxu0 %v4276
    %4336 = vmatpush.bf16.msra.mxu0 %v4274
    %4337 = vmatpush.bf16.msra.mxu0 %v4272
    %4338 = vmatpush.bf16.msra.mxu0 %v4270
    %4339 = vmatmul.bf16.gmra.mxu0 %v4118
    %v4340 = vpop.f32.mrf.mxu0
    %v4341 = vadd.f32 %v4328, %v4340
    %v4342 = vpop.f32.mrf.mxu0
    %4343 = vdwg.mxu0
    %4344 = vmatpush.bf16.msra.mxu0 %v4269
    %4345 = vmatpush.bf16.msra.mxu0 %v4267
    %4346 = vmatpush.bf16.msra.mxu0 %v4265
    %4347 = vmatpush.bf16.msra.mxu0 %v4263
    %4348 = vmatpush.bf16.msra.mxu0 %v4261
    %4349 = vmatpush.bf16.msra.mxu0 %v4259
    %4350 = vmatpush.bf16.msra.mxu0 %v4257
    %4351 = vmatpush.bf16.msra.mxu0 %v4255
    %4352 = vmatmul.bf16.gmra.mxu0 %v4117
    %v4353 = vpop.f32.mrf.mxu0
    %v4354 = vadd.f32 %v4157, %v4353
    %v4355 = vpop.f32.mrf.mxu0
    %4356 = vdwg.mxu0
    %4357 = vmatpush.bf16.msra.mxu0 %v4285
    %4358 = vmatpush.bf16.msra.mxu0 %v4283
    %4359 = vmatpush.bf16.msra.mxu0 %v4281
    %4360 = vmatpush.bf16.msra.mxu0 %v4279
    %4361 = vmatpush.bf16.msra.mxu0 %v4277
    %4362 = vmatpush.bf16.msra.mxu0 %v4275
    %4363 = vmatpush.bf16.msra.mxu0 %v4273
    %4364 = vmatpush.bf16.msra.mxu0 %v4271
    %4365 = vmatmul.bf16.gmra.mxu0 %v4118
    %v4366 = vpop.f32.mrf.mxu0
    %v4367 = vadd.f32 %v4354, %v4366
    %v4368 = vpop.f32.mrf.mxu0
    %4369 = vdwg.mxu0
    %v4370 = vmax.f32 %v4341, 0.0
    %v4371 = vmax.f32 %v4367, 0.0
    %v4372 = vpack.c.bf16 %v4370, %v4370
    %v4373 = vpack.c.bf16 %v4371, %v4371
    %s4374 = scalar_lea.vmem [#allocation5], 1024
    %v4375 = vld [vmem:[%s4374] sm:$0xff]
    %v4376 = vld [vmem:[%s4374 + $0x8] sm:$0xff]
    %v4377 = vld [vmem:[%s4374 + $0x10] sm:$0xff]
    %v4378 = vld [vmem:[%s4374 + $0x18] sm:$0xff]
    %v4379 = vld [vmem:[%s4374 + $0x20] sm:$0xff]
    %v4380 = vld [vmem:[%s4374 + $0x28] sm:$0xff]
    %v4381 = vld [vmem:[%s4374 + $0x30] sm:$0xff]
    %v4382 = vld [vmem:[%s4374 + $0x38] sm:$0xff]
    %v4383 = vld [vmem:[%s4374 + $0x40] sm:$0xff]
    %v4384 = vld [vmem:[%s4374 + $0x48] sm:$0xff]
    %v4385 = vld [vmem:[%s4374 + $0x50] sm:$0xff]
    %v4386 = vld [vmem:[%s4374 + $0x58] sm:$0xff]
    %v4387 = vld [vmem:[%s4374 + $0x60] sm:$0xff]
    %v4388 = vld [vmem:[%s4374 + $0x68] sm:$0xff]
    %v4389 = vld [vmem:[%s4374 + $0x70] sm:$0xff]
    %v4390 = vld [vmem:[%s4374 + $0x78] sm:$0xff]
    %v4391 = vld [vmem:[%s4374 + $0x80] sm:$0xff]
    %v4392 = vld [vmem:[%s4374 + $0x88] sm:$0xff]
    %v4393 = vld [vmem:[%s4374 + $0x90] sm:$0xff]
    %v4394 = vld [vmem:[%s4374 + $0x98] sm:$0xff]
    %v4395 = vld [vmem:[%s4374 + $0xa0] sm:$0xff]
    %v4396 = vld [vmem:[%s4374 + $0xa8] sm:$0xff]
    %v4397 = vld [vmem:[%s4374 + $0xb0] sm:$0xff]
    %v4398 = vld [vmem:[%s4374 + $0xb8] sm:$0xff]
    %v4399 = vld [vmem:[%s4374 + $0xc0] sm:$0xff]
    %v4400 = vld [vmem:[%s4374 + $0xc8] sm:$0xff]
    %v4401 = vld [vmem:[%s4374 + $0xd0] sm:$0xff]
    %v4402 = vld [vmem:[%s4374 + $0xd8] sm:$0xff]
    %v4403 = vld [vmem:[%s4374 + $0xe0] sm:$0xff]
    %v4404 = vld [vmem:[%s4374 + $0xe8] sm:$0xff]
    %v4405 = vld [vmem:[%s4374 + $0xf0] sm:$0xff]
    %v4406 = vld [vmem:[%s4374 + $0xf8] sm:$0xff]
    %v4407 = vperm.slane %v4053, 2
    %v4408 = vperm.slane %v4053, 6
    %v4411 = vperm.slane %v4407, 2
    %v4412 = vperm.slane %v4408, 2
    %v4445 = vunpack.c.l.b16 %v4375
    %v4446 = vunpack.c.h.b16 %v4375
    %v4447 = vunpack.c.l.b16 %v4376
    %v4448 = vunpack.c.h.b16 %v4376
    %v4449 = vunpack.c.l.b16 %v4377
    %v4450 = vunpack.c.h.b16 %v4377
    %v4451 = vunpack.c.l.b16 %v4378
    %v4452 = vunpack.c.h.b16 %v4378
    %v4453 = vunpack.c.l.b16 %v4379
    %v4454 = vunpack.c.h.b16 %v4379
    %v4455 = vunpack.c.l.b16 %v4380
    %v4456 = vunpack.c.h.b16 %v4380
    %v4457 = vunpack.c.l.b16 %v4381
    %v4458 = vunpack.c.h.b16 %v4381
    %v4459 = vunpack.c.l.b16 %v4382
    %v4460 = vunpack.c.h.b16 %v4382
    %v4461 = vunpack.c.l.b16 %v4383
    %v4462 = vunpack.c.h.b16 %v4383
    %v4463 = vunpack.c.l.b16 %v4384
    %v4464 = vunpack.c.h.b16 %v4384
    %v4465 = vunpack.c.l.b16 %v4385
    %v4466 = vunpack.c.h.b16 %v4385
    %v4467 = vunpack.c.l.b16 %v4386
    %v4468 = vunpack.c.h.b16 %v4386
    %v4469 = vunpack.c.l.b16 %v4387
    %v4470 = vunpack.c.h.b16 %v4387
    %v4471 = vunpack.c.l.b16 %v4388
    %v4472 = vunpack.c.h.b16 %v4388
    %v4473 = vunpack.c.l.b16 %v4389
    %v4474 = vunpack.c.h.b16 %v4389
    %v4475 = vunpack.c.l.b16 %v4390
    %v4476 = vunpack.c.h.b16 %v4390
    %v4477 = vunpack.c.l.b16 %v4391
    %v4478 = vunpack.c.h.b16 %v4391
    %v4479 = vunpack.c.l.b16 %v4392
    %v4480 = vunpack.c.h.b16 %v4392
    %v4481 = vunpack.c.l.b16 %v4393
    %v4482 = vunpack.c.h.b16 %v4393
    %v4483 = vunpack.c.l.b16 %v4394
    %v4484 = vunpack.c.h.b16 %v4394
    %v4485 = vunpack.c.l.b16 %v4395
    %v4486 = vunpack.c.h.b16 %v4395
    %v4487 = vunpack.c.l.b16 %v4396
    %v4488 = vunpack.c.h.b16 %v4396
    %v4489 = vunpack.c.l.b16 %v4397
    %v4490 = vunpack.c.h.b16 %v4397
    %v4491 = vunpack.c.l.b16 %v4398
    %v4492 = vunpack.c.h.b16 %v4398
    %v4493 = vunpack.c.l.b16 %v4399
    %v4494 = vunpack.c.h.b16 %v4399
    %v4495 = vunpack.c.l.b16 %v4400
    %v4496 = vunpack.c.h.b16 %v4400
    %v4497 = vunpack.c.l.b16 %v4401
    %v4498 = vunpack.c.h.b16 %v4401
    %v4499 = vunpack.c.l.b16 %v4402
    %v4500 = vunpack.c.h.b16 %v4402
    %v4501 = vunpack.c.l.b16 %v4403
    %v4502 = vunpack.c.h.b16 %v4403
    %v4503 = vunpack.c.l.b16 %v4404
    %v4504 = vunpack.c.h.b16 %v4404
    %v4505 = vunpack.c.l.b16 %v4405
    %v4506 = vunpack.c.h.b16 %v4405
    %v4507 = vunpack.c.l.b16 %v4406
    %v4508 = vunpack.c.h.b16 %v4406
    %v4509 = vpack.c.b16 %v4447, %v4445
    %v4510 = vpack.c.b16 %v4448, %v4446
    %v4511 = vpack.c.b16 %v4451, %v4449
    %v4512 = vpack.c.b16 %v4452, %v4450
    %v4513 = vpack.c.b16 %v4455, %v4453
    %v4514 = vpack.c.b16 %v4456, %v4454
    %v4515 = vpack.c.b16 %v4459, %v4457
    %v4516 = vpack.c.b16 %v4460, %v4458
    %v4517 = vpack.c.b16 %v4463, %v4461
    %v4518 = vpack.c.b16 %v4464, %v4462
    %v4519 = vpack.c.b16 %v4467, %v4465
    %v4520 = vpack.c.b16 %v4468, %v4466
    %v4521 = vpack.c.b16 %v4471, %v4469
    %v4522 = vpack.c.b16 %v4472, %v4470
    %v4523 = vpack.c.b16 %v4475, %v4473
    %v4524 = vpack.c.b16 %v4476, %v4474
    %v4525 = vpack.c.b16 %v4479, %v4477
    %v4526 = vpack.c.b16 %v4480, %v4478
    %v4527 = vpack.c.b16 %v4483, %v4481
    %v4528 = vpack.c.b16 %v4484, %v4482
    %v4529 = vpack.c.b16 %v4487, %v4485
    %v4530 = vpack.c.b16 %v4488, %v4486
    %v4531 = vpack.c.b16 %v4491, %v4489
    %v4532 = vpack.c.b16 %v4492, %v4490
    %v4533 = vpack.c.b16 %v4495, %v4493
    %v4534 = vpack.c.b16 %v4496, %v4494
    %v4535 = vpack.c.b16 %v4499, %v4497
    %v4536 = vpack.c.b16 %v4500, %v4498
    %v4537 = vpack.c.b16 %v4503, %v4501
    %v4538 = vpack.c.b16 %v4504, %v4502
    %v4539 = vpack.c.b16 %v4507, %v4505
    %v4540 = vpack.c.b16 %v4508, %v4506
    %4573 = vmatpush.bf16.msra.mxu0 %v4523
    %4574 = vmatpush.bf16.msra.mxu0 %v4521
    %4575 = vmatpush.bf16.msra.mxu0 %v4519
    %4576 = vmatpush.bf16.msra.mxu0 %v4517
    %4577 = vmatpush.bf16.msra.mxu0 %v4515
    %4578 = vmatpush.bf16.msra.mxu0 %v4513
    %4579 = vmatpush.bf16.msra.mxu0 %v4511
    %4580 = vmatpush.bf16.msra.mxu0 %v4509
    %4581 = vmatmul.bf16.gmra.mxu0 %v4372
    %v4582 = vpop.f32.mrf.mxu0
    %v4583 = vadd.f32 %v4411, %v4582
    %v4584 = vpop.f32.mrf.mxu0
    %4585 = vdwg.mxu0
    %4586 = vmatpush.bf16.msra.mxu0 %v4539
    %4587 = vmatpush.bf16.msra.mxu0 %v4537
    %4588 = vmatpush.bf16.msra.mxu0 %v4535
    %4589 = vmatpush.bf16.msra.mxu0 %v4533
    %4590 = vmatpush.bf16.msra.mxu0 %v4531
    %4591 = vmatpush.bf16.msra.mxu0 %v4529
    %4592 = vmatpush.bf16.msra.mxu0 %v4527
    %4593 = vmatpush.bf16.msra.mxu0 %v4525
    %4594 = vmatmul.bf16.gmra.mxu0 %v4373
    %v4595 = vpop.f32.mrf.mxu0
    %v4596 = vadd.f32 %v4583, %v4595
    %v4597 = vpop.f32.mrf.mxu0
    %4598 = vdwg.mxu0
    %4599 = vmatpush.bf16.msra.mxu0 %v4524
    %4600 = vmatpush.bf16.msra.mxu0 %v4522
    %4601 = vmatpush.bf16.msra.mxu0 %v4520
    %4602 = vmatpush.bf16.msra.mxu0 %v4518
    %4603 = vmatpush.bf16.msra.mxu0 %v4516
    %4604 = vmatpush.bf16.msra.mxu0 %v4514
    %4605 = vmatpush.bf16.msra.mxu0 %v4512
    %4606 = vmatpush.bf16.msra.mxu0 %v4510
    %4607 = vmatmul.bf16.gmra.mxu0 %v4372
    %v4608 = vpop.f32.mrf.mxu0
    %v4609 = vadd.f32 %v4412, %v4608
    %v4610 = vpop.f32.mrf.mxu0
    %4611 = vdwg.mxu0
    %4612 = vmatpush.bf16.msra.mxu0 %v4540
    %4613 = vmatpush.bf16.msra.mxu0 %v4538
    %4614 = vmatpush.bf16.msra.mxu0 %v4536
    %4615 = vmatpush.bf16.msra.mxu0 %v4534
    %4616 = vmatpush.bf16.msra.mxu0 %v4532
    %4617 = vmatpush.bf16.msra.mxu0 %v4530
    %4618 = vmatpush.bf16.msra.mxu0 %v4528
    %4619 = vmatpush.bf16.msra.mxu0 %v4526
    %4620 = vmatmul.bf16.gmra.mxu0 %v4373
    %v4621 = vpop.f32.mrf.mxu0
    %v4622 = vadd.f32 %v4609, %v4621
    %v4623 = vpop.f32.mrf.mxu0
    %4624 = vdwg.mxu0
    %v4625 = vmax.f32 %v4596, 0.0
    %v4626 = vmax.f32 %v4622, 0.0
    %v4627 = vpack.c.bf16 %v4625, %v4625
    %v4628 = vpack.c.bf16 %v4626, %v4626
    %s4629 = scalar_lea.vmem [#allocation7], 1024
    %v4630 = vld [vmem:[%s4629] sm:$0xff]
    %v4631 = vld [vmem:[%s4629 + $0x8] sm:$0xff]
    %v4632 = vld [vmem:[%s4629 + $0x10] sm:$0xff]
    %v4633 = vld [vmem:[%s4629 + $0x18] sm:$0xff]
    %v4634 = vld [vmem:[%s4629 + $0x20] sm:$0xff]
    %v4635 = vld [vmem:[%s4629 + $0x28] sm:$0xff]
    %v4636 = vld [vmem:[%s4629 + $0x30] sm:$0xff]
    %v4637 = vld [vmem:[%s4629 + $0x38] sm:$0xff]
    %v4638 = vld [vmem:[%s4629 + $0x40] sm:$0xff]
    %v4639 = vld [vmem:[%s4629 + $0x48] sm:$0xff]
    %v4640 = vld [vmem:[%s4629 + $0x50] sm:$0xff]
    %v4641 = vld [vmem:[%s4629 + $0x58] sm:$0xff]
    %v4642 = vld [vmem:[%s4629 + $0x60] sm:$0xff]
    %v4643 = vld [vmem:[%s4629 + $0x68] sm:$0xff]
    %v4644 = vld [vmem:[%s4629 + $0x70] sm:$0xff]
    %v4645 = vld [vmem:[%s4629 + $0x78] sm:$0xff]
    %v4646 = vld [vmem:[%s4629 + $0x80] sm:$0xff]
    %v4647 = vld [vmem:[%s4629 + $0x88] sm:$0xff]
    %v4648 = vld [vmem:[%s4629 + $0x90] sm:$0xff]
    %v4649 = vld [vmem:[%s4629 + $0x98] sm:$0xff]
    %v4650 = vld [vmem:[%s4629 + $0xa0] sm:$0xff]
    %v4651 = vld [vmem:[%s4629 + $0xa8] sm:$0xff]
    %v4652 = vld [vmem:[%s4629 + $0xb0] sm:$0xff]
    %v4653 = vld [vmem:[%s4629 + $0xb8] sm:$0xff]
    %v4654 = vld [vmem:[%s4629 + $0xc0] sm:$0xff]
    %v4655 = vld [vmem:[%s4629 + $0xc8] sm:$0xff]
    %v4656 = vld [vmem:[%s4629 + $0xd0] sm:$0xff]
    %v4657 = vld [vmem:[%s4629 + $0xd8] sm:$0xff]
    %v4658 = vld [vmem:[%s4629 + $0xe0] sm:$0xff]
    %v4659 = vld [vmem:[%s4629 + $0xe8] sm:$0xff]
    %v4660 = vld [vmem:[%s4629 + $0xf0] sm:$0xff]
    %v4661 = vld [vmem:[%s4629 + $0xf8] sm:$0xff]
    %v4662 = vperm.slane %v4053, 3
    %v4663 = vperm.slane %v4053, 7
    %v4666 = vperm.slane %v4662, 3
    %v4667 = vperm.slane %v4663, 3
    %v4700 = vunpack.c.l.b16 %v4630
    %v4701 = vunpack.c.h.b16 %v4630
    %v4702 = vunpack.c.l.b16 %v4631
    %v4703 = vunpack.c.h.b16 %v4631
    %v4704 = vunpack.c.l.b16 %v4632
    %v4705 = vunpack.c.h.b16 %v4632
    %v4706 = vunpack.c.l.b16 %v4633
    %v4707 = vunpack.c.h.b16 %v4633
    %v4708 = vunpack.c.l.b16 %v4634
    %v4709 = vunpack.c.h.b16 %v4634
    %v4710 = vunpack.c.l.b16 %v4635
    %v4711 = vunpack.c.h.b16 %v4635
    %v4712 = vunpack.c.l.b16 %v4636
    %v4713 = vunpack.c.h.b16 %v4636
    %v4714 = vunpack.c.l.b16 %v4637
    %v4715 = vunpack.c.h.b16 %v4637
    %v4716 = vunpack.c.l.b16 %v4638
    %v4717 = vunpack.c.h.b16 %v4638
    %v4718 = vunpack.c.l.b16 %v4639
    %v4719 = vunpack.c.h.b16 %v4639
    %v4720 = vunpack.c.l.b16 %v4640
    %v4721 = vunpack.c.h.b16 %v4640
    %v4722 = vunpack.c.l.b16 %v4641
    %v4723 = vunpack.c.h.b16 %v4641
    %v4724 = vunpack.c.l.b16 %v4642
    %v4725 = vunpack.c.h.b16 %v4642
    %v4726 = vunpack.c.l.b16 %v4643
    %v4727 = vunpack.c.h.b16 %v4643
    %v4728 = vunpack.c.l.b16 %v4644
    %v4729 = vunpack.c.h.b16 %v4644
    %v4730 = vunpack.c.l.b16 %v4645
    %v4731 = vunpack.c.h.b16 %v4645
    %v4732 = vunpack.c.l.b16 %v4646
    %v4733 = vunpack.c.h.b16 %v4646
    %v4734 = vunpack.c.l.b16 %v4647
    %v4735 = vunpack.c.h.b16 %v4647
    %v4736 = vunpack.c.l.b16 %v4648
    %v4737 = vunpack.c.h.b16 %v4648
    %v4738 = vunpack.c.l.b16 %v4649
    %v4739 = vunpack.c.h.b16 %v4649
    %v4740 = vunpack.c.l.b16 %v4650
    %v4741 = vunpack.c.h.b16 %v4650
    %v4742 = vunpack.c.l.b16 %v4651
    %v4743 = vunpack.c.h.b16 %v4651
    %v4744 = vunpack.c.l.b16 %v4652
    %v4745 = vunpack.c.h.b16 %v4652
    %v4746 = vunpack.c.l.b16 %v4653
    %v4747 = vunpack.c.h.b16 %v4653
    %v4748 = vunpack.c.l.b16 %v4654
    %v4749 = vunpack.c.h.b16 %v4654
    %v4750 = vunpack.c.l.b16 %v4655
    %v4751 = vunpack.c.h.b16 %v4655
    %v4752 = vunpack.c.l.b16 %v4656
    %v4753 = vunpack.c.h.b16 %v4656
    %v4754 = vunpack.c.l.b16 %v4657
    %v4755 = vunpack.c.h.b16 %v4657
    %v4756 = vunpack.c.l.b16 %v4658
    %v4757 = vunpack.c.h.b16 %v4658
    %v4758 = vunpack.c.l.b16 %v4659
    %v4759 = vunpack.c.h.b16 %v4659
    %v4760 = vunpack.c.l.b16 %v4660
    %v4761 = vunpack.c.h.b16 %v4660
    %v4762 = vunpack.c.l.b16 %v4661
    %v4763 = vunpack.c.h.b16 %v4661
    %v4764 = vpack.c.b16 %v4702, %v4700
    %v4765 = vpack.c.b16 %v4703, %v4701
    %v4766 = vpack.c.b16 %v4706, %v4704
    %v4767 = vpack.c.b16 %v4707, %v4705
    %v4768 = vpack.c.b16 %v4710, %v4708
    %v4769 = vpack.c.b16 %v4711, %v4709
    %v4770 = vpack.c.b16 %v4714, %v4712
    %v4771 = vpack.c.b16 %v4715, %v4713
    %v4772 = vpack.c.b16 %v4718, %v4716
    %v4773 = vpack.c.b16 %v4719, %v4717
    %v4774 = vpack.c.b16 %v4722, %v4720
    %v4775 = vpack.c.b16 %v4723, %v4721
    %v4776 = vpack.c.b16 %v4726, %v4724
    %v4777 = vpack.c.b16 %v4727, %v4725
    %v4778 = vpack.c.b16 %v4730, %v4728
    %v4779 = vpack.c.b16 %v4731, %v4729
    %v4780 = vpack.c.b16 %v4734, %v4732
    %v4781 = vpack.c.b16 %v4735, %v4733
    %v4782 = vpack.c.b16 %v4738, %v4736
    %v4783 = vpack.c.b16 %v4739, %v4737
    %v4784 = vpack.c.b16 %v4742, %v4740
    %v4785 = vpack.c.b16 %v4743, %v4741
    %v4786 = vpack.c.b16 %v4746, %v4744
    %v4787 = vpack.c.b16 %v4747, %v4745
    %v4788 = vpack.c.b16 %v4750, %v4748
    %v4789 = vpack.c.b16 %v4751, %v4749
    %v4790 = vpack.c.b16 %v4754, %v4752
    %v4791 = vpack.c.b16 %v4755, %v4753
    %v4792 = vpack.c.b16 %v4758, %v4756
    %v4793 = vpack.c.b16 %v4759, %v4757
    %v4794 = vpack.c.b16 %v4762, %v4760
    %v4795 = vpack.c.b16 %v4763, %v4761
    %4828 = vmatpush.bf16.msra.mxu0 %v4778
    %4829 = vmatpush.bf16.msra.mxu0 %v4776
    %4830 = vmatpush.bf16.msra.mxu0 %v4774
    %4831 = vmatpush.bf16.msra.mxu0 %v4772
    %4832 = vmatpush.bf16.msra.mxu0 %v4770
    %4833 = vmatpush.bf16.msra.mxu0 %v4768
    %4834 = vmatpush.bf16.msra.mxu0 %v4766
    %4835 = vmatpush.bf16.msra.mxu0 %v4764
    %4836 = vmatmul.bf16.gmra.mxu0 %v4627
    %v4837 = vpop.f32.mrf.mxu0
    %v4838 = vadd.f32 %v4666, %v4837
    %v4839 = vpop.f32.mrf.mxu0
    %4840 = vdwg.mxu0
    %4841 = vmatpush.bf16.msra.mxu0 %v4794
    %4842 = vmatpush.bf16.msra.mxu0 %v4792
    %4843 = vmatpush.bf16.msra.mxu0 %v4790
    %4844 = vmatpush.bf16.msra.mxu0 %v4788
    %4845 = vmatpush.bf16.msra.mxu0 %v4786
    %4846 = vmatpush.bf16.msra.mxu0 %v4784
    %4847 = vmatpush.bf16.msra.mxu0 %v4782
    %4848 = vmatpush.bf16.msra.mxu0 %v4780
    %4849 = vmatmul.bf16.gmra.mxu0 %v4628
    %v4850 = vpop.f32.mrf.mxu0
    %v4851 = vadd.f32 %v4838, %v4850
    %v4852 = vpop.f32.mrf.mxu0
    %4853 = vdwg.mxu0
    %4854 = vmatpush.bf16.msra.mxu0 %v4779
    %4855 = vmatpush.bf16.msra.mxu0 %v4777
    %4856 = vmatpush.bf16.msra.mxu0 %v4775
    %4857 = vmatpush.bf16.msra.mxu0 %v4773
    %4858 = vmatpush.bf16.msra.mxu0 %v4771
    %4859 = vmatpush.bf16.msra.mxu0 %v4769
    %4860 = vmatpush.bf16.msra.mxu0 %v4767
    %4861 = vmatpush.bf16.msra.mxu0 %v4765
    %4862 = vmatmul.bf16.gmra.mxu0 %v4627
    %v4863 = vpop.f32.mrf.mxu0
    %v4864 = vadd.f32 %v4667, %v4863
    %v4865 = vpop.f32.mrf.mxu0
    %4866 = vdwg.mxu0
    %4867 = vmatpush.bf16.msra.mxu0 %v4795
    %4868 = vmatpush.bf16.msra.mxu0 %v4793
    %4869 = vmatpush.bf16.msra.mxu0 %v4791
    %4870 = vmatpush.bf16.msra.mxu0 %v4789
    %4871 = vmatpush.bf16.msra.mxu0 %v4787
    %4872 = vmatpush.bf16.msra.mxu0 %v4785
    %4873 = vmatpush.bf16.msra.mxu0 %v4783
    %4874 = vmatpush.bf16.msra.mxu0 %v4781
    %4875 = vmatmul.bf16.gmra.mxu0 %v4628
    %v4876 = vpop.f32.mrf.mxu0
    %v4877 = vadd.f32 %v4864, %v4876
    %v4878 = vpop.f32.mrf.mxu0
    %4879 = vdwg.mxu0
    %v4880 = vmax.f32 %v4851, 0.0
    %v4881 = vmax.f32 %v4877, 0.0
    %v4882 = vpack.c.bf16 %v4880, %v4880
    %v4883 = vpack.c.bf16 %v4881, %v4881
    %s4884 = scalar_lea.vmem %s6, 512
    %v4885 = vld [vmem:[%s4884] sm:$0xf]
    %v4886 = vld [vmem:[%s4884 + $0x4] sm:$0xf]
    %v4887 = vld [vmem:[%s4884 + $0x8] sm:$0xf]
    %v4888 = vld [vmem:[%s4884 + $0xc] sm:$0xf]
    %v4889 = vld [vmem:[%s4884 + $0x10] sm:$0xf]
    %v4890 = vld [vmem:[%s4884 + $0x14] sm:$0xf]
    %v4891 = vld [vmem:[%s4884 + $0x18] sm:$0xf]
    %v4892 = vld [vmem:[%s4884 + $0x1c] sm:$0xf]
    %v4893 = vld [vmem:[%s4884 + $0x20] sm:$0xf]
    %v4894 = vld [vmem:[%s4884 + $0x24] sm:$0xf]
    %v4895 = vld [vmem:[%s4884 + $0x28] sm:$0xf]
    %v4896 = vld [vmem:[%s4884 + $0x2c] sm:$0xf]
    %v4897 = vld [vmem:[%s4884 + $0x30] sm:$0xf]
    %v4898 = vld [vmem:[%s4884 + $0x34] sm:$0xf]
    %v4899 = vld [vmem:[%s4884 + $0x38] sm:$0xf]
    %v4900 = vld [vmem:[%s4884 + $0x3c] sm:$0xf]
    %v4901 = vld [vmem:[%s4884 + $0x40] sm:$0xf]
    %v4902 = vld [vmem:[%s4884 + $0x44] sm:$0xf]
    %v4903 = vld [vmem:[%s4884 + $0x48] sm:$0xf]
    %v4904 = vld [vmem:[%s4884 + $0x4c] sm:$0xf]
    %v4905 = vld [vmem:[%s4884 + $0x50] sm:$0xf]
    %v4906 = vld [vmem:[%s4884 + $0x54] sm:$0xf]
    %v4907 = vld [vmem:[%s4884 + $0x58] sm:$0xf]
    %v4908 = vld [vmem:[%s4884 + $0x5c] sm:$0xf]
    %v4909 = vld [vmem:[%s4884 + $0x60] sm:$0xf]
    %v4910 = vld [vmem:[%s4884 + $0x64] sm:$0xf]
    %v4911 = vld [vmem:[%s4884 + $0x68] sm:$0xf]
    %v4912 = vld [vmem:[%s4884 + $0x6c] sm:$0xf]
    %v4913 = vld [vmem:[%s4884 + $0x70] sm:$0xf]
    %v4914 = vld [vmem:[%s4884 + $0x74] sm:$0xf]
    %v4915 = vld [vmem:[%s4884 + $0x78] sm:$0xf]
    %v4916 = vld [vmem:[%s4884 + $0x7c] sm:$0xf]
    %s4917 = scalar_lea.vmem %s7, 4
    %v4918 = vld [vmem:[%s4917] sm:$0x1]
    %v4920 = vperm.slane %v4918, 0
    %v4954 = vunpack.c.l.b16 %v4885
    %v4955 = vunpack.c.l.b16 %v4886
    %v4956 = vunpack.c.l.b16 %v4887
    %v4957 = vunpack.c.l.b16 %v4888
    %v4958 = vunpack.c.l.b16 %v4889
    %v4959 = vunpack.c.l.b16 %v4890
    %v4960 = vunpack.c.l.b16 %v4891
    %v4961 = vunpack.c.l.b16 %v4892
    %v4962 = vunpack.c.l.b16 %v4893
    %v4963 = vunpack.c.l.b16 %v4894
    %v4964 = vunpack.c.l.b16 %v4895
    %v4965 = vunpack.c.l.b16 %v4896
    %v4966 = vunpack.c.l.b16 %v4897
    %v4967 = vunpack.c.l.b16 %v4898
    %v4968 = vunpack.c.l.b16 %v4899
    %v4969 = vunpack.c.l.b16 %v4900
    %v4970 = vunpack.c.l.b16 %v4901
    %v4971 = vunpack.c.l.b16 %v4902
    %v4972 = vunpack.c.l.b16 %v4903
    %v4973 = vunpack.c.l.b16 %v4904
    %v4974 = vunpack.c.l.b16 %v4905
    %v4975 = vunpack.c.l.b16 %v4906
    %v4976 = vunpack.c.l.b16 %v4907
    %v4977 = vunpack.c.l.b16 %v4908
    %v4978 = vunpack.c.l.b16 %v4909
    %v4979 = vunpack.c.l.b16 %v4910
    %v4980 = vunpack.c.l.b16 %v4911
    %v4981 = vunpack.c.l.b16 %v4912
    %v4982 = vunpack.c.l.b16 %v4913
    %v4983 = vunpack.c.l.b16 %v4914
    %v4984 = vunpack.c.l.b16 %v4915
    %v4985 = vunpack.c.l.b16 %v4916
    %v4986 = vpack.c.b16 %v4955, %v4954
    %v4987 = vpack.c.b16 %v4957, %v4956
    %v4988 = vpack.c.b16 %v4959, %v4958
    %v4989 = vpack.c.b16 %v4961, %v4960
    %v4990 = vpack.c.b16 %v4963, %v4962
    %v4991 = vpack.c.b16 %v4965, %v4964
    %v4992 = vpack.c.b16 %v4967, %v4966
    %v4993 = vpack.c.b16 %v4969, %v4968
    %v4994 = vpack.c.b16 %v4971, %v4970
    %v4995 = vpack.c.b16 %v4973, %v4972
    %v4996 = vpack.c.b16 %v4975, %v4974
    %v4997 = vpack.c.b16 %v4977, %v4976
    %v4998 = vpack.c.b16 %v4979, %v4978
    %v4999 = vpack.c.b16 %v4981, %v4980
    %v5000 = vpack.c.b16 %v4983, %v4982
    %v5001 = vpack.c.b16 %v4985, %v4984
    %5018 = vmatpush.bf16.msra.mxu0 %v4993
    %5019 = vmatpush.bf16.msra.mxu0 %v4992
    %5020 = vmatpush.bf16.msra.mxu0 %v4991
    %5021 = vmatpush.bf16.msra.mxu0 %v4990
    %5022 = vmatpush.bf16.msra.mxu0 %v4989
    %5023 = vmatpush.bf16.msra.mxu0 %v4988
    %5024 = vmatpush.bf16.msra.mxu0 %v4987
    %5025 = vmatpush.bf16.msra.mxu0 %v4986
    %5026 = vmatmul.bf16.gmra.mxu0 %v4882
    %v5027 = vpop.f32.mrf.mxu0
    %v5028 = vadd.f32 %v4920, %v5027
    %v5029 = vpop.f32.mrf.mxu0
    %5030 = vdwg.mxu0
    %5031 = vmatpush.bf16.msra.mxu0 %v5001
    %5032 = vmatpush.bf16.msra.mxu0 %v5000
    %5033 = vmatpush.bf16.msra.mxu0 %v4999
    %5034 = vmatpush.bf16.msra.mxu0 %v4998
    %5035 = vmatpush.bf16.msra.mxu0 %v4997
    %5036 = vmatpush.bf16.msra.mxu0 %v4996
    %5037 = vmatpush.bf16.msra.mxu0 %v4995
    %5038 = vmatpush.bf16.msra.mxu0 %v4994
    %5039 = vmatmul.bf16.gmra.mxu0 %v4883
    %v5040 = vpop.f32.mrf.mxu0
    %v5041 = vadd.f32 %v5028, %v5040
    %v5042 = vpop.f32.mrf.mxu0
    %5043 = vdwg.mxu0
    %v5044 = vsub.f32 %v4050, %v5041
    %v5045 = vadd.f32 %v4051, %v5041
    %s5046 = scalar_lea.vmem %s5, 40
    %v5047 = vld [vmem:[%s5046] sm:$0xff]
    %s5048 = scalar_lea.vmem %s1, 160
    %v5049 = vld [vmem:[%s5048] sm:$0xff]
    %v5050 = vld [vmem:[%s5048 + $0x8] sm:$0xff]
    %v5051 = vld [vmem:[%s5048 + $0x10] sm:$0x3]
    %v5052 = vld [vmem:[%s5048 + $0x18] sm:$0x3]
    %v5054 = vperm.slane %v5047, 0
    %v5055 = vperm.slane %v5047, 4
    %v5058 = vperm.slane %v5054, 0
    %v5059 = vperm.slane %v5055, 0
    %v5061 = vsel %vm93, %v5044, 0
    %v5064 = vsel %vm97, %v5051, 0
    %v5067 = vsel %vm97, %v5052, 0
    %5069 = vmatpush.msra.mxu0 0.0
    %5070 = vmatpush.msra.mxu0 0.0
    %5071 = vmatpush.msra.mxu0 0.0
    %5072 = vmatpush.msra.mxu0 0.0
    %5073 = vmatpush.msra.mxu0 0.0
    %5074 = vmatpush.msra.mxu0 0.0
    %5075 = vmatpush.msra.mxu0 0.0
    %5076 = vmatpush.msra.mxu0 0.0
    %5077 = vmatpush.msra.mxu0 0.0
    %5078 = vmatpush.msra.mxu0 0.0
    %5079 = vmatpush.msra.mxu0 0.0
    %5080 = vmatpush.msra.mxu0 0.0
    %5081 = vmatpush.msra.mxu0 0.0
    %5082 = vmatpush.msra.mxu0 0.0
    %5083 = vmatpush.msra.mxu0 %v5064
    %5084 = vmatpush.msra.mxu0 %v5049
    %5085 = vmatmul.f32.gmra.mxu0 %v5061
    %v5086 = vpop.f32.mrf.mxu0
    %v5087 = vadd.f32 %v5058, %v5086
    %5088 = vdwg.mxu0
    %5089 = vmatpush.msra.mxu0 0.0
    %5090 = vmatpush.msra.mxu0 0.0
    %5091 = vmatpush.msra.mxu0 0.0
    %5092 = vmatpush.msra.mxu0 0.0
    %5093 = vmatpush.msra.mxu0 0.0
    %5094 = vmatpush.msra.mxu0 0.0
    %5095 = vmatpush.msra.mxu0 0.0
    %5096 = vmatpush.msra.mxu0 0.0
    %5097 = vmatpush.msra.mxu0 0.0
    %5098 = vmatpush.msra.mxu0 0.0
    %5099 = vmatpush.msra.mxu0 0.0
    %5100 = vmatpush.msra.mxu0 0.0
    %5101 = vmatpush.msra.mxu0 0.0
    %5102 = vmatpush.msra.mxu0 0.0
    %5103 = vmatpush.msra.mxu0 %v5067
    %5104 = vmatpush.msra.mxu0 %v5050
    %5105 = vmatmul.f32.gmra.mxu0 %v5061
    %v5106 = vpop.f32.mrf.mxu0
    %v5107 = vadd.f32 %v5059, %v5106
    %5108 = vdwg.mxu0
    %v5109 = vmax.f32 %v5087, 0.0
    %v5110 = vmax.f32 %v5107, 0.0
    %v5111 = vpack.c.bf16 %v5109, %v5109
    %v5112 = vpack.c.bf16 %v5110, %v5110
    %s5113 = scalar_lea.vmem [#allocation2], 1280
    %v5114 = vld [vmem:[%s5113] sm:$0xff]
    %v5115 = vld [vmem:[%s5113 + $0x8] sm:$0xff]
    %v5116 = vld [vmem:[%s5113 + $0x10] sm:$0xff]
    %v5117 = vld [vmem:[%s5113 + $0x18] sm:$0xff]
    %v5118 = vld [vmem:[%s5113 + $0x20] sm:$0xff]
    %v5119 = vld [vmem:[%s5113 + $0x28] sm:$0xff]
    %v5120 = vld [vmem:[%s5113 + $0x30] sm:$0xff]
    %v5121 = vld [vmem:[%s5113 + $0x38] sm:$0xff]
    %v5122 = vld [vmem:[%s5113 + $0x40] sm:$0xff]
    %v5123 = vld [vmem:[%s5113 + $0x48] sm:$0xff]
    %v5124 = vld [vmem:[%s5113 + $0x50] sm:$0xff]
    %v5125 = vld [vmem:[%s5113 + $0x58] sm:$0xff]
    %v5126 = vld [vmem:[%s5113 + $0x60] sm:$0xff]
    %v5127 = vld [vmem:[%s5113 + $0x68] sm:$0xff]
    %v5128 = vld [vmem:[%s5113 + $0x70] sm:$0xff]
    %v5129 = vld [vmem:[%s5113 + $0x78] sm:$0xff]
    %v5130 = vld [vmem:[%s5113 + $0x80] sm:$0xff]
    %v5131 = vld [vmem:[%s5113 + $0x88] sm:$0xff]
    %v5132 = vld [vmem:[%s5113 + $0x90] sm:$0xff]
    %v5133 = vld [vmem:[%s5113 + $0x98] sm:$0xff]
    %v5134 = vld [vmem:[%s5113 + $0xa0] sm:$0xff]
    %v5135 = vld [vmem:[%s5113 + $0xa8] sm:$0xff]
    %v5136 = vld [vmem:[%s5113 + $0xb0] sm:$0xff]
    %v5137 = vld [vmem:[%s5113 + $0xb8] sm:$0xff]
    %v5138 = vld [vmem:[%s5113 + $0xc0] sm:$0xff]
    %v5139 = vld [vmem:[%s5113 + $0xc8] sm:$0xff]
    %v5140 = vld [vmem:[%s5113 + $0xd0] sm:$0xff]
    %v5141 = vld [vmem:[%s5113 + $0xd8] sm:$0xff]
    %v5142 = vld [vmem:[%s5113 + $0xe0] sm:$0xff]
    %v5143 = vld [vmem:[%s5113 + $0xe8] sm:$0xff]
    %v5144 = vld [vmem:[%s5113 + $0xf0] sm:$0xff]
    %v5145 = vld [vmem:[%s5113 + $0xf8] sm:$0xff]
    %v5146 = vperm.slane %v5047, 1
    %v5147 = vperm.slane %v5047, 5
    %v5150 = vperm.slane %v5146, 1
    %v5151 = vperm.slane %v5147, 1
    %v5184 = vunpack.c.l.b16 %v5114
    %v5185 = vunpack.c.h.b16 %v5114
    %v5186 = vunpack.c.l.b16 %v5115
    %v5187 = vunpack.c.h.b16 %v5115
    %v5188 = vunpack.c.l.b16 %v5116
    %v5189 = vunpack.c.h.b16 %v5116
    %v5190 = vunpack.c.l.b16 %v5117
    %v5191 = vunpack.c.h.b16 %v5117
    %v5192 = vunpack.c.l.b16 %v5118
    %v5193 = vunpack.c.h.b16 %v5118
    %v5194 = vunpack.c.l.b16 %v5119
    %v5195 = vunpack.c.h.b16 %v5119
    %v5196 = vunpack.c.l.b16 %v5120
    %v5197 = vunpack.c.h.b16 %v5120
    %v5198 = vunpack.c.l.b16 %v5121
    %v5199 = vunpack.c.h.b16 %v5121
    %v5200 = vunpack.c.l.b16 %v5122
    %v5201 = vunpack.c.h.b16 %v5122
    %v5202 = vunpack.c.l.b16 %v5123
    %v5203 = vunpack.c.h.b16 %v5123
    %v5204 = vunpack.c.l.b16 %v5124
    %v5205 = vunpack.c.h.b16 %v5124
    %v5206 = vunpack.c.l.b16 %v5125
    %v5207 = vunpack.c.h.b16 %v5125
    %v5208 = vunpack.c.l.b16 %v5126
    %v5209 = vunpack.c.h.b16 %v5126
    %v5210 = vunpack.c.l.b16 %v5127
    %v5211 = vunpack.c.h.b16 %v5127
    %v5212 = vunpack.c.l.b16 %v5128
    %v5213 = vunpack.c.h.b16 %v5128
    %v5214 = vunpack.c.l.b16 %v5129
    %v5215 = vunpack.c.h.b16 %v5129
    %v5216 = vunpack.c.l.b16 %v5130
    %v5217 = vunpack.c.h.b16 %v5130
    %v5218 = vunpack.c.l.b16 %v5131
    %v5219 = vunpack.c.h.b16 %v5131
    %v5220 = vunpack.c.l.b16 %v5132
    %v5221 = vunpack.c.h.b16 %v5132
    %v5222 = vunpack.c.l.b16 %v5133
    %v5223 = vunpack.c.h.b16 %v5133
    %v5224 = vunpack.c.l.b16 %v5134
    %v5225 = vunpack.c.h.b16 %v5134
    %v5226 = vunpack.c.l.b16 %v5135
    %v5227 = vunpack.c.h.b16 %v5135
    %v5228 = vunpack.c.l.b16 %v5136
    %v5229 = vunpack.c.h.b16 %v5136
    %v5230 = vunpack.c.l.b16 %v5137
    %v5231 = vunpack.c.h.b16 %v5137
    %v5232 = vunpack.c.l.b16 %v5138
    %v5233 = vunpack.c.h.b16 %v5138
    %v5234 = vunpack.c.l.b16 %v5139
    %v5235 = vunpack.c.h.b16 %v5139
    %v5236 = vunpack.c.l.b16 %v5140
    %v5237 = vunpack.c.h.b16 %v5140
    %v5238 = vunpack.c.l.b16 %v5141
    %v5239 = vunpack.c.h.b16 %v5141
    %v5240 = vunpack.c.l.b16 %v5142
    %v5241 = vunpack.c.h.b16 %v5142
    %v5242 = vunpack.c.l.b16 %v5143
    %v5243 = vunpack.c.h.b16 %v5143
    %v5244 = vunpack.c.l.b16 %v5144
    %v5245 = vunpack.c.h.b16 %v5144
    %v5246 = vunpack.c.l.b16 %v5145
    %v5247 = vunpack.c.h.b16 %v5145
    %v5248 = vpack.c.b16 %v5186, %v5184
    %v5249 = vpack.c.b16 %v5187, %v5185
    %v5250 = vpack.c.b16 %v5190, %v5188
    %v5251 = vpack.c.b16 %v5191, %v5189
    %v5252 = vpack.c.b16 %v5194, %v5192
    %v5253 = vpack.c.b16 %v5195, %v5193
    %v5254 = vpack.c.b16 %v5198, %v5196
    %v5255 = vpack.c.b16 %v5199, %v5197
    %v5256 = vpack.c.b16 %v5202, %v5200
    %v5257 = vpack.c.b16 %v5203, %v5201
    %v5258 = vpack.c.b16 %v5206, %v5204
    %v5259 = vpack.c.b16 %v5207, %v5205
    %v5260 = vpack.c.b16 %v5210, %v5208
    %v5261 = vpack.c.b16 %v5211, %v5209
    %v5262 = vpack.c.b16 %v5214, %v5212
    %v5263 = vpack.c.b16 %v5215, %v5213
    %v5264 = vpack.c.b16 %v5218, %v5216
    %v5265 = vpack.c.b16 %v5219, %v5217
    %v5266 = vpack.c.b16 %v5222, %v5220
    %v5267 = vpack.c.b16 %v5223, %v5221
    %v5268 = vpack.c.b16 %v5226, %v5224
    %v5269 = vpack.c.b16 %v5227, %v5225
    %v5270 = vpack.c.b16 %v5230, %v5228
    %v5271 = vpack.c.b16 %v5231, %v5229
    %v5272 = vpack.c.b16 %v5234, %v5232
    %v5273 = vpack.c.b16 %v5235, %v5233
    %v5274 = vpack.c.b16 %v5238, %v5236
    %v5275 = vpack.c.b16 %v5239, %v5237
    %v5276 = vpack.c.b16 %v5242, %v5240
    %v5277 = vpack.c.b16 %v5243, %v5241
    %v5278 = vpack.c.b16 %v5246, %v5244
    %v5279 = vpack.c.b16 %v5247, %v5245
    %5312 = vmatpush.bf16.msra.mxu0 %v5262
    %5313 = vmatpush.bf16.msra.mxu0 %v5260
    %5314 = vmatpush.bf16.msra.mxu0 %v5258
    %5315 = vmatpush.bf16.msra.mxu0 %v5256
    %5316 = vmatpush.bf16.msra.mxu0 %v5254
    %5317 = vmatpush.bf16.msra.mxu0 %v5252
    %5318 = vmatpush.bf16.msra.mxu0 %v5250
    %5319 = vmatpush.bf16.msra.mxu0 %v5248
    %5320 = vmatmul.bf16.gmra.mxu0 %v5111
    %v5321 = vpop.f32.mrf.mxu0
    %v5322 = vadd.f32 %v5150, %v5321
    %v5323 = vpop.f32.mrf.mxu0
    %5324 = vdwg.mxu0
    %5325 = vmatpush.bf16.msra.mxu0 %v5278
    %5326 = vmatpush.bf16.msra.mxu0 %v5276
    %5327 = vmatpush.bf16.msra.mxu0 %v5274
    %5328 = vmatpush.bf16.msra.mxu0 %v5272
    %5329 = vmatpush.bf16.msra.mxu0 %v5270
    %5330 = vmatpush.bf16.msra.mxu0 %v5268
    %5331 = vmatpush.bf16.msra.mxu0 %v5266
    %5332 = vmatpush.bf16.msra.mxu0 %v5264
    %5333 = vmatmul.bf16.gmra.mxu0 %v5112
    %v5334 = vpop.f32.mrf.mxu0
    %v5335 = vadd.f32 %v5322, %v5334
    %v5336 = vpop.f32.mrf.mxu0
    %5337 = vdwg.mxu0
    %5338 = vmatpush.bf16.msra.mxu0 %v5263
    %5339 = vmatpush.bf16.msra.mxu0 %v5261
    %5340 = vmatpush.bf16.msra.mxu0 %v5259
    %5341 = vmatpush.bf16.msra.mxu0 %v5257
    %5342 = vmatpush.bf16.msra.mxu0 %v5255
    %5343 = vmatpush.bf16.msra.mxu0 %v5253
    %5344 = vmatpush.bf16.msra.mxu0 %v5251
    %5345 = vmatpush.bf16.msra.mxu0 %v5249
    %5346 = vmatmul.bf16.gmra.mxu0 %v5111
    %v5347 = vpop.f32.mrf.mxu0
    %v5348 = vadd.f32 %v5151, %v5347
    %v5349 = vpop.f32.mrf.mxu0
    %5350 = vdwg.mxu0
    %5351 = vmatpush.bf16.msra.mxu0 %v5279
    %5352 = vmatpush.bf16.msra.mxu0 %v5277
    %5353 = vmatpush.bf16.msra.mxu0 %v5275
    %5354 = vmatpush.bf16.msra.mxu0 %v5273
    %5355 = vmatpush.bf16.msra.mxu0 %v5271
    %5356 = vmatpush.bf16.msra.mxu0 %v5269
    %5357 = vmatpush.bf16.msra.mxu0 %v5267
    %5358 = vmatpush.bf16.msra.mxu0 %v5265
    %5359 = vmatmul.bf16.gmra.mxu0 %v5112
    %v5360 = vpop.f32.mrf.mxu0
    %v5361 = vadd.f32 %v5348, %v5360
    %v5362 = vpop.f32.mrf.mxu0
    %5363 = vdwg.mxu0
    %v5364 = vmax.f32 %v5335, 0.0
    %v5365 = vmax.f32 %v5361, 0.0
    %v5366 = vpack.c.bf16 %v5364, %v5364
    %v5367 = vpack.c.bf16 %v5365, %v5365
    %s5368 = scalar_lea.vmem [#allocation5], 1280
    %v5369 = vld [vmem:[%s5368] sm:$0xff]
    %v5370 = vld [vmem:[%s5368 + $0x8] sm:$0xff]
    %v5371 = vld [vmem:[%s5368 + $0x10] sm:$0xff]
    %v5372 = vld [vmem:[%s5368 + $0x18] sm:$0xff]
    %v5373 = vld [vmem:[%s5368 + $0x20] sm:$0xff]
    %v5374 = vld [vmem:[%s5368 + $0x28] sm:$0xff]
    %v5375 = vld [vmem:[%s5368 + $0x30] sm:$0xff]
    %v5376 = vld [vmem:[%s5368 + $0x38] sm:$0xff]
    %v5377 = vld [vmem:[%s5368 + $0x40] sm:$0xff]
    %v5378 = vld [vmem:[%s5368 + $0x48] sm:$0xff]
    %v5379 = vld [vmem:[%s5368 + $0x50] sm:$0xff]
    %v5380 = vld [vmem:[%s5368 + $0x58] sm:$0xff]
    %v5381 = vld [vmem:[%s5368 + $0x60] sm:$0xff]
    %v5382 = vld [vmem:[%s5368 + $0x68] sm:$0xff]
    %v5383 = vld [vmem:[%s5368 + $0x70] sm:$0xff]
    %v5384 = vld [vmem:[%s5368 + $0x78] sm:$0xff]
    %v5385 = vld [vmem:[%s5368 + $0x80] sm:$0xff]
    %v5386 = vld [vmem:[%s5368 + $0x88] sm:$0xff]
    %v5387 = vld [vmem:[%s5368 + $0x90] sm:$0xff]
    %v5388 = vld [vmem:[%s5368 + $0x98] sm:$0xff]
    %v5389 = vld [vmem:[%s5368 + $0xa0] sm:$0xff]
    %v5390 = vld [vmem:[%s5368 + $0xa8] sm:$0xff]
    %v5391 = vld [vmem:[%s5368 + $0xb0] sm:$0xff]
    %v5392 = vld [vmem:[%s5368 + $0xb8] sm:$0xff]
    %v5393 = vld [vmem:[%s5368 + $0xc0] sm:$0xff]
    %v5394 = vld [vmem:[%s5368 + $0xc8] sm:$0xff]
    %v5395 = vld [vmem:[%s5368 + $0xd0] sm:$0xff]
    %v5396 = vld [vmem:[%s5368 + $0xd8] sm:$0xff]
    %v5397 = vld [vmem:[%s5368 + $0xe0] sm:$0xff]
    %v5398 = vld [vmem:[%s5368 + $0xe8] sm:$0xff]
    %v5399 = vld [vmem:[%s5368 + $0xf0] sm:$0xff]
    %v5400 = vld [vmem:[%s5368 + $0xf8] sm:$0xff]
    %v5401 = vperm.slane %v5047, 2
    %v5402 = vperm.slane %v5047, 6
    %v5405 = vperm.slane %v5401, 2
    %v5406 = vperm.slane %v5402, 2
    %v5439 = vunpack.c.l.b16 %v5369
    %v5440 = vunpack.c.h.b16 %v5369
    %v5441 = vunpack.c.l.b16 %v5370
    %v5442 = vunpack.c.h.b16 %v5370
    %v5443 = vunpack.c.l.b16 %v5371
    %v5444 = vunpack.c.h.b16 %v5371
    %v5445 = vunpack.c.l.b16 %v5372
    %v5446 = vunpack.c.h.b16 %v5372
    %v5447 = vunpack.c.l.b16 %v5373
    %v5448 = vunpack.c.h.b16 %v5373
    %v5449 = vunpack.c.l.b16 %v5374
    %v5450 = vunpack.c.h.b16 %v5374
    %v5451 = vunpack.c.l.b16 %v5375
    %v5452 = vunpack.c.h.b16 %v5375
    %v5453 = vunpack.c.l.b16 %v5376
    %v5454 = vunpack.c.h.b16 %v5376
    %v5455 = vunpack.c.l.b16 %v5377
    %v5456 = vunpack.c.h.b16 %v5377
    %v5457 = vunpack.c.l.b16 %v5378
    %v5458 = vunpack.c.h.b16 %v5378
    %v5459 = vunpack.c.l.b16 %v5379
    %v5460 = vunpack.c.h.b16 %v5379
    %v5461 = vunpack.c.l.b16 %v5380
    %v5462 = vunpack.c.h.b16 %v5380
    %v5463 = vunpack.c.l.b16 %v5381
    %v5464 = vunpack.c.h.b16 %v5381
    %v5465 = vunpack.c.l.b16 %v5382
    %v5466 = vunpack.c.h.b16 %v5382
    %v5467 = vunpack.c.l.b16 %v5383
    %v5468 = vunpack.c.h.b16 %v5383
    %v5469 = vunpack.c.l.b16 %v5384
    %v5470 = vunpack.c.h.b16 %v5384
    %v5471 = vunpack.c.l.b16 %v5385
    %v5472 = vunpack.c.h.b16 %v5385
    %v5473 = vunpack.c.l.b16 %v5386
    %v5474 = vunpack.c.h.b16 %v5386
    %v5475 = vunpack.c.l.b16 %v5387
    %v5476 = vunpack.c.h.b16 %v5387
    %v5477 = vunpack.c.l.b16 %v5388
    %v5478 = vunpack.c.h.b16 %v5388
    %v5479 = vunpack.c.l.b16 %v5389
    %v5480 = vunpack.c.h.b16 %v5389
    %v5481 = vunpack.c.l.b16 %v5390
    %v5482 = vunpack.c.h.b16 %v5390
    %v5483 = vunpack.c.l.b16 %v5391
    %v5484 = vunpack.c.h.b16 %v5391
    %v5485 = vunpack.c.l.b16 %v5392
    %v5486 = vunpack.c.h.b16 %v5392
    %v5487 = vunpack.c.l.b16 %v5393
    %v5488 = vunpack.c.h.b16 %v5393
    %v5489 = vunpack.c.l.b16 %v5394
    %v5490 = vunpack.c.h.b16 %v5394
    %v5491 = vunpack.c.l.b16 %v5395
    %v5492 = vunpack.c.h.b16 %v5395
    %v5493 = vunpack.c.l.b16 %v5396
    %v5494 = vunpack.c.h.b16 %v5396
    %v5495 = vunpack.c.l.b16 %v5397
    %v5496 = vunpack.c.h.b16 %v5397
    %v5497 = vunpack.c.l.b16 %v5398
    %v5498 = vunpack.c.h.b16 %v5398
    %v5499 = vunpack.c.l.b16 %v5399
    %v5500 = vunpack.c.h.b16 %v5399
    %v5501 = vunpack.c.l.b16 %v5400
    %v5502 = vunpack.c.h.b16 %v5400
    %v5503 = vpack.c.b16 %v5441, %v5439
    %v5504 = vpack.c.b16 %v5442, %v5440
    %v5505 = vpack.c.b16 %v5445, %v5443
    %v5506 = vpack.c.b16 %v5446, %v5444
    %v5507 = vpack.c.b16 %v5449, %v5447
    %v5508 = vpack.c.b16 %v5450, %v5448
    %v5509 = vpack.c.b16 %v5453, %v5451
    %v5510 = vpack.c.b16 %v5454, %v5452
    %v5511 = vpack.c.b16 %v5457, %v5455
    %v5512 = vpack.c.b16 %v5458, %v5456
    %v5513 = vpack.c.b16 %v5461, %v5459
    %v5514 = vpack.c.b16 %v5462, %v5460
    %v5515 = vpack.c.b16 %v5465, %v5463
    %v5516 = vpack.c.b16 %v5466, %v5464
    %v5517 = vpack.c.b16 %v5469, %v5467
    %v5518 = vpack.c.b16 %v5470, %v5468
    %v5519 = vpack.c.b16 %v5473, %v5471
    %v5520 = vpack.c.b16 %v5474, %v5472
    %v5521 = vpack.c.b16 %v5477, %v5475
    %v5522 = vpack.c.b16 %v5478, %v5476
    %v5523 = vpack.c.b16 %v5481, %v5479
    %v5524 = vpack.c.b16 %v5482, %v5480
    %v5525 = vpack.c.b16 %v5485, %v5483
    %v5526 = vpack.c.b16 %v5486, %v5484
    %v5527 = vpack.c.b16 %v5489, %v5487
    %v5528 = vpack.c.b16 %v5490, %v5488
    %v5529 = vpack.c.b16 %v5493, %v5491
    %v5530 = vpack.c.b16 %v5494, %v5492
    %v5531 = vpack.c.b16 %v5497, %v5495
    %v5532 = vpack.c.b16 %v5498, %v5496
    %v5533 = vpack.c.b16 %v5501, %v5499
    %v5534 = vpack.c.b16 %v5502, %v5500
    %5567 = vmatpush.bf16.msra.mxu0 %v5517
    %5568 = vmatpush.bf16.msra.mxu0 %v5515
    %5569 = vmatpush.bf16.msra.mxu0 %v5513
    %5570 = vmatpush.bf16.msra.mxu0 %v5511
    %5571 = vmatpush.bf16.msra.mxu0 %v5509
    %5572 = vmatpush.bf16.msra.mxu0 %v5507
    %5573 = vmatpush.bf16.msra.mxu0 %v5505
    %5574 = vmatpush.bf16.msra.mxu0 %v5503
    %5575 = vmatmul.bf16.gmra.mxu0 %v5366
    %v5576 = vpop.f32.mrf.mxu0
    %v5577 = vadd.f32 %v5405, %v5576
    %v5578 = vpop.f32.mrf.mxu0
    %5579 = vdwg.mxu0
    %5580 = vmatpush.bf16.msra.mxu0 %v5533
    %5581 = vmatpush.bf16.msra.mxu0 %v5531
    %5582 = vmatpush.bf16.msra.mxu0 %v5529
    %5583 = vmatpush.bf16.msra.mxu0 %v5527
    %5584 = vmatpush.bf16.msra.mxu0 %v5525
    %5585 = vmatpush.bf16.msra.mxu0 %v5523
    %5586 = vmatpush.bf16.msra.mxu0 %v5521
    %5587 = vmatpush.bf16.msra.mxu0 %v5519
    %5588 = vmatmul.bf16.gmra.mxu0 %v5367
    %v5589 = vpop.f32.mrf.mxu0
    %v5590 = vadd.f32 %v5577, %v5589
    %v5591 = vpop.f32.mrf.mxu0
    %5592 = vdwg.mxu0
    %5593 = vmatpush.bf16.msra.mxu0 %v5518
    %5594 = vmatpush.bf16.msra.mxu0 %v5516
    %5595 = vmatpush.bf16.msra.mxu0 %v5514
    %5596 = vmatpush.bf16.msra.mxu0 %v5512
    %5597 = vmatpush.bf16.msra.mxu0 %v5510
    %5598 = vmatpush.bf16.msra.mxu0 %v5508
    %5599 = vmatpush.bf16.msra.mxu0 %v5506
    %5600 = vmatpush.bf16.msra.mxu0 %v5504
    %5601 = vmatmul.bf16.gmra.mxu0 %v5366
    %v5602 = vpop.f32.mrf.mxu0
    %v5603 = vadd.f32 %v5406, %v5602
    %v5604 = vpop.f32.mrf.mxu0
    %5605 = vdwg.mxu0
    %5606 = vmatpush.bf16.msra.mxu0 %v5534
    %5607 = vmatpush.bf16.msra.mxu0 %v5532
    %5608 = vmatpush.bf16.msra.mxu0 %v5530
    %5609 = vmatpush.bf16.msra.mxu0 %v5528
    %5610 = vmatpush.bf16.msra.mxu0 %v5526
    %5611 = vmatpush.bf16.msra.mxu0 %v5524
    %5612 = vmatpush.bf16.msra.mxu0 %v5522
    %5613 = vmatpush.bf16.msra.mxu0 %v5520
    %5614 = vmatmul.bf16.gmra.mxu0 %v5367
    %v5615 = vpop.f32.mrf.mxu0
    %v5616 = vadd.f32 %v5603, %v5615
    %v5617 = vpop.f32.mrf.mxu0
    %5618 = vdwg.mxu0
    %v5619 = vmax.f32 %v5590, 0.0
    %v5620 = vmax.f32 %v5616, 0.0
    %v5621 = vpack.c.bf16 %v5619, %v5619
    %v5622 = vpack.c.bf16 %v5620, %v5620
    %s5623 = scalar_lea.vmem [#allocation7], 1280
    %v5624 = vld [vmem:[%s5623] sm:$0xff]
    %v5625 = vld [vmem:[%s5623 + $0x8] sm:$0xff]
    %v5626 = vld [vmem:[%s5623 + $0x10] sm:$0xff]
    %v5627 = vld [vmem:[%s5623 + $0x18] sm:$0xff]
    %v5628 = vld [vmem:[%s5623 + $0x20] sm:$0xff]
    %v5629 = vld [vmem:[%s5623 + $0x28] sm:$0xff]
    %v5630 = vld [vmem:[%s5623 + $0x30] sm:$0xff]
    %v5631 = vld [vmem:[%s5623 + $0x38] sm:$0xff]
    %v5632 = vld [vmem:[%s5623 + $0x40] sm:$0xff]
    %v5633 = vld [vmem:[%s5623 + $0x48] sm:$0xff]
    %v5634 = vld [vmem:[%s5623 + $0x50] sm:$0xff]
    %v5635 = vld [vmem:[%s5623 + $0x58] sm:$0xff]
    %v5636 = vld [vmem:[%s5623 + $0x60] sm:$0xff]
    %v5637 = vld [vmem:[%s5623 + $0x68] sm:$0xff]
    %v5638 = vld [vmem:[%s5623 + $0x70] sm:$0xff]
    %v5639 = vld [vmem:[%s5623 + $0x78] sm:$0xff]
    %v5640 = vld [vmem:[%s5623 + $0x80] sm:$0xff]
    %v5641 = vld [vmem:[%s5623 + $0x88] sm:$0xff]
    %v5642 = vld [vmem:[%s5623 + $0x90] sm:$0xff]
    %v5643 = vld [vmem:[%s5623 + $0x98] sm:$0xff]
    %v5644 = vld [vmem:[%s5623 + $0xa0] sm:$0xff]
    %v5645 = vld [vmem:[%s5623 + $0xa8] sm:$0xff]
    %v5646 = vld [vmem:[%s5623 + $0xb0] sm:$0xff]
    %v5647 = vld [vmem:[%s5623 + $0xb8] sm:$0xff]
    %v5648 = vld [vmem:[%s5623 + $0xc0] sm:$0xff]
    %v5649 = vld [vmem:[%s5623 + $0xc8] sm:$0xff]
    %v5650 = vld [vmem:[%s5623 + $0xd0] sm:$0xff]
    %v5651 = vld [vmem:[%s5623 + $0xd8] sm:$0xff]
    %v5652 = vld [vmem:[%s5623 + $0xe0] sm:$0xff]
    %v5653 = vld [vmem:[%s5623 + $0xe8] sm:$0xff]
    %v5654 = vld [vmem:[%s5623 + $0xf0] sm:$0xff]
    %v5655 = vld [vmem:[%s5623 + $0xf8] sm:$0xff]
    %v5656 = vperm.slane %v5047, 3
    %v5657 = vperm.slane %v5047, 7
    %v5660 = vperm.slane %v5656, 3
    %v5661 = vperm.slane %v5657, 3
    %v5694 = vunpack.c.l.b16 %v5624
    %v5695 = vunpack.c.h.b16 %v5624
    %v5696 = vunpack.c.l.b16 %v5625
    %v5697 = vunpack.c.h.b16 %v5625
    %v5698 = vunpack.c.l.b16 %v5626
    %v5699 = vunpack.c.h.b16 %v5626
    %v5700 = vunpack.c.l.b16 %v5627
    %v5701 = vunpack.c.h.b16 %v5627
    %v5702 = vunpack.c.l.b16 %v5628
    %v5703 = vunpack.c.h.b16 %v5628
    %v5704 = vunpack.c.l.b16 %v5629
    %v5705 = vunpack.c.h.b16 %v5629
    %v5706 = vunpack.c.l.b16 %v5630
    %v5707 = vunpack.c.h.b16 %v5630
    %v5708 = vunpack.c.l.b16 %v5631
    %v5709 = vunpack.c.h.b16 %v5631
    %v5710 = vunpack.c.l.b16 %v5632
    %v5711 = vunpack.c.h.b16 %v5632
    %v5712 = vunpack.c.l.b16 %v5633
    %v5713 = vunpack.c.h.b16 %v5633
    %v5714 = vunpack.c.l.b16 %v5634
    %v5715 = vunpack.c.h.b16 %v5634
    %v5716 = vunpack.c.l.b16 %v5635
    %v5717 = vunpack.c.h.b16 %v5635
    %v5718 = vunpack.c.l.b16 %v5636
    %v5719 = vunpack.c.h.b16 %v5636
    %v5720 = vunpack.c.l.b16 %v5637
    %v5721 = vunpack.c.h.b16 %v5637
    %v5722 = vunpack.c.l.b16 %v5638
    %v5723 = vunpack.c.h.b16 %v5638
    %v5724 = vunpack.c.l.b16 %v5639
    %v5725 = vunpack.c.h.b16 %v5639
    %v5726 = vunpack.c.l.b16 %v5640
    %v5727 = vunpack.c.h.b16 %v5640
    %v5728 = vunpack.c.l.b16 %v5641
    %v5729 = vunpack.c.h.b16 %v5641
    %v5730 = vunpack.c.l.b16 %v5642
    %v5731 = vunpack.c.h.b16 %v5642
    %v5732 = vunpack.c.l.b16 %v5643
    %v5733 = vunpack.c.h.b16 %v5643
    %v5734 = vunpack.c.l.b16 %v5644
    %v5735 = vunpack.c.h.b16 %v5644
    %v5736 = vunpack.c.l.b16 %v5645
    %v5737 = vunpack.c.h.b16 %v5645
    %v5738 = vunpack.c.l.b16 %v5646
    %v5739 = vunpack.c.h.b16 %v5646
    %v5740 = vunpack.c.l.b16 %v5647
    %v5741 = vunpack.c.h.b16 %v5647
    %v5742 = vunpack.c.l.b16 %v5648
    %v5743 = vunpack.c.h.b16 %v5648
    %v5744 = vunpack.c.l.b16 %v5649
    %v5745 = vunpack.c.h.b16 %v5649
    %v5746 = vunpack.c.l.b16 %v5650
    %v5747 = vunpack.c.h.b16 %v5650
    %v5748 = vunpack.c.l.b16 %v5651
    %v5749 = vunpack.c.h.b16 %v5651
    %v5750 = vunpack.c.l.b16 %v5652
    %v5751 = vunpack.c.h.b16 %v5652
    %v5752 = vunpack.c.l.b16 %v5653
    %v5753 = vunpack.c.h.b16 %v5653
    %v5754 = vunpack.c.l.b16 %v5654
    %v5755 = vunpack.c.h.b16 %v5654
    %v5756 = vunpack.c.l.b16 %v5655
    %v5757 = vunpack.c.h.b16 %v5655
    %v5758 = vpack.c.b16 %v5696, %v5694
    %v5759 = vpack.c.b16 %v5697, %v5695
    %v5760 = vpack.c.b16 %v5700, %v5698
    %v5761 = vpack.c.b16 %v5701, %v5699
    %v5762 = vpack.c.b16 %v5704, %v5702
    %v5763 = vpack.c.b16 %v5705, %v5703
    %v5764 = vpack.c.b16 %v5708, %v5706
    %v5765 = vpack.c.b16 %v5709, %v5707
    %v5766 = vpack.c.b16 %v5712, %v5710
    %v5767 = vpack.c.b16 %v5713, %v5711
    %v5768 = vpack.c.b16 %v5716, %v5714
    %v5769 = vpack.c.b16 %v5717, %v5715
    %v5770 = vpack.c.b16 %v5720, %v5718
    %v5771 = vpack.c.b16 %v5721, %v5719
    %v5772 = vpack.c.b16 %v5724, %v5722
    %v5773 = vpack.c.b16 %v5725, %v5723
    %v5774 = vpack.c.b16 %v5728, %v5726
    %v5775 = vpack.c.b16 %v5729, %v5727
    %v5776 = vpack.c.b16 %v5732, %v5730
    %v5777 = vpack.c.b16 %v5733, %v5731
    %v5778 = vpack.c.b16 %v5736, %v5734
    %v5779 = vpack.c.b16 %v5737, %v5735
    %v5780 = vpack.c.b16 %v5740, %v5738
    %v5781 = vpack.c.b16 %v5741, %v5739
    %v5782 = vpack.c.b16 %v5744, %v5742
    %v5783 = vpack.c.b16 %v5745, %v5743
    %v5784 = vpack.c.b16 %v5748, %v5746
    %v5785 = vpack.c.b16 %v5749, %v5747
    %v5786 = vpack.c.b16 %v5752, %v5750
    %v5787 = vpack.c.b16 %v5753, %v5751
    %v5788 = vpack.c.b16 %v5756, %v5754
    %v5789 = vpack.c.b16 %v5757, %v5755
    %5822 = vmatpush.bf16.msra.mxu0 %v5772
    %5823 = vmatpush.bf16.msra.mxu0 %v5770
    %5824 = vmatpush.bf16.msra.mxu0 %v5768
    %5825 = vmatpush.bf16.msra.mxu0 %v5766
    %5826 = vmatpush.bf16.msra.mxu0 %v5764
    %5827 = vmatpush.bf16.msra.mxu0 %v5762
    %5828 = vmatpush.bf16.msra.mxu0 %v5760
    %5829 = vmatpush.bf16.msra.mxu0 %v5758
    %5830 = vmatmul.bf16.gmra.mxu0 %v5621
    %v5831 = vpop.f32.mrf.mxu0
    %v5832 = vadd.f32 %v5660, %v5831
    %v5833 = vpop.f32.mrf.mxu0
    %5834 = vdwg.mxu0
    %5835 = vmatpush.bf16.msra.mxu0 %v5788
    %5836 = vmatpush.bf16.msra.mxu0 %v5786
    %5837 = vmatpush.bf16.msra.mxu0 %v5784
    %5838 = vmatpush.bf16.msra.mxu0 %v5782
    %5839 = vmatpush.bf16.msra.mxu0 %v5780
    %5840 = vmatpush.bf16.msra.mxu0 %v5778
    %5841 = vmatpush.bf16.msra.mxu0 %v5776
    %5842 = vmatpush.bf16.msra.mxu0 %v5774
    %5843 = vmatmul.bf16.gmra.mxu0 %v5622
    %v5844 = vpop.f32.mrf.mxu0
    %v5845 = vadd.f32 %v5832, %v5844
    %v5846 = vpop.f32.mrf.mxu0
    %5847 = vdwg.mxu0
    %5848 = vmatpush.bf16.msra.mxu0 %v5773
    %5849 = vmatpush.bf16.msra.mxu0 %v5771
    %5850 = vmatpush.bf16.msra.mxu0 %v5769
    %5851 = vmatpush.bf16.msra.mxu0 %v5767
    %5852 = vmatpush.bf16.msra.mxu0 %v5765
    %5853 = vmatpush.bf16.msra.mxu0 %v5763
    %5854 = vmatpush.bf16.msra.mxu0 %v5761
    %5855 = vmatpush.bf16.msra.mxu0 %v5759
    %5856 = vmatmul.bf16.gmra.mxu0 %v5621
    %v5857 = vpop.f32.mrf.mxu0
    %v5858 = vadd.f32 %v5661, %v5857
    %v5859 = vpop.f32.mrf.mxu0
    %5860 = vdwg.mxu0
    %5861 = vmatpush.bf16.msra.mxu0 %v5789
    %5862 = vmatpush.bf16.msra.mxu0 %v5787
    %5863 = vmatpush.bf16.msra.mxu0 %v5785
    %5864 = vmatpush.bf16.msra.mxu0 %v5783
    %5865 = vmatpush.bf16.msra.mxu0 %v5781
    %5866 = vmatpush.bf16.msra.mxu0 %v5779
    %5867 = vmatpush.bf16.msra.mxu0 %v5777
    %5868 = vmatpush.bf16.msra.mxu0 %v5775
    %5869 = vmatmul.bf16.gmra.mxu0 %v5622
    %v5870 = vpop.f32.mrf.mxu0
    %v5871 = vadd.f32 %v5858, %v5870
    %v5872 = vpop.f32.mrf.mxu0
    %5873 = vdwg.mxu0
    %v5874 = vmax.f32 %v5845, 0.0
    %v5875 = vmax.f32 %v5871, 0.0
    %v5876 = vpack.c.bf16 %v5874, %v5874
    %v5877 = vpack.c.bf16 %v5875, %v5875
    %s5878 = scalar_lea.vmem %s6, 640
    %v5879 = vld [vmem:[%s5878] sm:$0xf]
    %v5880 = vld [vmem:[%s5878 + $0x4] sm:$0xf]
    %v5881 = vld [vmem:[%s5878 + $0x8] sm:$0xf]
    %v5882 = vld [vmem:[%s5878 + $0xc] sm:$0xf]
    %v5883 = vld [vmem:[%s5878 + $0x10] sm:$0xf]
    %v5884 = vld [vmem:[%s5878 + $0x14] sm:$0xf]
    %v5885 = vld [vmem:[%s5878 + $0x18] sm:$0xf]
    %v5886 = vld [vmem:[%s5878 + $0x1c] sm:$0xf]
    %v5887 = vld [vmem:[%s5878 + $0x20] sm:$0xf]
    %v5888 = vld [vmem:[%s5878 + $0x24] sm:$0xf]
    %v5889 = vld [vmem:[%s5878 + $0x28] sm:$0xf]
    %v5890 = vld [vmem:[%s5878 + $0x2c] sm:$0xf]
    %v5891 = vld [vmem:[%s5878 + $0x30] sm:$0xf]
    %v5892 = vld [vmem:[%s5878 + $0x34] sm:$0xf]
    %v5893 = vld [vmem:[%s5878 + $0x38] sm:$0xf]
    %v5894 = vld [vmem:[%s5878 + $0x3c] sm:$0xf]
    %v5895 = vld [vmem:[%s5878 + $0x40] sm:$0xf]
    %v5896 = vld [vmem:[%s5878 + $0x44] sm:$0xf]
    %v5897 = vld [vmem:[%s5878 + $0x48] sm:$0xf]
    %v5898 = vld [vmem:[%s5878 + $0x4c] sm:$0xf]
    %v5899 = vld [vmem:[%s5878 + $0x50] sm:$0xf]
    %v5900 = vld [vmem:[%s5878 + $0x54] sm:$0xf]
    %v5901 = vld [vmem:[%s5878 + $0x58] sm:$0xf]
    %v5902 = vld [vmem:[%s5878 + $0x5c] sm:$0xf]
    %v5903 = vld [vmem:[%s5878 + $0x60] sm:$0xf]
    %v5904 = vld [vmem:[%s5878 + $0x64] sm:$0xf]
    %v5905 = vld [vmem:[%s5878 + $0x68] sm:$0xf]
    %v5906 = vld [vmem:[%s5878 + $0x6c] sm:$0xf]
    %v5907 = vld [vmem:[%s5878 + $0x70] sm:$0xf]
    %v5908 = vld [vmem:[%s5878 + $0x74] sm:$0xf]
    %v5909 = vld [vmem:[%s5878 + $0x78] sm:$0xf]
    %v5910 = vld [vmem:[%s5878 + $0x7c] sm:$0xf]
    %s5911 = scalar_lea.vmem %s7, 5
    %v5912 = vld [vmem:[%s5911] sm:$0x1]
    %v5914 = vperm.slane %v5912, 0
    %v5948 = vunpack.c.l.b16 %v5879
    %v5949 = vunpack.c.l.b16 %v5880
    %v5950 = vunpack.c.l.b16 %v5881
    %v5951 = vunpack.c.l.b16 %v5882
    %v5952 = vunpack.c.l.b16 %v5883
    %v5953 = vunpack.c.l.b16 %v5884
    %v5954 = vunpack.c.l.b16 %v5885
    %v5955 = vunpack.c.l.b16 %v5886
    %v5956 = vunpack.c.l.b16 %v5887
    %v5957 = vunpack.c.l.b16 %v5888
    %v5958 = vunpack.c.l.b16 %v5889
    %v5959 = vunpack.c.l.b16 %v5890
    %v5960 = vunpack.c.l.b16 %v5891
    %v5961 = vunpack.c.l.b16 %v5892
    %v5962 = vunpack.c.l.b16 %v5893
    %v5963 = vunpack.c.l.b16 %v5894
    %v5964 = vunpack.c.l.b16 %v5895
    %v5965 = vunpack.c.l.b16 %v5896
    %v5966 = vunpack.c.l.b16 %v5897
    %v5967 = vunpack.c.l.b16 %v5898
    %v5968 = vunpack.c.l.b16 %v5899
    %v5969 = vunpack.c.l.b16 %v5900
    %v5970 = vunpack.c.l.b16 %v5901
    %v5971 = vunpack.c.l.b16 %v5902
    %v5972 = vunpack.c.l.b16 %v5903
    %v5973 = vunpack.c.l.b16 %v5904
    %v5974 = vunpack.c.l.b16 %v5905
    %v5975 = vunpack.c.l.b16 %v5906
    %v5976 = vunpack.c.l.b16 %v5907
    %v5977 = vunpack.c.l.b16 %v5908
    %v5978 = vunpack.c.l.b16 %v5909
    %v5979 = vunpack.c.l.b16 %v5910
    %v5980 = vpack.c.b16 %v5949, %v5948
    %v5981 = vpack.c.b16 %v5951, %v5950
    %v5982 = vpack.c.b16 %v5953, %v5952
    %v5983 = vpack.c.b16 %v5955, %v5954
    %v5984 = vpack.c.b16 %v5957, %v5956
    %v5985 = vpack.c.b16 %v5959, %v5958
    %v5986 = vpack.c.b16 %v5961, %v5960
    %v5987 = vpack.c.b16 %v5963, %v5962
    %v5988 = vpack.c.b16 %v5965, %v5964
    %v5989 = vpack.c.b16 %v5967, %v5966
    %v5990 = vpack.c.b16 %v5969, %v5968
    %v5991 = vpack.c.b16 %v5971, %v5970
    %v5992 = vpack.c.b16 %v5973, %v5972
    %v5993 = vpack.c.b16 %v5975, %v5974
    %v5994 = vpack.c.b16 %v5977, %v5976
    %v5995 = vpack.c.b16 %v5979, %v5978
    %6012 = vmatpush.bf16.msra.mxu0 %v5987
    %6013 = vmatpush.bf16.msra.mxu0 %v5986
    %6014 = vmatpush.bf16.msra.mxu0 %v5985
    %6015 = vmatpush.bf16.msra.mxu0 %v5984
    %6016 = vmatpush.bf16.msra.mxu0 %v5983
    %6017 = vmatpush.bf16.msra.mxu0 %v5982
    %6018 = vmatpush.bf16.msra.mxu0 %v5981
    %6019 = vmatpush.bf16.msra.mxu0 %v5980
    %6020 = vmatmul.bf16.gmra.mxu0 %v5876
    %v6021 = vpop.f32.mrf.mxu0
    %v6022 = vadd.f32 %v5914, %v6021
    %v6023 = vpop.f32.mrf.mxu0
    %6024 = vdwg.mxu0
    %6025 = vmatpush.bf16.msra.mxu0 %v5995
    %6026 = vmatpush.bf16.msra.mxu0 %v5994
    %6027 = vmatpush.bf16.msra.mxu0 %v5993
    %6028 = vmatpush.bf16.msra.mxu0 %v5992
    %6029 = vmatpush.bf16.msra.mxu0 %v5991
    %6030 = vmatpush.bf16.msra.mxu0 %v5990
    %6031 = vmatpush.bf16.msra.mxu0 %v5989
    %6032 = vmatpush.bf16.msra.mxu0 %v5988
    %6033 = vmatmul.bf16.gmra.mxu0 %v5877
    %v6034 = vpop.f32.mrf.mxu0
    %v6035 = vadd.f32 %v6022, %v6034
    %v6036 = vpop.f32.mrf.mxu0
    %6037 = vdwg.mxu0
    %v6038 = vsub.f32 %v5044, %v6035
    %v6039 = vadd.f32 %v5045, %v6035
    %6040 = vst.msk [vmem:[#allocation8] sm:$0xff] %vm93, %v6038
    %6042 = vrot.lane.b32.xlu0 %v6039, 118
    %v6043 = vpop.permute.xlu0 %6042
    %vm6045 = vcmask 39936
    %6046 = vst.msk [vmem:[#allocation9] sm:$0xff] %vm6045, %v6043
    // Predicated region
    $region46: #{_nbeats_forward_impl.1} parent=1 // pred_check
      _
    $region47: #{_nbeats_forward_impl.1} parent=1 // pred_check_branch
      %6048 = sbr.rel (0) target = $region49
    $region48: #{_nbeats_forward_impl.1} parent=1 // pred_region
      %6050 = vsyncadd [#allocation4], 0
      %s6052 = sshll.u32 [#allocation8], 4
      %s6053 = int_to_ptr.vmem [resolvable:$true] %s6052
      %s6054 = sshll.u32 %s8, 4
      %s6055 = int_to_ptr.hbm [resolvable:$true] %s6054
      %6057 = dma.vmem_to_hbm [thread:$0]  %s6053, 128, %s6055, [#allocation4]
    $region49: #{_nbeats_forward_impl.1} parent=1 // pred_fallthru
      _
    // Predicated region
    $region50: #{_nbeats_forward_impl.1} parent=1 // pred_check
      _
    $region51: #{_nbeats_forward_impl.1} parent=1 // pred_check_branch
      %6059 = sbr.rel (0) target = $region53
    $region52: #{_nbeats_forward_impl.1} parent=1 // pred_region
      %6061 = vsyncadd [#allocation10], 0
      %s6063 = sshll.u32 [#allocation9], 4
      %s6064 = int_to_ptr.vmem [resolvable:$true] %s6063
      %s6065 = sshll.u32 %s9, 4
      %s6066 = int_to_ptr.hbm [resolvable:$true] %s6065
      %6068 = dma.vmem_to_hbm [thread:$0]  %s6064, 128, %s6066, [#allocation10]
    $region53: #{_nbeats_forward_impl.1} parent=1 // pred_fallthru
      _
    // Predicated region
    $region54: #{_nbeats_forward_impl.1} parent=1 // pred_check
      _
    $region55: #{_nbeats_forward_impl.1} parent=1 // pred_check_branch
      %6070 = sbr.rel (0) target = $region57
    $region56: #{_nbeats_forward_impl.1} parent=1 // pred_region
      %6072 = dma.done [#allocation4], 128
    $region57: #{_nbeats_forward_impl.1} parent=1 // pred_fallthru
      _
    // Predicated region
    $region58: #{_nbeats_forward_impl.1} parent=1 // pred_check
      _
    $region59: #{_nbeats_forward_impl.1} parent=1 // pred_check_branch
      %6074 = sbr.rel (0) target = $region61
    $region60: #{_nbeats_forward_impl.1} parent=1 // pred_region
      %6076 = dma.done [#allocation10], 128
    $region61: #{_nbeats_forward_impl.1} parent=1 // pred_fallthru
      _
    %6077 = vsyncpa [#allocation3], 1
    %6078 = vsyncpa [#allocation6], 1
    %6079 = vsyncpa [#allocation4], 1
    %6080 = vsyncpa [#allocation10], 1

</llo_original>
